<compile_context>
chip_gen: v7x
topology: tpu7x:2x2x1
jax: 0.10.0
libtpu: 0.0.40
codegen_flags: <defaults>
</compile_context>

<pallas_src>
import functools

import jax
import jax.numpy as jnp
from jax.experimental import pallas as pl
from jax.experimental.pallas import tpu as pltpu


def _round_up(n, m):
    return ((n + m - 1) // m) * m


def _visual_prefix_kernel(num_heads, Bb, Sp, Lp, S_real, per_head_q, approx_recip,
                          x_ref, q_ref,
                          wm_ref, wk_ref, wv_ref, wo_ref, w1_ref, w2_ref,
                          bpack_ref, b1_ref,
                          out_ref,
                          k_scr, v_scr, ctx_scr):
    f32, bf16 = jnp.float32, jnp.bfloat16
    H = out_ref.shape[-1]
    d = H // num_heads

    # Packed biases: rows 0..4 = bm, bk, bv, bo, b2 (f32, added to f32 accumulators).
    bias = bpack_ref[...]                                   # [8, H]
    bm, bk, bv, bo, b2 = (bias[i:i + 1, :] for i in range(5))
    b1 = b1_ref[...]                                        # [1, 4H]

    # Wide, batch-blocked projections (single MXU matmul each), staged in bf16 VMEM.
    x = x_ref[...]                                          # [Bb*Sp, P] bf16
    mem = (jnp.dot(x, wm_ref[...], preferred_element_type=f32) + bm).astype(bf16)
    k_scr[...] = (jnp.dot(mem, wk_ref[...], preferred_element_type=f32) + bk).astype(bf16)
    v_scr[...] = (jnp.dot(mem, wv_ref[...], preferred_element_type=f32) + bv).astype(bf16)

    # Hoisted query (wrapper): pre-scaled by 1/sqrt(d); per-head-masked iff d < 128.
    q = q_ref[...]                                          # [Lp,H] or [nh*Lp,H] bf16

    # Static mask for padded key columns (hoisted out of the batch loop).
    if Sp != S_real:
        col = jax.lax.broadcasted_iota(jnp.int32, (1, Sp), 1)
        pad_bias = jnp.where(col < S_real, 0.0, -1e30).astype(f32)
    else:
        pad_bias = None

    def _softmax_rows(logits):
        if pad_bias is not None:
            logits = logits + pad_bias
        m = jnp.max(logits, axis=-1, keepdims=True)
        e = jnp.exp(logits - m)
        l = jnp.sum(e, axis=-1, keepdims=True)
        inv = pl.reciprocal(l, approx=True) if approx_recip else 1.0 / l
        return e * inv

    s_align = Sp & (-Sp)
    l_align = Lp & (-Lp)

    def _attend_one(b, carry):
        off_s = pl.multiple_of(b * Sp, s_align)
        kb = k_scr[pl.ds(off_s, Sp), :]                     # [Sp, H] bf16
        vb = v_scr[pl.ds(off_s, Sp), :]                     # [Sp, H] bf16

        if not per_head_q:
            # d < 128: masked-q trick keeps the contraction lane-wide.  This is the
            # standard q.k^T dot_general (contract last dims) Mosaic lowers natively.
            logits = jax.lax.dot_general(q, kb, (((1,), (1,)), ((), ())),
                                         preferred_element_type=f32)   # [nh*Lp, Sp]
            w_all = _softmax_rows(logits)

        ctx_heads = []
        for h in range(num_heads):                          # static, nh is small
            if per_head_q:
                lg = jax.lax.dot_general(q[:, h * d:(h + 1) * d],
                                         kb[:, h * d:(h + 1) * d],
                                         (((1,), (1,)), ((), ())),
                                         preferred_element_type=f32)   # [Lp, Sp]
                w_h = _softmax_rows(lg)
            else:
                w_h = w_all[h * Lp:(h + 1) * Lp, :]         # [Lp, Sp]
            # Head-sliced PV matmul: [Lp,Sp] x [Sp,d] -- no num_heads x FLOP blowup.
            ctx_heads.append(jnp.dot(w_h.astype(bf16), vb[:, h * d:(h + 1) * d],
                                     preferred_element_type=f32))       # [Lp, d]
        ctx_b = jnp.concatenate(ctx_heads, axis=-1) if num_heads > 1 else ctx_heads[0]

        off_l = pl.multiple_of(b * Lp, l_align)
        ctx_scr[pl.ds(off_l, Lp), :] = ctx_b                # persistent scratch slab
        return carry

    jax.lax.fori_loop(0, Bb, _attend_one, 0, unroll=min(2, Bb))

    # Output projection + MLP once per batch block on the stacked [Bb*Lp, H] rows.
    ctx = ctx_scr[...].astype(bf16)
    attn = (jnp.dot(ctx, wo_ref[...], preferred_element_type=f32) + bo).astype(bf16)
    h1 = jnp.tanh(jnp.dot(attn, w1_ref[...], preferred_element_type=f32) + b1).astype(bf16)
    out_ref[...] = jnp.dot(h1, w2_ref[...], preferred_element_type=f32) + b2


def visual_prefix_net(x, params, num_heads, *, block_b=8, approx_recip=True,
                      single_buffer_weights=True):
    B, S, P = x.shape
    L, H = params["emb"].shape
    assert H % num_heads == 0, "hidden_size must be divisible by num_heads"
    d = H // num_heads
    per_head_q = (d % 128 == 0)          # full-lane per-head logits contraction
    f32, bf16 = jnp.float32, jnp.bfloat16

    # Hoisted, batch-invariant query projection: q = emb @ Wq + bq, scaled by 1/sqrt(d).
    q = params["emb"].astype(f32) @ params["wq"].astype(f32) + params["bq"].astype(f32)
    q = q * (float(d) ** -0.5)

    Lp = _round_up(L, 8)                 # f32 ctx-scratch / out-block sublane alignment
    Sp = _round_up(S, 16)                # bf16 k/v-scratch sublane alignment
    if Lp != L:
        q = jnp.pad(q, ((0, Lp - L), (0, 0)))

    if per_head_q:
        q_in = q.astype(bf16)                                            # [Lp, H]
    else:
        head_id = (jnp.arange(H) // d)[None, :]
        q_in = jnp.concatenate(
            [jnp.where(head_id == h, q, 0.0) for h in range(num_heads)],
            axis=0).astype(bf16)                                         # [nh*Lp, H]

    # Batch blocking (tune block_b per chip: ~4-8 on v7x, 16-32 on v6e).
    Bb = max(1, min(block_b, B))
    Bp = _round_up(B, Bb)
    grid = (Bp // Bb,)

    xp = x.astype(bf16)                  # bf16 cast in the wrapper (no f32 upcast)
    if Sp != S or Bp != B:
        xp = jnp.pad(xp, ((0, Bp - B), (0, Sp - S), (0, 0)))
    xf = xp.reshape(Bp * Sp, P)

    # bf16 weights; biases packed into one [8,H] slab (+ the [1,4H] mlp1 bias).
    wm, wk, wv, wo, w1, w2 = (params[n].astype(bf16)
                              for n in ("wm", "wk", "wv", "wo", "w1", "w2"))
    bpack = jnp.zeros((8, H), f32)
    for row, name in enumerate(("bm", "bk", "bv", "bo", "b2")):
        bpack = bpack.at[row].set(params[name].astype(f32))
    b1 = params["b1"].astype(f32).reshape(1, 4 * H)

    kernel = functools.partial(_visual_prefix_kernel, num_heads, Bb, Sp, Lp, S,
                               per_head_q, approx_recip)

    def build(single_buffer):
        def cspec(shape):
            if single_buffer:
                # Grid-invariant block: one resident buffer is enough.
                return pl.BlockSpec(shape, lambda i: (0, 0),
                                    pipeline_mode=pl.Buffered(1))
            return pl.BlockSpec(shape, lambda i: (0, 0))

        in_specs = [
            pl.BlockSpec((Bb * Sp, P), lambda i: (i, 0)),    # x (streamed, double-buffered)
            cspec(tuple(q_in.shape)),                        # hoisted q
            cspec((P, H)),                                   # visual_mapping
            cspec((H, H)), cspec((H, H)), cspec((H, H)),     # Wk, Wv, Wo
            cspec((H, 4 * H)), cspec((4 * H, H)),            # mlp1, mlp2
            cspec((8, H)), cspec((1, 4 * H)),                # packed biases, b1
        ]
        return pl.pallas_call(
            kernel,
            grid=grid,
            in_specs=in_specs,
            out_specs=pl.BlockSpec((Bb * Lp, H), lambda i: (i, 0)),
            out_shape=jax.ShapeDtypeStruct((Bp * Lp, H), f32),
            scratch_shapes=[pltpu.VMEM((Bb * Sp, H), bf16),   # k
                            pltpu.VMEM((Bb * Sp, H), bf16),   # v
                            pltpu.VMEM((Bb * Lp, H), f32)],   # ctx
            compiler_params=pltpu.CompilerParams(
                # Batch blocks are independent -> shard across TCs where available.
                dimension_semantics=("parallel",),
                # Raised above v5e's 16 MiB default scoped limit for H>=512 configs.
                vmem_limit_bytes=64 * 1024 * 1024),
        )

    args = (xf, q_in, wm, wk, wv, wo, w1, w2, bpack, b1)
    if single_buffer_weights:
        try:
            out = build(True)(*args)
        except Exception:
            # pl.Buffered(1) not supported on this jax version -> default buffering.
            out = build(False)(*args)
    else:
        out = build(False)(*args)

    return out.reshape(Bp, Lp, H)[:B, :L, :]


def reference_forward(x, p, num_heads):
    """Pure-JAX f32 reference of the PyTorch forward, for verification."""
    B, S, P = x.shape
    L, H = p["emb"].shape
    d = H // num_heads
    mem = x @ p["wm"] + p["bm"]
    q = p["emb"] @ p["wq"] + p["bq"]
    k = mem @ p["wk"] + p["bk"]
    v = mem @ p["wv"] + p["bv"]
    qh = q.reshape(L, num_heads, d).transpose(1, 0, 2) * (d ** -0.5)   # [nh, L, d]
    kh = k.reshape(B, S, num_heads, d).transpose(0, 2, 1, 3)           # [B, nh, S, d]
    vh = v.reshape(B, S, num_heads, d).transpose(0, 2, 1, 3)
    logits = jnp.einsum("hld,bhsd->bhls", qh, kh)
    w = jax.nn.softmax(logits, axis=-1)
    ctx = jnp.einsum("bhls,bhsd->bhld", w, vh).transpose(0, 2, 1, 3).reshape(B, L, H)
    attn = ctx @ p["wo"] + p["bo"]
    h1 = jnp.tanh(attn @ p["w1"] + p["b1"])
    return h1 @ p["w2"] + p["b2"]


def _xavier(key, shape):
    fan_in, fan_out = shape
    limit = (6.0 / (fan_in + fan_out)) ** 0.5
    return jax.random.uniform(key, shape, jnp.float32, -limit, limit)


def init_params(key, L, P, H):
    ks = jax.random.split(key, 15)
    p = {
        "emb": _xavier(ks[0], (L, H)),
        "wm": _xavier(ks[1], (P, H)), "bm": 0.01 * jax.random.normal(ks[2], (H,)),
        "wq": _xavier(ks[3], (H, H)), "bq": 0.01 * jax.random.normal(ks[4], (H,)),
        "wk": _xavier(ks[5], (H, H)), "bk": 0.01 * jax.random.normal(ks[6], (H,)),
        "wv": _xavier(ks[7], (H, H)), "bv": 0.01 * jax.random.normal(ks[8], (H,)),
        "wo": _xavier(ks[9], (H, H)), "bo": 0.01 * jax.random.normal(ks[10], (H,)),
        "w1": _xavier(ks[11], (H, 4 * H)), "b1": 0.01 * jax.random.normal(ks[12], (4 * H,)),
        "w2": _xavier(ks[13], (4 * H, H)), "b2": 0.01 * jax.random.normal(ks[14], (H,)),
    }
    return {k: v.astype(jnp.float32) for k, v in p.items()}


if __name__ == "__main__":
    def _run_case(B, S, P, H, L, NH, block_b):
        key = jax.random.PRNGKey(0)
        kx, kp = jax.random.split(key)
        x = jax.random.normal(kx, (B, S, P), dtype=jnp.float32)
        params = init_params(kp, L, P, H)
        out = jax.block_until_ready(visual_prefix_net(x, params, NH, block_b=block_b))
        ref = reference_forward(x, params, NH)
        assert out.shape == (B, L, H), out.shape
        err = float(jnp.max(jnp.abs(out - ref)))
        # bf16 matmuls (f32 accumulation) + approx softmax reciprocal vs. f32 reference.
        assert jnp.allclose(out, ref, atol=3e-2, rtol=3e-2), err

    # Case 1: d = H/NH = 8 (< 128) -> masked-q logits path; exercises batch padding
    # (B % Bb != 0, grid of 2 steps), L padded to 8, and S padded/masked to 16.
    _run_case(B=3, S=8, P=16, H=32, L=6, NH=4, block_b=2)
    # Case 2: d = 128 -> per-head (unmasked) logits path, single grid step.
    _run_case(B=2, S=8, P=16, H=256, L=8, NH=2, block_b=8)

    print("KERNEL_OK")
</pallas_src>

<mosaic_0001>
module attributes {stable_mosaic.version = 11 : i64} {
  func.func @_visual_prefix_kernel(%arg0: i32, %arg1: memref<32x16xbf16, #tpu.memory_space<vmem>>, %arg2: memref<32x32xbf16, #tpu.memory_space<vmem>>, %arg3: memref<16x32xbf16, #tpu.memory_space<vmem>>, %arg4: memref<32x32xbf16, #tpu.memory_space<vmem>>, %arg5: memref<32x32xbf16, #tpu.memory_space<vmem>>, %arg6: memref<32x32xbf16, #tpu.memory_space<vmem>>, %arg7: memref<32x128xbf16, #tpu.memory_space<vmem>>, %arg8: memref<128x32xbf16, #tpu.memory_space<vmem>>, %arg9: memref<8x32xf32, #tpu.memory_space<vmem>>, %arg10: memref<1x128xf32, #tpu.memory_space<vmem>>, %arg11: memref<16x32xf32, #tpu.memory_space<vmem>>, %arg12: memref<32x32xbf16, #tpu.memory_space<vmem>>, %arg13: memref<32x32xbf16, #tpu.memory_space<vmem>>, %arg14: memref<16x32xf32, #tpu.memory_space<vmem>>) attributes {dimension_semantics = [#tpu.dimension_semantics<parallel>], iteration_bounds = array<i64: 2>, scalar_prefetch = 0 : i64, scratch_operands = 3 : i64, tpu.core_type = #tpu.core_type<tc>, window_params = [{transform_indices = @transform_0, window_bounds = array<i64: 32, 16>}, {pipeline_mode = #tpu.pipeline_mode<synchronous>, transform_indices = @transform_1, window_bounds = array<i64: 32, 32>}, {pipeline_mode = #tpu.pipeline_mode<synchronous>, transform_indices = @transform_2, window_bounds = array<i64: 16, 32>}, {pipeline_mode = #tpu.pipeline_mode<synchronous>, transform_indices = @transform_3, window_bounds = array<i64: 32, 32>}, {pipeline_mode = #tpu.pipeline_mode<synchronous>, transform_indices = @transform_4, window_bounds = array<i64: 32, 32>}, {pipeline_mode = #tpu.pipeline_mode<synchronous>, transform_indices = @transform_5, window_bounds = array<i64: 32, 32>}, {pipeline_mode = #tpu.pipeline_mode<synchronous>, transform_indices = @transform_6, window_bounds = array<i64: 32, 128>}, {pipeline_mode = #tpu.pipeline_mode<synchronous>, transform_indices = @transform_7, window_bounds = array<i64: 128, 32>}, {pipeline_mode = #tpu.pipeline_mode<synchronous>, transform_indices = @transform_8, window_bounds = array<i64: 8, 32>}, {pipeline_mode = #tpu.pipeline_mode<synchronous>, transform_indices = @transform_9, window_bounds = array<i64: 1, 128>}, {transform_indices = @transform_10, window_bounds = array<i64: 16, 32>}]} {
    %c0 = arith.constant 0 : index
    %c0_0 = arith.constant 0 : index
    %0 = vector.load %arg9[%c0, %c0_0] : memref<8x32xf32, #tpu.memory_space<vmem>>, vector<8x32xf32>
    %1 = vector.extract_strided_slice %0 {offsets = [0, 0], sizes = [1, 32], strides = [1, 1]} : vector<8x32xf32> to vector<1x32xf32>
    %2 = vector.extract_strided_slice %0 {offsets = [1, 0], sizes = [1, 32], strides = [1, 1]} : vector<8x32xf32> to vector<1x32xf32>
    %3 = vector.extract_strided_slice %0 {offsets = [2, 0], sizes = [1, 32], strides = [1, 1]} : vector<8x32xf32> to vector<1x32xf32>
    %4 = vector.extract_strided_slice %0 {offsets = [3, 0], sizes = [1, 32], strides = [1, 1]} : vector<8x32xf32> to vector<1x32xf32>
    %5 = vector.extract_strided_slice %0 {offsets = [4, 0], sizes = [1, 32], strides = [1, 1]} : vector<8x32xf32> to vector<1x32xf32>
    %c0_1 = arith.constant 0 : index
    %c0_2 = arith.constant 0 : index
    %6 = vector.load %arg10[%c0_1, %c0_2] : memref<1x128xf32, #tpu.memory_space<vmem>>, vector<1x128xf32>
    %c0_3 = arith.constant 0 : index
    %c0_4 = arith.constant 0 : index
    %7 = vector.load %arg1[%c0_3, %c0_4] : memref<32x16xbf16, #tpu.memory_space<vmem>>, vector<32x16xbf16>
    %c0_5 = arith.constant 0 : index
    %c0_6 = arith.constant 0 : index
    %8 = vector.load %arg3[%c0_5, %c0_6] : memref<16x32xbf16, #tpu.memory_space<vmem>>, vector<16x32xbf16>
    %cst = arith.constant dense<0.000000e+00> : vector<32x32xf32>
    %9 = tpu.matmul %7, %8, %cst {dimension_numbers = #tpu.dot_dimension_numbers<[1], [0], [0], [1], [0, 0, 1, 1], [], []>} : vector<32x16xbf16>, vector<16x32xbf16>, vector<32x32xf32> -> vector<32x32xf32>
    %10 = vector.broadcast %1 : vector<1x32xf32> to vector<32x32xf32>
    %11 = arith.addf %9, %10 : vector<32x32xf32>
    %12 = arith.truncf %11 : vector<32x32xf32> to vector<32x32xbf16>
    %c0_7 = arith.constant 0 : index
    %c0_8 = arith.constant 0 : index
    %13 = vector.load %arg4[%c0_7, %c0_8] : memref<32x32xbf16, #tpu.memory_space<vmem>>, vector<32x32xbf16>
    %cst_9 = arith.constant dense<0.000000e+00> : vector<32x32xf32>
    %14 = tpu.matmul %12, %13, %cst_9 {dimension_numbers = #tpu.dot_dimension_numbers<[1], [0], [0], [1], [0, 0, 1, 1], [], []>} : vector<32x32xbf16>, vector<32x32xbf16>, vector<32x32xf32> -> vector<32x32xf32>
    %15 = vector.broadcast %2 : vector<1x32xf32> to vector<32x32xf32>
    %16 = arith.addf %14, %15 : vector<32x32xf32>
    %17 = arith.truncf %16 : vector<32x32xf32> to vector<32x32xbf16>
    %c0_10 = arith.constant 0 : index
    %c0_11 = arith.constant 0 : index
    %18 = vector.load %arg12[%c0_10, %c0_11] : memref<32x32xbf16, #tpu.memory_space<vmem>>, vector<32x32xbf16>
    tpu.vector_store %arg12[%c0_10, %c0_11], %17 {strides = array<i32>} : memref<32x32xbf16, #tpu.memory_space<vmem>>, vector<32x32xbf16>,
    %c0_12 = arith.constant 0 : index
    %c0_13 = arith.constant 0 : index
    %19 = vector.load %arg5[%c0_12, %c0_13] : memref<32x32xbf16, #tpu.memory_space<vmem>>, vector<32x32xbf16>
    %cst_14 = arith.constant dense<0.000000e+00> : vector<32x32xf32>
    %20 = tpu.matmul %12, %19, %cst_14 {dimension_numbers = #tpu.dot_dimension_numbers<[1], [0], [0], [1], [0, 0, 1, 1], [], []>} : vector<32x32xbf16>, vector<32x32xbf16>, vector<32x32xf32> -> vector<32x32xf32>
    %21 = vector.broadcast %3 : vector<1x32xf32> to vector<32x32xf32>
    %22 = arith.addf %20, %21 : vector<32x32xf32>
    %23 = arith.truncf %22 : vector<32x32xf32> to vector<32x32xbf16>
    %c0_15 = arith.constant 0 : index
    %c0_16 = arith.constant 0 : index
    %24 = vector.load %arg13[%c0_15, %c0_16] : memref<32x32xbf16, #tpu.memory_space<vmem>>, vector<32x32xbf16>
    tpu.vector_store %arg13[%c0_15, %c0_16], %23 {strides = array<i32>} : memref<32x32xbf16, #tpu.memory_space<vmem>>, vector<32x32xbf16>,
    %c0_17 = arith.constant 0 : index
    %c0_18 = arith.constant 0 : index
    %25 = vector.load %arg2[%c0_17, %c0_18] : memref<32x32xbf16, #tpu.memory_space<vmem>>, vector<32x32xbf16>
    %26 = tpu.iota {dimensions = array<i32: 1>} : vector<1x16xi32>
    %c8_i32 = arith.constant 8 : i32
    %27 = vector.broadcast %c8_i32 : i32 to vector<1x16xi32>
    %28 = arith.cmpi slt, %26, %27 : vector<1x16xi32>
    %cst_19 = arith.constant 0.000000e+00 : f32
    %cst_20 = arith.constant -1.000000e+30 : f32
    %29 = vector.broadcast %cst_19 : f32 to vector<1x16xf32>
    %30 = vector.broadcast %cst_20 : f32 to vector<1x16xf32>
    %31 = arith.select %28, %29, %30 : vector<1x16xi1>, vector<1x16xf32>
    %c0_i32 = arith.constant 0 : i32
    %c16_i32 = arith.constant 16 : i32
    %32 = arith.muli %c0_i32, %c16_i32 : i32
    %33 = tpu.assume_multiple %32, 16 : i32
    %34 = arith.index_cast %33 : i32 to index
    %c0_21 = arith.constant 0 : index
    %35 = vector.load %arg12[%34, %c0_21] : memref<32x32xbf16, #tpu.memory_space<vmem>>, vector<16x32xbf16>
    %36 = arith.index_cast %33 : i32 to index
    %c0_22 = arith.constant 0 : index
    %37 = vector.load %arg13[%36, %c0_22] : memref<32x32xbf16, #tpu.memory_space<vmem>>, vector<16x32xbf16>
    %cst_23 = arith.constant dense<0.000000e+00> : vector<32x16xf32>
    %38 = tpu.matmul %25, %35, %cst_23 {dimension_numbers = #tpu.dot_dimension_numbers<[1], [1], [0], [0], [0, 0, 1, 0], [], []>} : vector<32x32xbf16>, vector<16x32xbf16>, vector<32x16xf32> -> vector<32x16xf32>
    %39 = vector.broadcast %31 : vector<1x16xf32> to vector<32x16xf32>
    %40 = arith.addf %38, %39 : vector<32x16xf32>
    %cst_24 = arith.constant dense<0xFF800000> : vector<32xf32>
    %41 = vector.multi_reduction <maximumf>, %40, %cst_24 [1] : vector<32x16xf32> to vector<32xf32>
    %42 = vector.shape_cast %41 : vector<32xf32> to vector<32x1xf32>
    %43 = vector.broadcast %42 : vector<32x1xf32> to vector<32x16xf32>
    %44 = arith.subf %40, %43 : vector<32x16xf32>
    %45 = math.exp %44 : vector<32x16xf32>
    %cst_25 = arith.constant dense<0.000000e+00> : vector<32xf32>
    %46 = vector.multi_reduction <add>, %45, %cst_25 [1] : vector<32x16xf32> to vector<32xf32>
    %47 = vector.shape_cast %46 : vector<32xf32> to vector<32x1xf32>
    %48 = tpu.reciprocal %47 {approx = true} : vector<32x1xf32> -> vector<32x1xf32>
    %49 = vector.broadcast %48 : vector<32x1xf32> to vector<32x16xf32>
    %50 = arith.mulf %45, %49 : vector<32x16xf32>
    %51 = vector.extract_strided_slice %50 {offsets = [0, 0], sizes = [8, 16], strides = [1, 1]} : vector<32x16xf32> to vector<8x16xf32>
    %52 = arith.truncf %51 : vector<8x16xf32> to vector<8x16xbf16>
    %53 = vector.extract_strided_slice %37 {offsets = [0, 0], sizes = [16, 8], strides = [1, 1]} : vector<16x32xbf16> to vector<16x8xbf16>
    %cst_26 = arith.constant dense<0.000000e+00> : vector<8x8xf32>
    %54 = tpu.matmul %52, %53, %cst_26 {dimension_numbers = #tpu.dot_dimension_numbers<[1], [0], [0], [1], [0, 0, 1, 1], [], []>} : vector<8x16xbf16>, vector<16x8xbf16>, vector<8x8xf32> -> vector<8x8xf32>
    %55 = vector.extract_strided_slice %50 {offsets = [8, 0], sizes = [8, 16], strides = [1, 1]} : vector<32x16xf32> to vector<8x16xf32>
    %56 = arith.truncf %55 : vector<8x16xf32> to vector<8x16xbf16>
    %57 = vector.extract_strided_slice %37 {offsets = [0, 8], sizes = [16, 8], strides = [1, 1]} : vector<16x32xbf16> to vector<16x8xbf16>
    %cst_27 = arith.constant dense<0.000000e+00> : vector<8x8xf32>
    %58 = tpu.matmul %56, %57, %cst_27 {dimension_numbers = #tpu.dot_dimension_numbers<[1], [0], [0], [1], [0, 0, 1, 1], [], []>} : vector<8x16xbf16>, vector<16x8xbf16>, vector<8x8xf32> -> vector<8x8xf32>
    %59 = vector.extract_strided_slice %50 {offsets = [16, 0], sizes = [8, 16], strides = [1, 1]} : vector<32x16xf32> to vector<8x16xf32>
    %60 = arith.truncf %59 : vector<8x16xf32> to vector<8x16xbf16>
    %61 = vector.extract_strided_slice %37 {offsets = [0, 16], sizes = [16, 8], strides = [1, 1]} : vector<16x32xbf16> to vector<16x8xbf16>
    %cst_28 = arith.constant dense<0.000000e+00> : vector<8x8xf32>
    %62 = tpu.matmul %60, %61, %cst_28 {dimension_numbers = #tpu.dot_dimension_numbers<[1], [0], [0], [1], [0, 0, 1, 1], [], []>} : vector<8x16xbf16>, vector<16x8xbf16>, vector<8x8xf32> -> vector<8x8xf32>
    %63 = vector.extract_strided_slice %50 {offsets = [24, 0], sizes = [8, 16], strides = [1, 1]} : vector<32x16xf32> to vector<8x16xf32>
    %64 = arith.truncf %63 : vector<8x16xf32> to vector<8x16xbf16>
    %65 = vector.extract_strided_slice %37 {offsets = [0, 24], sizes = [16, 8], strides = [1, 1]} : vector<16x32xbf16> to vector<16x8xbf16>
    %cst_29 = arith.constant dense<0.000000e+00> : vector<8x8xf32>
    %66 = tpu.matmul %64, %65, %cst_29 {dimension_numbers = #tpu.dot_dimension_numbers<[1], [0], [0], [1], [0, 0, 1, 1], [], []>} : vector<8x16xbf16>, vector<16x8xbf16>, vector<8x8xf32> -> vector<8x8xf32>
    %67 = tpu.concatenate %54, %58, %62, %66 in 1 : vector<8x8xf32>, vector<8x8xf32>, vector<8x8xf32>, vector<8x8xf32> -> vector<8x32xf32>
    %c8_i32_30 = arith.constant 8 : i32
    %68 = arith.muli %c0_i32, %c8_i32_30 : i32
    %69 = tpu.assume_multiple %68, 8 : i32
    %70 = arith.index_cast %69 : i32 to index
    %c0_31 = arith.constant 0 : index
    %71 = vector.load %arg14[%70, %c0_31] : memref<16x32xf32, #tpu.memory_space<vmem>>, vector<8x32xf32>
    tpu.vector_store %arg14[%70, %c0_31], %67 {strides = array<i32>} : memref<16x32xf32, #tpu.memory_space<vmem>>, vector<8x32xf32>,
    %c1_i32 = arith.constant 1 : i32
    %c16_i32_32 = arith.constant 16 : i32
    %72 = arith.muli %c1_i32, %c16_i32_32 : i32
    %73 = tpu.assume_multiple %72, 16 : i32
    %74 = arith.index_cast %73 : i32 to index
    %c0_33 = arith.constant 0 : index
    %75 = vector.load %arg12[%74, %c0_33] : memref<32x32xbf16, #tpu.memory_space<vmem>>, vector<16x32xbf16>
    %76 = arith.index_cast %73 : i32 to index
    %c0_34 = arith.constant 0 : index
    %77 = vector.load %arg13[%76, %c0_34] : memref<32x32xbf16, #tpu.memory_space<vmem>>, vector<16x32xbf16>
    %cst_35 = arith.constant dense<0.000000e+00> : vector<32x16xf32>
    %78 = tpu.matmul %25, %75, %cst_35 {dimension_numbers = #tpu.dot_dimension_numbers<[1], [1], [0], [0], [0, 0, 1, 0], [], []>} : vector<32x32xbf16>, vector<16x32xbf16>, vector<32x16xf32> -> vector<32x16xf32>
    %79 = vector.broadcast %31 : vector<1x16xf32> to vector<32x16xf32>
    %80 = arith.addf %78, %79 : vector<32x16xf32>
    %cst_36 = arith.constant dense<0xFF800000> : vector<32xf32>
    %81 = vector.multi_reduction <maximumf>, %80, %cst_36 [1] : vector<32x16xf32> to vector<32xf32>
    %82 = vector.shape_cast %81 : vector<32xf32> to vector<32x1xf32>
    %83 = vector.broadcast %82 : vector<32x1xf32> to vector<32x16xf32>
    %84 = arith.subf %80, %83 : vector<32x16xf32>
    %85 = math.exp %84 : vector<32x16xf32>
    %cst_37 = arith.constant dense<0.000000e+00> : vector<32xf32>
    %86 = vector.multi_reduction <add>, %85, %cst_37 [1] : vector<32x16xf32> to vector<32xf32>
    %87 = vector.shape_cast %86 : vector<32xf32> to vector<32x1xf32>
    %88 = tpu.reciprocal %87 {approx = true} : vector<32x1xf32> -> vector<32x1xf32>
    %89 = vector.broadcast %88 : vector<32x1xf32> to vector<32x16xf32>
    %90 = arith.mulf %85, %89 : vector<32x16xf32>
    %91 = vector.extract_strided_slice %90 {offsets = [0, 0], sizes = [8, 16], strides = [1, 1]} : vector<32x16xf32> to vector<8x16xf32>
    %92 = arith.truncf %91 : vector<8x16xf32> to vector<8x16xbf16>
    %93 = vector.extract_strided_slice %77 {offsets = [0, 0], sizes = [16, 8], strides = [1, 1]} : vector<16x32xbf16> to vector<16x8xbf16>
    %cst_38 = arith.constant dense<0.000000e+00> : vector<8x8xf32>
    %94 = tpu.matmul %92, %93, %cst_38 {dimension_numbers = #tpu.dot_dimension_numbers<[1], [0], [0], [1], [0, 0, 1, 1], [], []>} : vector<8x16xbf16>, vector<16x8xbf16>, vector<8x8xf32> -> vector<8x8xf32>
    %95 = vector.extract_strided_slice %90 {offsets = [8, 0], sizes = [8, 16], strides = [1, 1]} : vector<32x16xf32> to vector<8x16xf32>
    %96 = arith.truncf %95 : vector<8x16xf32> to vector<8x16xbf16>
    %97 = vector.extract_strided_slice %77 {offsets = [0, 8], sizes = [16, 8], strides = [1, 1]} : vector<16x32xbf16> to vector<16x8xbf16>
    %cst_39 = arith.constant dense<0.000000e+00> : vector<8x8xf32>
    %98 = tpu.matmul %96, %97, %cst_39 {dimension_numbers = #tpu.dot_dimension_numbers<[1], [0], [0], [1], [0, 0, 1, 1], [], []>} : vector<8x16xbf16>, vector<16x8xbf16>, vector<8x8xf32> -> vector<8x8xf32>
    %99 = vector.extract_strided_slice %90 {offsets = [16, 0], sizes = [8, 16], strides = [1, 1]} : vector<32x16xf32> to vector<8x16xf32>
    %100 = arith.truncf %99 : vector<8x16xf32> to vector<8x16xbf16>
    %101 = vector.extract_strided_slice %77 {offsets = [0, 16], sizes = [16, 8], strides = [1, 1]} : vector<16x32xbf16> to vector<16x8xbf16>
    %cst_40 = arith.constant dense<0.000000e+00> : vector<8x8xf32>
    %102 = tpu.matmul %100, %101, %cst_40 {dimension_numbers = #tpu.dot_dimension_numbers<[1], [0], [0], [1], [0, 0, 1, 1], [], []>} : vector<8x16xbf16>, vector<16x8xbf16>, vector<8x8xf32> -> vector<8x8xf32>
    %103 = vector.extract_strided_slice %90 {offsets = [24, 0], sizes = [8, 16], strides = [1, 1]} : vector<32x16xf32> to vector<8x16xf32>
    %104 = arith.truncf %103 : vector<8x16xf32> to vector<8x16xbf16>
    %105 = vector.extract_strided_slice %77 {offsets = [0, 24], sizes = [16, 8], strides = [1, 1]} : vector<16x32xbf16> to vector<16x8xbf16>
    %cst_41 = arith.constant dense<0.000000e+00> : vector<8x8xf32>
    %106 = tpu.matmul %104, %105, %cst_41 {dimension_numbers = #tpu.dot_dimension_numbers<[1], [0], [0], [1], [0, 0, 1, 1], [], []>} : vector<8x16xbf16>, vector<16x8xbf16>, vector<8x8xf32> -> vector<8x8xf32>
    %107 = tpu.concatenate %94, %98, %102, %106 in 1 : vector<8x8xf32>, vector<8x8xf32>, vector<8x8xf32>, vector<8x8xf32> -> vector<8x32xf32>
    %c8_i32_42 = arith.constant 8 : i32
    %108 = arith.muli %c1_i32, %c8_i32_42 : i32
    %109 = tpu.assume_multiple %108, 8 : i32
    %110 = arith.index_cast %109 : i32 to index
    %c0_43 = arith.constant 0 : index
    %111 = vector.load %arg14[%110, %c0_43] : memref<16x32xf32, #tpu.memory_space<vmem>>, vector<8x32xf32>
    tpu.vector_store %arg14[%110, %c0_43], %107 {strides = array<i32>} : memref<16x32xf32, #tpu.memory_space<vmem>>, vector<8x32xf32>,
    %c2_i32 = arith.constant 2 : i32
    %c0_44 = arith.constant 0 : index
    %c0_45 = arith.constant 0 : index
    %112 = vector.load %arg14[%c0_44, %c0_45] : memref<16x32xf32, #tpu.memory_space<vmem>>, vector<16x32xf32>
    %113 = arith.truncf %112 : vector<16x32xf32> to vector<16x32xbf16>
    %c0_46 = arith.constant 0 : index
    %c0_47 = arith.constant 0 : index
    %114 = vector.load %arg6[%c0_46, %c0_47] : memref<32x32xbf16, #tpu.memory_space<vmem>>, vector<32x32xbf16>
    %cst_48 = arith.constant dense<0.000000e+00> : vector<16x32xf32>
    %115 = tpu.matmul %113, %114, %cst_48 {dimension_numbers = #tpu.dot_dimension_numbers<[1], [0], [0], [1], [0, 0, 1, 1], [], []>} : vector<16x32xbf16>, vector<32x32xbf16>, vector<16x32xf32> -> vector<16x32xf32>
    %116 = vector.broadcast %4 : vector<1x32xf32> to vector<16x32xf32>
    %117 = arith.addf %115, %116 : vector<16x32xf32>
    %118 = arith.truncf %117 : vector<16x32xf32> to vector<16x32xbf16>
    %c0_49 = arith.constant 0 : index
    %c0_50 = arith.constant 0 : index
    %119 = vector.load %arg7[%c0_49, %c0_50] : memref<32x128xbf16, #tpu.memory_space<vmem>>, vector<32x128xbf16>
    %cst_51 = arith.constant dense<0.000000e+00> : vector<16x128xf32>
    %120 = tpu.matmul %118, %119, %cst_51 {dimension_numbers = #tpu.dot_dimension_numbers<[1], [0], [0], [1], [0, 0, 1, 1], [], []>} : vector<16x32xbf16>, vector<32x128xbf16>, vector<16x128xf32> -> vector<16x128xf32>
    %121 = vector.broadcast %6 : vector<1x128xf32> to vector<16x128xf32>
    %122 = arith.addf %120, %121 : vector<16x128xf32>
    %123 = math.tanh %122 : vector<16x128xf32>
    %124 = arith.truncf %123 : vector<16x128xf32> to vector<16x128xbf16>
    %c0_52 = arith.constant 0 : index
    %c0_53 = arith.constant 0 : index
    %125 = vector.load %arg8[%c0_52, %c0_53] : memref<128x32xbf16, #tpu.memory_space<vmem>>, vector<128x32xbf16>
    %cst_54 = arith.constant dense<0.000000e+00> : vector<16x32xf32>
    %126 = tpu.matmul %124, %125, %cst_54 {dimension_numbers = #tpu.dot_dimension_numbers<[1], [0], [0], [1], [0, 0, 1, 1], [], []>} : vector<16x128xbf16>, vector<128x32xbf16>, vector<16x32xf32> -> vector<16x32xf32>
    %127 = vector.broadcast %5 : vector<1x32xf32> to vector<16x32xf32>
    %128 = arith.addf %126, %127 : vector<16x32xf32>
    %c0_55 = arith.constant 0 : index
    %c0_56 = arith.constant 0 : index
    %129 = vector.load %arg11[%c0_55, %c0_56] : memref<16x32xf32, #tpu.memory_space<vmem>>, vector<16x32xf32>
    tpu.vector_store %arg11[%c0_55, %c0_56], %128 {strides = array<i32>} : memref<16x32xf32, #tpu.memory_space<vmem>>, vector<16x32xf32>,
    return
  }
  func.func @transform_0(%arg0: i32) -> (i32, i32) {
    %c0_i32 = arith.constant 0 : i32
    %c0_i32_0 = arith.constant 0 : i32
    return %arg0, %c0_i32 : i32, i32
  }
  func.func @transform_1(%arg0: i32) -> (i32, i32) {
    %c0_i32 = arith.constant 0 : i32
    %c0_i32_0 = arith.constant 0 : i32
    %c0_i32_1 = arith.constant 0 : i32
    return %c0_i32, %c0_i32_0 : i32, i32
  }
  func.func @transform_2(%arg0: i32) -> (i32, i32) {
    %c0_i32 = arith.constant 0 : i32
    %c0_i32_0 = arith.constant 0 : i32
    %c0_i32_1 = arith.constant 0 : i32
    return %c0_i32, %c0_i32_0 : i32, i32
  }
  func.func @transform_3(%arg0: i32) -> (i32, i32) {
    %c0_i32 = arith.constant 0 : i32
    %c0_i32_0 = arith.constant 0 : i32
    %c0_i32_1 = arith.constant 0 : i32
    return %c0_i32, %c0_i32_0 : i32, i32
  }
  func.func @transform_4(%arg0: i32) -> (i32, i32) {
    %c0_i32 = arith.constant 0 : i32
    %c0_i32_0 = arith.constant 0 : i32
    %c0_i32_1 = arith.constant 0 : i32
    return %c0_i32, %c0_i32_0 : i32, i32
  }
  func.func @transform_5(%arg0: i32) -> (i32, i32) {
    %c0_i32 = arith.constant 0 : i32
    %c0_i32_0 = arith.constant 0 : i32
    %c0_i32_1 = arith.constant 0 : i32
    return %c0_i32, %c0_i32_0 : i32, i32
  }
  func.func @transform_6(%arg0: i32) -> (i32, i32) {
    %c0_i32 = arith.constant 0 : i32
    %c0_i32_0 = arith.constant 0 : i32
    %c0_i32_1 = arith.constant 0 : i32
    return %c0_i32, %c0_i32_0 : i32, i32
  }
  func.func @transform_7(%arg0: i32) -> (i32, i32) {
    %c0_i32 = arith.constant 0 : i32
    %c0_i32_0 = arith.constant 0 : i32
    %c0_i32_1 = arith.constant 0 : i32
    return %c0_i32, %c0_i32_0 : i32, i32
  }
  func.func @transform_8(%arg0: i32) -> (i32, i32) {
    %c0_i32 = arith.constant 0 : i32
    %c0_i32_0 = arith.constant 0 : i32
    %c0_i32_1 = arith.constant 0 : i32
    return %c0_i32, %c0_i32_0 : i32, i32
  }
  func.func @transform_9(%arg0: i32) -> (i32, i32) {
    %c0_i32 = arith.constant 0 : i32
    %c0_i32_0 = arith.constant 0 : i32
    %c0_i32_1 = arith.constant 0 : i32
    return %c0_i32, %c0_i32_0 : i32, i32
  }
  func.func @transform_10(%arg0: i32) -> (i32, i32) {
    %c0_i32 = arith.constant 0 : i32
    %c0_i32_0 = arith.constant 0 : i32
    return %arg0, %c0_i32 : i32, i32
  }
}

module attributes {stable_mosaic.version = 11 : i64} {
  func.func @_visual_prefix_kernel(%arg0: i32, %arg1: memref<32x16xbf16, #tpu.memory_space<vmem>>, %arg2: memref<32x32xbf16, #tpu.memory_space<vmem>>, %arg3: memref<16x32xbf16, #tpu.memory_space<vmem>>, %arg4: memref<32x32xbf16, #tpu.memory_space<vmem>>, %arg5: memref<32x32xbf16, #tpu.memory_space<vmem>>, %arg6: memref<32x32xbf16, #tpu.memory_space<vmem>>, %arg7: memref<32x128xbf16, #tpu.memory_space<vmem>>, %arg8: memref<128x32xbf16, #tpu.memory_space<vmem>>, %arg9: memref<8x32xf32, #tpu.memory_space<vmem>>, %arg10: memref<1x128xf32, #tpu.memory_space<vmem>>, %arg11: memref<16x32xf32, #tpu.memory_space<vmem>>, %arg12: memref<32x32xbf16, #tpu.memory_space<vmem>>, %arg13: memref<32x32xbf16, #tpu.memory_space<vmem>>, %arg14: memref<16x32xf32, #tpu.memory_space<vmem>>) attributes {dimension_semantics = [#tpu.dimension_semantics<parallel>], iteration_bounds = array<i64: 2>, scalar_prefetch = 0 : i64, scratch_operands = 3 : i64, tpu.core_type = #tpu.core_type<tc>, window_params = [{transform_indices = @transform_0, window_bounds = array<i64: 32, 16>}, {pipeline_mode = #tpu.pipeline_mode<synchronous>, transform_indices = @transform_1, window_bounds = array<i64: 32, 32>}, {pipeline_mode = #tpu.pipeline_mode<synchronous>, transform_indices = @transform_2, window_bounds = array<i64: 16, 32>}, {pipeline_mode = #tpu.pipeline_mode<synchronous>, transform_indices = @transform_3, window_bounds = array<i64: 32, 32>}, {pipeline_mode = #tpu.pipeline_mode<synchronous>, transform_indices = @transform_4, window_bounds = array<i64: 32, 32>}, {pipeline_mode = #tpu.pipeline_mode<synchronous>, transform_indices = @transform_5, window_bounds = array<i64: 32, 32>}, {pipeline_mode = #tpu.pipeline_mode<synchronous>, transform_indices = @transform_6, window_bounds = array<i64: 32, 128>}, {pipeline_mode = #tpu.pipeline_mode<synchronous>, transform_indices = @transform_7, window_bounds = array<i64: 128, 32>}, {pipeline_mode = #tpu.pipeline_mode<synchronous>, transform_indices = @transform_8, window_bounds = array<i64: 8, 32>}, {pipeline_mode = #tpu.pipeline_mode<synchronous>, transform_indices = @transform_9, window_bounds = array<i64: 1, 128>}, {transform_indices = @transform_10, window_bounds = array<i64: 16, 32>}]} {
    %c0 = arith.constant 0 : index
    %c0_0 = arith.constant 0 : index
    %0 = vector.load %arg9[%c0, %c0_0] : memref<8x32xf32, #tpu.memory_space<vmem>>, vector<8x32xf32>
    %1 = vector.extract_strided_slice %0 {offsets = [0, 0], sizes = [1, 32], strides = [1, 1]} : vector<8x32xf32> to vector<1x32xf32>
    %2 = vector.extract_strided_slice %0 {offsets = [1, 0], sizes = [1, 32], strides = [1, 1]} : vector<8x32xf32> to vector<1x32xf32>
    %3 = vector.extract_strided_slice %0 {offsets = [2, 0], sizes = [1, 32], strides = [1, 1]} : vector<8x32xf32> to vector<1x32xf32>
    %4 = vector.extract_strided_slice %0 {offsets = [3, 0], sizes = [1, 32], strides = [1, 1]} : vector<8x32xf32> to vector<1x32xf32>
    %5 = vector.extract_strided_slice %0 {offsets = [4, 0], sizes = [1, 32], strides = [1, 1]} : vector<8x32xf32> to vector<1x32xf32>
    %c0_1 = arith.constant 0 : index
    %c0_2 = arith.constant 0 : index
    %6 = vector.load %arg10[%c0_1, %c0_2] : memref<1x128xf32, #tpu.memory_space<vmem>>, vector<1x128xf32>
    %c0_3 = arith.constant 0 : index
    %c0_4 = arith.constant 0 : index
    %7 = vector.load %arg1[%c0_3, %c0_4] : memref<32x16xbf16, #tpu.memory_space<vmem>>, vector<32x16xbf16>
    %c0_5 = arith.constant 0 : index
    %c0_6 = arith.constant 0 : index
    %8 = vector.load %arg3[%c0_5, %c0_6] : memref<16x32xbf16, #tpu.memory_space<vmem>>, vector<16x32xbf16>
    %cst = arith.constant dense<0.000000e+00> : vector<32x32xf32>
    %9 = tpu.matmul %7, %8, %cst {dimension_numbers = #tpu.dot_dimension_numbers<[1], [0], [0], [1], [0, 0, 1, 1], [], []>} : vector<32x16xbf16>, vector<16x32xbf16>, vector<32x32xf32> -> vector<32x32xf32>
    %10 = vector.broadcast %1 : vector<1x32xf32> to vector<32x32xf32>
    %11 = arith.addf %9, %10 : vector<32x32xf32>
    %12 = arith.truncf %11 : vector<32x32xf32> to vector<32x32xbf16>
    %c0_7 = arith.constant 0 : index
    %c0_8 = arith.constant 0 : index
    %13 = vector.load %arg4[%c0_7, %c0_8] : memref<32x32xbf16, #tpu.memory_space<vmem>>, vector<32x32xbf16>
    %cst_9 = arith.constant dense<0.000000e+00> : vector<32x32xf32>
    %14 = tpu.matmul %12, %13, %cst_9 {dimension_numbers = #tpu.dot_dimension_numbers<[1], [0], [0], [1], [0, 0, 1, 1], [], []>} : vector<32x32xbf16>, vector<32x32xbf16>, vector<32x32xf32> -> vector<32x32xf32>
    %15 = vector.broadcast %2 : vector<1x32xf32> to vector<32x32xf32>
    %16 = arith.addf %14, %15 : vector<32x32xf32>
    %17 = arith.truncf %16 : vector<32x32xf32> to vector<32x32xbf16>
    %c0_10 = arith.constant 0 : index
    %c0_11 = arith.constant 0 : index
    %18 = vector.load %arg12[%c0_10, %c0_11] : memref<32x32xbf16, #tpu.memory_space<vmem>>, vector<32x32xbf16>
    tpu.vector_store %arg12[%c0_10, %c0_11], %17 {strides = array<i32>} : memref<32x32xbf16, #tpu.memory_space<vmem>>, vector<32x32xbf16>,
    %c0_12 = arith.constant 0 : index
    %c0_13 = arith.constant 0 : index
    %19 = vector.load %arg5[%c0_12, %c0_13] : memref<32x32xbf16, #tpu.memory_space<vmem>>, vector<32x32xbf16>
    %cst_14 = arith.constant dense<0.000000e+00> : vector<32x32xf32>
    %20 = tpu.matmul %12, %19, %cst_14 {dimension_numbers = #tpu.dot_dimension_numbers<[1], [0], [0], [1], [0, 0, 1, 1], [], []>} : vector<32x32xbf16>, vector<32x32xbf16>, vector<32x32xf32> -> vector<32x32xf32>
    %21 = vector.broadcast %3 : vector<1x32xf32> to vector<32x32xf32>
    %22 = arith.addf %20, %21 : vector<32x32xf32>
    %23 = arith.truncf %22 : vector<32x32xf32> to vector<32x32xbf16>
    %c0_15 = arith.constant 0 : index
    %c0_16 = arith.constant 0 : index
    %24 = vector.load %arg13[%c0_15, %c0_16] : memref<32x32xbf16, #tpu.memory_space<vmem>>, vector<32x32xbf16>
    tpu.vector_store %arg13[%c0_15, %c0_16], %23 {strides = array<i32>} : memref<32x32xbf16, #tpu.memory_space<vmem>>, vector<32x32xbf16>,
    %c0_17 = arith.constant 0 : index
    %c0_18 = arith.constant 0 : index
    %25 = vector.load %arg2[%c0_17, %c0_18] : memref<32x32xbf16, #tpu.memory_space<vmem>>, vector<32x32xbf16>
    %26 = tpu.iota {dimensions = array<i32: 1>} : vector<1x16xi32>
    %c8_i32 = arith.constant 8 : i32
    %27 = vector.broadcast %c8_i32 : i32 to vector<1x16xi32>
    %28 = arith.cmpi slt, %26, %27 : vector<1x16xi32>
    %cst_19 = arith.constant 0.000000e+00 : f32
    %cst_20 = arith.constant -1.000000e+30 : f32
    %29 = vector.broadcast %cst_19 : f32 to vector<1x16xf32>
    %30 = vector.broadcast %cst_20 : f32 to vector<1x16xf32>
    %31 = arith.select %28, %29, %30 : vector<1x16xi1>, vector<1x16xf32>
    %c0_i32 = arith.constant 0 : i32
    %c16_i32 = arith.constant 16 : i32
    %32 = arith.muli %c0_i32, %c16_i32 : i32
    %33 = tpu.assume_multiple %32, 16 : i32
    %34 = arith.index_cast %33 : i32 to index
    %c0_21 = arith.constant 0 : index
    %35 = vector.load %arg12[%34, %c0_21] : memref<32x32xbf16, #tpu.memory_space<vmem>>, vector<16x32xbf16>
    %36 = arith.index_cast %33 : i32 to index
    %c0_22 = arith.constant 0 : index
    %37 = vector.load %arg13[%36, %c0_22] : memref<32x32xbf16, #tpu.memory_space<vmem>>, vector<16x32xbf16>
    %cst_23 = arith.constant dense<0.000000e+00> : vector<32x16xf32>
    %38 = tpu.matmul %25, %35, %cst_23 {dimension_numbers = #tpu.dot_dimension_numbers<[1], [1], [0], [0], [0, 0, 1, 0], [], []>} : vector<32x32xbf16>, vector<16x32xbf16>, vector<32x16xf32> -> vector<32x16xf32>
    %39 = vector.broadcast %31 : vector<1x16xf32> to vector<32x16xf32>
    %40 = arith.addf %38, %39 : vector<32x16xf32>
    %cst_24 = arith.constant dense<0xFF800000> : vector<32xf32>
    %41 = vector.multi_reduction <maximumf>, %40, %cst_24 [1] : vector<32x16xf32> to vector<32xf32>
    %42 = vector.shape_cast %41 : vector<32xf32> to vector<32x1xf32>
    %43 = vector.broadcast %42 : vector<32x1xf32> to vector<32x16xf32>
    %44 = arith.subf %40, %43 : vector<32x16xf32>
    %45 = math.exp %44 : vector<32x16xf32>
    %cst_25 = arith.constant dense<0.000000e+00> : vector<32xf32>
    %46 = vector.multi_reduction <add>, %45, %cst_25 [1] : vector<32x16xf32> to vector<32xf32>
    %47 = vector.shape_cast %46 : vector<32xf32> to vector<32x1xf32>
    %48 = tpu.reciprocal %47 {approx = true} : vector<32x1xf32> -> vector<32x1xf32>
    %49 = vector.broadcast %48 : vector<32x1xf32> to vector<32x16xf32>
    %50 = arith.mulf %45, %49 : vector<32x16xf32>
    %51 = vector.extract_strided_slice %50 {offsets = [0, 0], sizes = [8, 16], strides = [1, 1]} : vector<32x16xf32> to vector<8x16xf32>
    %52 = arith.truncf %51 : vector<8x16xf32> to vector<8x16xbf16>
    %53 = vector.extract_strided_slice %37 {offsets = [0, 0], sizes = [16, 8], strides = [1, 1]} : vector<16x32xbf16> to vector<16x8xbf16>
    %cst_26 = arith.constant dense<0.000000e+00> : vector<8x8xf32>
    %54 = tpu.matmul %52, %53, %cst_26 {dimension_numbers = #tpu.dot_dimension_numbers<[1], [0], [0], [1], [0, 0, 1, 1], [], []>} : vector<8x16xbf16>, vector<16x8xbf16>, vector<8x8xf32> -> vector<8x8xf32>
    %55 = vector.extract_strided_slice %50 {offsets = [8, 0], sizes = [8, 16], strides = [1, 1]} : vector<32x16xf32> to vector<8x16xf32>
    %56 = arith.truncf %55 : vector<8x16xf32> to vector<8x16xbf16>
    %57 = vector.extract_strided_slice %37 {offsets = [0, 8], sizes = [16, 8], strides = [1, 1]} : vector<16x32xbf16> to vector<16x8xbf16>
    %cst_27 = arith.constant dense<0.000000e+00> : vector<8x8xf32>
    %58 = tpu.matmul %56, %57, %cst_27 {dimension_numbers = #tpu.dot_dimension_numbers<[1], [0], [0], [1], [0, 0, 1, 1], [], []>} : vector<8x16xbf16>, vector<16x8xbf16>, vector<8x8xf32> -> vector<8x8xf32>
    %59 = vector.extract_strided_slice %50 {offsets = [16, 0], sizes = [8, 16], strides = [1, 1]} : vector<32x16xf32> to vector<8x16xf32>
    %60 = arith.truncf %59 : vector<8x16xf32> to vector<8x16xbf16>
    %61 = vector.extract_strided_slice %37 {offsets = [0, 16], sizes = [16, 8], strides = [1, 1]} : vector<16x32xbf16> to vector<16x8xbf16>
    %cst_28 = arith.constant dense<0.000000e+00> : vector<8x8xf32>
    %62 = tpu.matmul %60, %61, %cst_28 {dimension_numbers = #tpu.dot_dimension_numbers<[1], [0], [0], [1], [0, 0, 1, 1], [], []>} : vector<8x16xbf16>, vector<16x8xbf16>, vector<8x8xf32> -> vector<8x8xf32>
    %63 = vector.extract_strided_slice %50 {offsets = [24, 0], sizes = [8, 16], strides = [1, 1]} : vector<32x16xf32> to vector<8x16xf32>
    %64 = arith.truncf %63 : vector<8x16xf32> to vector<8x16xbf16>
    %65 = vector.extract_strided_slice %37 {offsets = [0, 24], sizes = [16, 8], strides = [1, 1]} : vector<16x32xbf16> to vector<16x8xbf16>
    %cst_29 = arith.constant dense<0.000000e+00> : vector<8x8xf32>
    %66 = tpu.matmul %64, %65, %cst_29 {dimension_numbers = #tpu.dot_dimension_numbers<[1], [0], [0], [1], [0, 0, 1, 1], [], []>} : vector<8x16xbf16>, vector<16x8xbf16>, vector<8x8xf32> -> vector<8x8xf32>
    %67 = tpu.concatenate %54, %58, %62, %66 in 1 : vector<8x8xf32>, vector<8x8xf32>, vector<8x8xf32>, vector<8x8xf32> -> vector<8x32xf32>
    %c8_i32_30 = arith.constant 8 : i32
    %68 = arith.muli %c0_i32, %c8_i32_30 : i32
    %69 = tpu.assume_multiple %68, 8 : i32
    %70 = arith.index_cast %69 : i32 to index
    %c0_31 = arith.constant 0 : index
    %71 = vector.load %arg14[%70, %c0_31] : memref<16x32xf32, #tpu.memory_space<vmem>>, vector<8x32xf32>
    tpu.vector_store %arg14[%70, %c0_31], %67 {strides = array<i32>} : memref<16x32xf32, #tpu.memory_space<vmem>>, vector<8x32xf32>,
    %c1_i32 = arith.constant 1 : i32
    %c16_i32_32 = arith.constant 16 : i32
    %72 = arith.muli %c1_i32, %c16_i32_32 : i32
    %73 = tpu.assume_multiple %72, 16 : i32
    %74 = arith.index_cast %73 : i32 to index
    %c0_33 = arith.constant 0 : index
    %75 = vector.load %arg12[%74, %c0_33] : memref<32x32xbf16, #tpu.memory_space<vmem>>, vector<16x32xbf16>
    %76 = arith.index_cast %73 : i32 to index
    %c0_34 = arith.constant 0 : index
    %77 = vector.load %arg13[%76, %c0_34] : memref<32x32xbf16, #tpu.memory_space<vmem>>, vector<16x32xbf16>
    %cst_35 = arith.constant dense<0.000000e+00> : vector<32x16xf32>
    %78 = tpu.matmul %25, %75, %cst_35 {dimension_numbers = #tpu.dot_dimension_numbers<[1], [1], [0], [0], [0, 0, 1, 0], [], []>} : vector<32x32xbf16>, vector<16x32xbf16>, vector<32x16xf32> -> vector<32x16xf32>
    %79 = vector.broadcast %31 : vector<1x16xf32> to vector<32x16xf32>
    %80 = arith.addf %78, %79 : vector<32x16xf32>
    %cst_36 = arith.constant dense<0xFF800000> : vector<32xf32>
    %81 = vector.multi_reduction <maximumf>, %80, %cst_36 [1] : vector<32x16xf32> to vector<32xf32>
    %82 = vector.shape_cast %81 : vector<32xf32> to vector<32x1xf32>
    %83 = vector.broadcast %82 : vector<32x1xf32> to vector<32x16xf32>
    %84 = arith.subf %80, %83 : vector<32x16xf32>
    %85 = math.exp %84 : vector<32x16xf32>
    %cst_37 = arith.constant dense<0.000000e+00> : vector<32xf32>
    %86 = vector.multi_reduction <add>, %85, %cst_37 [1] : vector<32x16xf32> to vector<32xf32>
    %87 = vector.shape_cast %86 : vector<32xf32> to vector<32x1xf32>
    %88 = tpu.reciprocal %87 {approx = true} : vector<32x1xf32> -> vector<32x1xf32>
    %89 = vector.broadcast %88 : vector<32x1xf32> to vector<32x16xf32>
    %90 = arith.mulf %85, %89 : vector<32x16xf32>
    %91 = vector.extract_strided_slice %90 {offsets = [0, 0], sizes = [8, 16], strides = [1, 1]} : vector<32x16xf32> to vector<8x16xf32>
    %92 = arith.truncf %91 : vector<8x16xf32> to vector<8x16xbf16>
    %93 = vector.extract_strided_slice %77 {offsets = [0, 0], sizes = [16, 8], strides = [1, 1]} : vector<16x32xbf16> to vector<16x8xbf16>
    %cst_38 = arith.constant dense<0.000000e+00> : vector<8x8xf32>
    %94 = tpu.matmul %92, %93, %cst_38 {dimension_numbers = #tpu.dot_dimension_numbers<[1], [0], [0], [1], [0, 0, 1, 1], [], []>} : vector<8x16xbf16>, vector<16x8xbf16>, vector<8x8xf32> -> vector<8x8xf32>
    %95 = vector.extract_strided_slice %90 {offsets = [8, 0], sizes = [8, 16], strides = [1, 1]} : vector<32x16xf32> to vector<8x16xf32>
    %96 = arith.truncf %95 : vector<8x16xf32> to vector<8x16xbf16>
    %97 = vector.extract_strided_slice %77 {offsets = [0, 8], sizes = [16, 8], strides = [1, 1]} : vector<16x32xbf16> to vector<16x8xbf16>
    %cst_39 = arith.constant dense<0.000000e+00> : vector<8x8xf32>
    %98 = tpu.matmul %96, %97, %cst_39 {dimension_numbers = #tpu.dot_dimension_numbers<[1], [0], [0], [1], [0, 0, 1, 1], [], []>} : vector<8x16xbf16>, vector<16x8xbf16>, vector<8x8xf32> -> vector<8x8xf32>
    %99 = vector.extract_strided_slice %90 {offsets = [16, 0], sizes = [8, 16], strides = [1, 1]} : vector<32x16xf32> to vector<8x16xf32>
    %100 = arith.truncf %99 : vector<8x16xf32> to vector<8x16xbf16>
    %101 = vector.extract_strided_slice %77 {offsets = [0, 16], sizes = [16, 8], strides = [1, 1]} : vector<16x32xbf16> to vector<16x8xbf16>
    %cst_40 = arith.constant dense<0.000000e+00> : vector<8x8xf32>
    %102 = tpu.matmul %100, %101, %cst_40 {dimension_numbers = #tpu.dot_dimension_numbers<[1], [0], [0], [1], [0, 0, 1, 1], [], []>} : vector<8x16xbf16>, vector<16x8xbf16>, vector<8x8xf32> -> vector<8x8xf32>
    %103 = vector.extract_strided_slice %90 {offsets = [24, 0], sizes = [8, 16], strides = [1, 1]} : vector<32x16xf32> to vector<8x16xf32>
    %104 = arith.truncf %103 : vector<8x16xf32> to vector<8x16xbf16>
    %105 = vector.extract_strided_slice %77 {offsets = [0, 24], sizes = [16, 8], strides = [1, 1]} : vector<16x32xbf16> to vector<16x8xbf16>
    %cst_41 = arith.constant dense<0.000000e+00> : vector<8x8xf32>
    %106 = tpu.matmul %104, %105, %cst_41 {dimension_numbers = #tpu.dot_dimension_numbers<[1], [0], [0], [1], [0, 0, 1, 1], [], []>} : vector<8x16xbf16>, vector<16x8xbf16>, vector<8x8xf32> -> vector<8x8xf32>
    %107 = tpu.concatenate %94, %98, %102, %106 in 1 : vector<8x8xf32>, vector<8x8xf32>, vector<8x8xf32>, vector<8x8xf32> -> vector<8x32xf32>
    %c8_i32_42 = arith.constant 8 : i32
    %108 = arith.muli %c1_i32, %c8_i32_42 : i32
    %109 = tpu.assume_multiple %108, 8 : i32
    %110 = arith.index_cast %109 : i32 to index
    %c0_43 = arith.constant 0 : index
    %111 = vector.load %arg14[%110, %c0_43] : memref<16x32xf32, #tpu.memory_space<vmem>>, vector<8x32xf32>
    tpu.vector_store %arg14[%110, %c0_43], %107 {strides = array<i32>} : memref<16x32xf32, #tpu.memory_space<vmem>>, vector<8x32xf32>,
    %c2_i32 = arith.constant 2 : i32
    %c0_44 = arith.constant 0 : index
    %c0_45 = arith.constant 0 : index
    %112 = vector.load %arg14[%c0_44, %c0_45] : memref<16x32xf32, #tpu.memory_space<vmem>>, vector<16x32xf32>
    %113 = arith.truncf %112 : vector<16x32xf32> to vector<16x32xbf16>
    %c0_46 = arith.constant 0 : index
    %c0_47 = arith.constant 0 : index
    %114 = vector.load %arg6[%c0_46, %c0_47] : memref<32x32xbf16, #tpu.memory_space<vmem>>, vector<32x32xbf16>
    %cst_48 = arith.constant dense<0.000000e+00> : vector<16x32xf32>
    %115 = tpu.matmul %113, %114, %cst_48 {dimension_numbers = #tpu.dot_dimension_numbers<[1], [0], [0], [1], [0, 0, 1, 1], [], []>} : vector<16x32xbf16>, vector<32x32xbf16>, vector<16x32xf32> -> vector<16x32xf32>
    %116 = vector.broadcast %4 : vector<1x32xf32> to vector<16x32xf32>
    %117 = arith.addf %115, %116 : vector<16x32xf32>
    %118 = arith.truncf %117 : vector<16x32xf32> to vector<16x32xbf16>
    %c0_49 = arith.constant 0 : index
    %c0_50 = arith.constant 0 : index
    %119 = vector.load %arg7[%c0_49, %c0_50] : memref<32x128xbf16, #tpu.memory_space<vmem>>, vector<32x128xbf16>
    %cst_51 = arith.constant dense<0.000000e+00> : vector<16x128xf32>
    %120 = tpu.matmul %118, %119, %cst_51 {dimension_numbers = #tpu.dot_dimension_numbers<[1], [0], [0], [1], [0, 0, 1, 1], [], []>} : vector<16x32xbf16>, vector<32x128xbf16>, vector<16x128xf32> -> vector<16x128xf32>
    %121 = vector.broadcast %6 : vector<1x128xf32> to vector<16x128xf32>
    %122 = arith.addf %120, %121 : vector<16x128xf32>
    %123 = math.tanh %122 : vector<16x128xf32>
    %124 = arith.truncf %123 : vector<16x128xf32> to vector<16x128xbf16>
    %c0_52 = arith.constant 0 : index
    %c0_53 = arith.constant 0 : index
    %125 = vector.load %arg8[%c0_52, %c0_53] : memref<128x32xbf16, #tpu.memory_space<vmem>>, vector<128x32xbf16>
    %cst_54 = arith.constant dense<0.000000e+00> : vector<16x32xf32>
    %126 = tpu.matmul %124, %125, %cst_54 {dimension_numbers = #tpu.dot_dimension_numbers<[1], [0], [0], [1], [0, 0, 1, 1], [], []>} : vector<16x128xbf16>, vector<128x32xbf16>, vector<16x32xf32> -> vector<16x32xf32>
    %127 = vector.broadcast %5 : vector<1x32xf32> to vector<16x32xf32>
    %128 = arith.addf %126, %127 : vector<16x32xf32>
    %c0_55 = arith.constant 0 : index
    %c0_56 = arith.constant 0 : index
    %129 = vector.load %arg11[%c0_55, %c0_56] : memref<16x32xf32, #tpu.memory_space<vmem>>, vector<16x32xf32>
    tpu.vector_store %arg11[%c0_55, %c0_56], %128 {strides = array<i32>} : memref<16x32xf32, #tpu.memory_space<vmem>>, vector<16x32xf32>,
    return
  }
  func.func @transform_0(%arg0: i32) -> (i32, i32) {
    %c0_i32 = arith.constant 0 : i32
    %c0_i32_0 = arith.constant 0 : i32
    return %arg0, %c0_i32 : i32, i32
  }
  func.func @transform_1(%arg0: i32) -> (i32, i32) {
    %c0_i32 = arith.constant 0 : i32
    %c0_i32_0 = arith.constant 0 : i32
    %c0_i32_1 = arith.constant 0 : i32
    return %c0_i32, %c0_i32_0 : i32, i32
  }
  func.func @transform_2(%arg0: i32) -> (i32, i32) {
    %c0_i32 = arith.constant 0 : i32
    %c0_i32_0 = arith.constant 0 : i32
    %c0_i32_1 = arith.constant 0 : i32
    return %c0_i32, %c0_i32_0 : i32, i32
  }
  func.func @transform_3(%arg0: i32) -> (i32, i32) {
    %c0_i32 = arith.constant 0 : i32
    %c0_i32_0 = arith.constant 0 : i32
    %c0_i32_1 = arith.constant 0 : i32
    return %c0_i32, %c0_i32_0 : i32, i32
  }
  func.func @transform_4(%arg0: i32) -> (i32, i32) {
    %c0_i32 = arith.constant 0 : i32
    %c0_i32_0 = arith.constant 0 : i32
    %c0_i32_1 = arith.constant 0 : i32
    return %c0_i32, %c0_i32_0 : i32, i32
  }
  func.func @transform_5(%arg0: i32) -> (i32, i32) {
    %c0_i32 = arith.constant 0 : i32
    %c0_i32_0 = arith.constant 0 : i32
    %c0_i32_1 = arith.constant 0 : i32
    return %c0_i32, %c0_i32_0 : i32, i32
  }
  func.func @transform_6(%arg0: i32) -> (i32, i32) {
    %c0_i32 = arith.constant 0 : i32
    %c0_i32_0 = arith.constant 0 : i32
    %c0_i32_1 = arith.constant 0 : i32
    return %c0_i32, %c0_i32_0 : i32, i32
  }
  func.func @transform_7(%arg0: i32) -> (i32, i32) {
    %c0_i32 = arith.constant 0 : i32
    %c0_i32_0 = arith.constant 0 : i32
    %c0_i32_1 = arith.constant 0 : i32
    return %c0_i32, %c0_i32_0 : i32, i32
  }
  func.func @transform_8(%arg0: i32) -> (i32, i32) {
    %c0_i32 = arith.constant 0 : i32
    %c0_i32_0 = arith.constant 0 : i32
    %c0_i32_1 = arith.constant 0 : i32
    return %c0_i32, %c0_i32_0 : i32, i32
  }
  func.func @transform_9(%arg0: i32) -> (i32, i32) {
    %c0_i32 = arith.constant 0 : i32
    %c0_i32_0 = arith.constant 0 : i32
    %c0_i32_1 = arith.constant 0 : i32
    return %c0_i32, %c0_i32_0 : i32, i32
  }
  func.func @transform_10(%arg0: i32) -> (i32, i32) {
    %c0_i32 = arith.constant 0 : i32
    %c0_i32_0 = arith.constant 0 : i32
    return %arg0, %c0_i32 : i32, i32
  }
}

</mosaic_0001>

<llo_original>
// kernel: tpu_custom_call.1
$region0: #{tpu_custom_call.1}
  #allocation0 [shape = 'u32[]', space=smem, size = 0x4, offset = 0x4, fixed_abs, tag = 'smem constant byte address 0x4 - core index']
  #allocation1 [shape = 'u32[144,128]{1,0:T(1,128)}', space=vmem, size = 0x12000, scoped, tag = 'internal scratch']
  #allocation2 [shape = 'bf16[32,32]{1,0:T(16,128)(2,1)}', space=vmem, size = 0x2000, scoped, tag = 'scratch operand']
  #allocation3 [shape = 'bf16[32,32]{1,0:T(16,128)(2,1)}', space=vmem, size = 0x2000, scoped, tag = 'scratch operand']
  #allocation4 [shape = 'f32[16,32]{1,0:T(8,128)}', space=vmem, size = 0x2000, scoped, tag = 'scratch operand']
  %s0 = inlined_call_operand.hbm [shape: bf16[64,16], index: 0, kind: input, shape index: {}]
  %s1 = inlined_call_operand.hbm [shape: bf16[32,32], index: 1, kind: input, shape index: {}]
  %s2 = inlined_call_operand.hbm [shape: bf16[16,32], index: 2, kind: input, shape index: {}]
  %s3 = inlined_call_operand.hbm [shape: bf16[32,32], index: 3, kind: input, shape index: {}]
  %s4 = inlined_call_operand.hbm [shape: bf16[32,32], index: 4, kind: input, shape index: {}]
  %s5 = inlined_call_operand.hbm [shape: bf16[32,32], index: 5, kind: input, shape index: {}]
  %s6 = inlined_call_operand.hbm [shape: bf16[32,128], index: 6, kind: input, shape index: {}]
  %s7 = inlined_call_operand.hbm [shape: bf16[128,32], index: 7, kind: input, shape index: {}]
  %s8 = inlined_call_operand.hbm [shape: f32[8,32], index: 8, kind: input, shape index: {}]
  %s9 = inlined_call_operand.hbm [shape: f32[1,128], index: 9, kind: input, shape index: {}]
  %s10 = inlined_call_operand.hbm [shape: f32[32,32], index: 10, kind: output, shape index: {}]
  %s11 = sld [smem:[#allocation0]]
  $region113: #{tpu_custom_call.1} parent=0
    _
  %s13 = ssub.s32 1, %s11
  %s14 = scalar_select 0, %s13, %s11
  $region1: #{tpu_custom_call.1} parent=0
    #allocation5 [shape = 'u8[16384]{0}', space=vmem, size = 0x4000, scoped, tag = 'input window, operand 0']
    #allocation6 [shape = 's32[2]{0}', space=sflag, size = 0x8, scoped, tag = 'scoped memory for tpu_custom_call.1']
    #allocation7 [shape = 's32[2]{0}', space=sflag, size = 0x8, scoped, tag = 'scoped memory for tpu_custom_call.1']
    #allocation8 [shape = 'u8[8192]{0}', space=vmem, size = 0x2000, scoped, tag = 'input window, operand 1, single buffered']
    #allocation9 [shape = 's32[1]{0}', space=sflag, size = 0x4, scoped, tag = 'scoped memory for tpu_custom_call.1']
    #allocation10 [shape = 'u8[4096]{0}', space=vmem, size = 0x1000, scoped, tag = 'input window, operand 2, single buffered']
    #allocation11 [shape = 'u8[8192]{0}', space=vmem, size = 0x2000, scoped, tag = 'input window, operand 3, single buffered']
    #allocation12 [shape = 's32[1]{0}', space=sflag, size = 0x4, scoped, tag = 'scoped memory for tpu_custom_call.1']
    #allocation13 [shape = 'u8[8192]{0}', space=vmem, size = 0x2000, scoped, tag = 'input window, operand 4, single buffered']
    #allocation14 [shape = 'u8[8192]{0}', space=vmem, size = 0x2000, scoped, tag = 'input window, operand 5, single buffered']
    #allocation15 [shape = 's32[1]{0}', space=sflag, size = 0x4, scoped, tag = 'scoped memory for tpu_custom_call.1']
    #allocation16 [shape = 'u8[8192]{0}', space=vmem, size = 0x2000, scoped, tag = 'input window, operand 6, single buffered']
    #allocation17 [shape = 'u8[32768]{0}', space=vmem, size = 0x8000, scoped, tag = 'input window, operand 7, single buffered']
    #allocation18 [shape = 's32[1]{0}', space=sflag, size = 0x4, scoped, tag = 'scoped memory for tpu_custom_call.1']
    #allocation19 [shape = 'u8[4096]{0}', space=vmem, size = 0x1000, scoped, tag = 'input window, operand 8, single buffered']
    #allocation20 [shape = 'u8[512]{0}', space=vmem, size = 0x400, scoped, tag = 'input window, operand 9, single buffered']
    #allocation21 [shape = 's32[1]{0}', space=sflag, size = 0x4, scoped, tag = 'scoped memory for tpu_custom_call.1']
    #allocation22 [shape = 'u8[16384]{0}', space=vmem, size = 0x4000, scoped, tag = 'output window, operand 0']
    %15 = vsyncpa [#allocation6], 0
    %s16 = scalar_lea.sflag [#allocation6], 1
    %17 = vsyncpa %s16, 0
    %18 = vsyncpa [#allocation9], 0
    %19 = vsyncpa [#allocation12], 0
    %20 = vsyncpa [#allocation15], 0
    %21 = vsyncpa [#allocation18], 0
    %22 = vsyncpa [#allocation21], 0
    %23 = vsyncpa [#allocation7], 0
    %s24 = scalar_lea.sflag [#allocation7], 1
    %25 = vsyncpa %s24, 0
    loop: start=0, step=1, limit=4
    $region2: #{tpu_custom_call.1} parent=1 // loop_pre_header
      _
    $region3: #{tpu_custom_call.1} parent=1 // loop_header
      %s27 = sphi 0, %s31
      %p28 = scmp.ge.s32.totalorder %s27, 4
      %s37 = sphi 0, %s39
      %s40 = sphi 0, %s37
      %s41 = sphi 0, %s40
      %s57 = sphi 0, %s41
      %s61 = sphi 0, %s61
      %s63 = sphi 0, %s61
      %s64 = sphi 0, %s63
      %s78 = sphi 0, %s64
      %s82 = sphi 0, %s82
      %s84 = sphi 0, %s82
      %s85 = sphi 0, %s84
      %s99 = sphi 0, %s85
      %s103 = sphi 0, %s103
      %s105 = sphi 0, %s103
      %s106 = sphi 0, %s105
      %s120 = sphi 0, %s106
      %s124 = sphi 0, %s124
      %s126 = sphi 0, %s124
      %s127 = sphi 0, %s126
      %s141 = sphi 0, %s127
      %s145 = sphi 0, %s145
      %s147 = sphi 0, %s145
      %s148 = sphi 0, %s147
      %s162 = sphi 0, %s148
      %s166 = sphi 0, %s166
      %s168 = sphi 0, %s166
      %s169 = sphi 0, %s168
      %s183 = sphi 0, %s169
      %s187 = sphi 0, %s187
      %s189 = sphi 0, %s187
      %s190 = sphi 0, %s189
      %s204 = sphi 0, %s190
      %s208 = sphi 0, %s208
      %s210 = sphi 0, %s208
      %s211 = sphi 0, %s210
      %s225 = sphi 0, %s211
      %s229 = sphi 0, %s229
      %s231 = sphi 0, %s229
      %s232 = sphi 0, %s231
      %s246 = sphi 0, %s232
      %s252 = sphi 0, %s254
      %s255 = sphi 0, %s252
      %s256 = sphi 0, %s255
      %s272 = sphi 0, %s256
    $region4: #{tpu_custom_call.1} parent=1 // loop_header_branch
      %30 = sbr.rel (%p28) target = $region8
    $region5: #{tpu_custom_call.1} parent=1 // loop_body
      %s32 = ssub.s32 %s27, 1
      %s33 = ssub.s32 %s27, 2
      %s34 = sadd.s32 %s27, 1
      %s35 = ssub.s32 %s27, %s34
      %p36 = scmp.eq.s32.totalorder %s35, 0
      %s38 = sadd.s32 %s37, 1
      %s39 = scalar_select %p36, %s37, %s38
      %p42 = pneg %p36
      %p43 = scmp.eq.s32.totalorder %s27, 1
      %p44 = por %p42, %p43
      %p45 = scmp.ne.s32.totalorder %s37, %s40
      %p46 = scmp.eq.s32.totalorder %s27, 0
      %p47 = por %p45, %p46
      %p48 = scmp.ne.s32.totalorder %s37, %s40
      %p49 = scmp.eq.s32.totalorder %s32, 1
      %p50 = por %p48, %p49
      %p51 = scmp.ne.s32.totalorder %s40, %s41
      %p52 = scmp.eq.s32.totalorder %s32, 0
      %p53 = por %p51, %p52
      %p54 = scmp.ne.s32.totalorder %s40, %s41
      %p55 = scmp.eq.s32.totalorder %s33, 1
      %p56 = por %p54, %p55
      %p58 = scmp.ne.s32.totalorder %s41, %s57
      %p59 = scmp.eq.s32.totalorder %s33, 0
      %p60 = por %p58, %p59
      %s62 = sadd.s32 %s61, 1
      %p65 = scmp.eq.s32.totalorder %s27, 1
      %p66 = scmp.ne.s32.totalorder %s61, %s63
      %p67 = scmp.eq.s32.totalorder %s27, 0
      %p68 = por %p66, %p67
      %p69 = scmp.ne.s32.totalorder %s61, %s63
      %p70 = scmp.eq.s32.totalorder %s32, 1
      %p71 = por %p69, %p70
      %p72 = scmp.ne.s32.totalorder %s63, %s64
      %p73 = scmp.eq.s32.totalorder %s32, 0
      %p74 = por %p72, %p73
      %p75 = scmp.ne.s32.totalorder %s63, %s64
      %p76 = scmp.eq.s32.totalorder %s33, 1
      %p77 = por %p75, %p76
      %p79 = scmp.ne.s32.totalorder %s64, %s78
      %p80 = scmp.eq.s32.totalorder %s33, 0
      %p81 = por %p79, %p80
      %s83 = sadd.s32 %s82, 1
      %p86 = scmp.eq.s32.totalorder %s27, 1
      %p87 = scmp.ne.s32.totalorder %s82, %s84
      %p88 = scmp.eq.s32.totalorder %s27, 0
      %p89 = por %p87, %p88
      %p90 = scmp.ne.s32.totalorder %s82, %s84
      %p91 = scmp.eq.s32.totalorder %s32, 1
      %p92 = por %p90, %p91
      %p93 = scmp.ne.s32.totalorder %s84, %s85
      %p94 = scmp.eq.s32.totalorder %s32, 0
      %p95 = por %p93, %p94
      %p96 = scmp.ne.s32.totalorder %s84, %s85
      %p97 = scmp.eq.s32.totalorder %s33, 1
      %p98 = por %p96, %p97
      %p100 = scmp.ne.s32.totalorder %s85, %s99
      %p101 = scmp.eq.s32.totalorder %s33, 0
      %p102 = por %p100, %p101
      %s104 = sadd.s32 %s103, 1
      %p107 = scmp.eq.s32.totalorder %s27, 1
      %p108 = scmp.ne.s32.totalorder %s103, %s105
      %p109 = scmp.eq.s32.totalorder %s27, 0
      %p110 = por %p108, %p109
      %p111 = scmp.ne.s32.totalorder %s103, %s105
      %p112 = scmp.eq.s32.totalorder %s32, 1
      %p113 = por %p111, %p112
      %p114 = scmp.ne.s32.totalorder %s105, %s106
      %p115 = scmp.eq.s32.totalorder %s32, 0
      %p116 = por %p114, %p115
      %p117 = scmp.ne.s32.totalorder %s105, %s106
      %p118 = scmp.eq.s32.totalorder %s33, 1
      %p119 = por %p117, %p118
      %p121 = scmp.ne.s32.totalorder %s106, %s120
      %p122 = scmp.eq.s32.totalorder %s33, 0
      %p123 = por %p121, %p122
      %s125 = sadd.s32 %s124, 1
      %p128 = scmp.eq.s32.totalorder %s27, 1
      %p129 = scmp.ne.s32.totalorder %s124, %s126
      %p130 = scmp.eq.s32.totalorder %s27, 0
      %p131 = por %p129, %p130
      %p132 = scmp.ne.s32.totalorder %s124, %s126
      %p133 = scmp.eq.s32.totalorder %s32, 1
      %p134 = por %p132, %p133
      %p135 = scmp.ne.s32.totalorder %s126, %s127
      %p136 = scmp.eq.s32.totalorder %s32, 0
      %p137 = por %p135, %p136
      %p138 = scmp.ne.s32.totalorder %s126, %s127
      %p139 = scmp.eq.s32.totalorder %s33, 1
      %p140 = por %p138, %p139
      %p142 = scmp.ne.s32.totalorder %s127, %s141
      %p143 = scmp.eq.s32.totalorder %s33, 0
      %p144 = por %p142, %p143
      %s146 = sadd.s32 %s145, 1
      %p149 = scmp.eq.s32.totalorder %s27, 1
      %p150 = scmp.ne.s32.totalorder %s145, %s147
      %p151 = scmp.eq.s32.totalorder %s27, 0
      %p152 = por %p150, %p151
      %p153 = scmp.ne.s32.totalorder %s145, %s147
      %p154 = scmp.eq.s32.totalorder %s32, 1
      %p155 = por %p153, %p154
      %p156 = scmp.ne.s32.totalorder %s147, %s148
      %p157 = scmp.eq.s32.totalorder %s32, 0
      %p158 = por %p156, %p157
      %p159 = scmp.ne.s32.totalorder %s147, %s148
      %p160 = scmp.eq.s32.totalorder %s33, 1
      %p161 = por %p159, %p160
      %p163 = scmp.ne.s32.totalorder %s148, %s162
      %p164 = scmp.eq.s32.totalorder %s33, 0
      %p165 = por %p163, %p164
      %s167 = sadd.s32 %s166, 1
      %p170 = scmp.eq.s32.totalorder %s27, 1
      %p171 = scmp.ne.s32.totalorder %s166, %s168
      %p172 = scmp.eq.s32.totalorder %s27, 0
      %p173 = por %p171, %p172
      %p174 = scmp.ne.s32.totalorder %s166, %s168
      %p175 = scmp.eq.s32.totalorder %s32, 1
      %p176 = por %p174, %p175
      %p177 = scmp.ne.s32.totalorder %s168, %s169
      %p178 = scmp.eq.s32.totalorder %s32, 0
      %p179 = por %p177, %p178
      %p180 = scmp.ne.s32.totalorder %s168, %s169
      %p181 = scmp.eq.s32.totalorder %s33, 1
      %p182 = por %p180, %p181
      %p184 = scmp.ne.s32.totalorder %s169, %s183
      %p185 = scmp.eq.s32.totalorder %s33, 0
      %p186 = por %p184, %p185
      %s188 = sadd.s32 %s187, 1
      %p191 = scmp.eq.s32.totalorder %s27, 1
      %p192 = scmp.ne.s32.totalorder %s187, %s189
      %p193 = scmp.eq.s32.totalorder %s27, 0
      %p194 = por %p192, %p193
      %p195 = scmp.ne.s32.totalorder %s187, %s189
      %p196 = scmp.eq.s32.totalorder %s32, 1
      %p197 = por %p195, %p196
      %p198 = scmp.ne.s32.totalorder %s189, %s190
      %p199 = scmp.eq.s32.totalorder %s32, 0
      %p200 = por %p198, %p199
      %p201 = scmp.ne.s32.totalorder %s189, %s190
      %p202 = scmp.eq.s32.totalorder %s33, 1
      %p203 = por %p201, %p202
      %p205 = scmp.ne.s32.totalorder %s190, %s204
      %p206 = scmp.eq.s32.totalorder %s33, 0
      %p207 = por %p205, %p206
      %s209 = sadd.s32 %s208, 1
      %p212 = scmp.eq.s32.totalorder %s27, 1
      %p213 = scmp.ne.s32.totalorder %s208, %s210
      %p214 = scmp.eq.s32.totalorder %s27, 0
      %p215 = por %p213, %p214
      %p216 = scmp.ne.s32.totalorder %s208, %s210
      %p217 = scmp.eq.s32.totalorder %s32, 1
      %p218 = por %p216, %p217
      %p219 = scmp.ne.s32.totalorder %s210, %s211
      %p220 = scmp.eq.s32.totalorder %s32, 0
      %p221 = por %p219, %p220
      %p222 = scmp.ne.s32.totalorder %s210, %s211
      %p223 = scmp.eq.s32.totalorder %s33, 1
      %p224 = por %p222, %p223
      %p226 = scmp.ne.s32.totalorder %s211, %s225
      %p227 = scmp.eq.s32.totalorder %s33, 0
      %p228 = por %p226, %p227
      %s230 = sadd.s32 %s229, 1
      %p233 = scmp.eq.s32.totalorder %s27, 1
      %p234 = scmp.ne.s32.totalorder %s229, %s231
      %p235 = scmp.eq.s32.totalorder %s27, 0
      %p236 = por %p234, %p235
      %p237 = scmp.ne.s32.totalorder %s229, %s231
      %p238 = scmp.eq.s32.totalorder %s32, 1
      %p239 = por %p237, %p238
      %p240 = scmp.ne.s32.totalorder %s231, %s232
      %p241 = scmp.eq.s32.totalorder %s32, 0
      %p242 = por %p240, %p241
      %p243 = scmp.ne.s32.totalorder %s231, %s232
      %p244 = scmp.eq.s32.totalorder %s33, 1
      %p245 = por %p243, %p244
      %p247 = scmp.ne.s32.totalorder %s232, %s246
      %p248 = scmp.eq.s32.totalorder %s33, 0
      %p249 = por %p247, %p248
      %s250 = ssub.s32 %s27, %s34
      %p251 = scmp.eq.s32.totalorder %s250, 0
      %s253 = sadd.s32 %s252, 1
      %s254 = scalar_select %p251, %s252, %s253
      %p257 = pneg %p251
      %p258 = scmp.eq.s32.totalorder %s27, 1
      %p259 = por %p257, %p258
      %p260 = scmp.ne.s32.totalorder %s252, %s255
      %p261 = scmp.eq.s32.totalorder %s27, 0
      %p262 = por %p260, %p261
      %p263 = scmp.ne.s32.totalorder %s252, %s255
      %p264 = scmp.eq.s32.totalorder %s32, 1
      %p265 = por %p263, %p264
      %p266 = scmp.ne.s32.totalorder %s255, %s256
      %p267 = scmp.eq.s32.totalorder %s32, 0
      %p268 = por %p266, %p267
      %p269 = scmp.ne.s32.totalorder %s255, %s256
      %p270 = scmp.eq.s32.totalorder %s33, 1
      %p271 = por %p269, %p270
      %p273 = scmp.ne.s32.totalorder %s256, %s272
      %p274 = scmp.eq.s32.totalorder %s33, 0
      %p275 = por %p273, %p274
      %p276 = scmp.le.s32.totalorder 1, %s27
      %p277 = scmp.lt.s32.totalorder %s27, 3
      %p278 = pnand %p276, %p277
      %p279 = pneg %p278
      // Predicated region
      $region9: #{tpu_custom_call.1} parent=5 // pred_check
        _
      $region10: #{tpu_custom_call.1} parent=5 // pred_check_branch
        %281 = sbr.rel (%p278) target = $region12
      $region11: #{tpu_custom_call.1} parent=5 // pred_region
        %s282 = ssub.s32 %s27, 1
        // Predicated region
        $region13: #{tpu_custom_call.1} parent=11 // pred_check
          %p283 = pneg %p74
        $region14: #{tpu_custom_call.1} parent=11 // pred_check_branch
          %285 = sbr.rel (%p283) target = $region16
        $region15: #{tpu_custom_call.1} parent=11 // pred_region
          %s287 = ssub.s32 256, 256
          %288 = vsyncadd [#allocation9], %s287
          %s289 = sshll.u32 [#allocation8], 4
          %s290 = int_to_ptr.vmem [resolvable:$true] %s289
          %295 = dma.hbm_to_vmem [thread:$0]  %s1, 256, %s290, [#allocation9], 64, 64, 4
        $region16: #{tpu_custom_call.1} parent=11 // pred_fallthru
          _
        // Predicated region
        $region17: #{tpu_custom_call.1} parent=11 // pred_check
          %p296 = pneg %p95
        $region18: #{tpu_custom_call.1} parent=11 // pred_check_branch
          %298 = sbr.rel (%p296) target = $region20
        $region19: #{tpu_custom_call.1} parent=11 // pred_region
          %s300 = ssub.s32 128, 128
          %301 = vsyncadd [#allocation9], %s300
          %s302 = sshll.u32 [#allocation10], 4
          %s303 = int_to_ptr.vmem [resolvable:$true] %s302
          %308 = dma.hbm_to_vmem [thread:$0]  %s2, 128, %s303, [#allocation9], 64, 64, 4
        $region20: #{tpu_custom_call.1} parent=11 // pred_fallthru
          _
        // Predicated region
        $region21: #{tpu_custom_call.1} parent=11 // pred_check
          %p309 = pneg %p116
        $region22: #{tpu_custom_call.1} parent=11 // pred_check_branch
          %311 = sbr.rel (%p309) target = $region24
        $region23: #{tpu_custom_call.1} parent=11 // pred_region
          %s313 = ssub.s32 256, 256
          %314 = vsyncadd [#allocation12], %s313
          %s315 = sshll.u32 [#allocation11], 4
          %s316 = int_to_ptr.vmem [resolvable:$true] %s315
          %321 = dma.hbm_to_vmem [thread:$0]  %s3, 256, %s316, [#allocation12], 64, 64, 4
        $region24: #{tpu_custom_call.1} parent=11 // pred_fallthru
          _
        // Predicated region
        $region25: #{tpu_custom_call.1} parent=11 // pred_check
          %p322 = pneg %p137
        $region26: #{tpu_custom_call.1} parent=11 // pred_check_branch
          %324 = sbr.rel (%p322) target = $region28
        $region27: #{tpu_custom_call.1} parent=11 // pred_region
          %s326 = ssub.s32 256, 256
          %327 = vsyncadd [#allocation12], %s326
          %s328 = sshll.u32 [#allocation13], 4
          %s329 = int_to_ptr.vmem [resolvable:$true] %s328
          %334 = dma.hbm_to_vmem [thread:$0]  %s4, 256, %s329, [#allocation12], 64, 64, 4
        $region28: #{tpu_custom_call.1} parent=11 // pred_fallthru
          _
        // Predicated region
        $region29: #{tpu_custom_call.1} parent=11 // pred_check
          %p335 = pneg %p158
        $region30: #{tpu_custom_call.1} parent=11 // pred_check_branch
          %337 = sbr.rel (%p335) target = $region32
        $region31: #{tpu_custom_call.1} parent=11 // pred_region
          %s339 = ssub.s32 256, 256
          %340 = vsyncadd [#allocation15], %s339
          %s341 = sshll.u32 [#allocation14], 4
          %s342 = int_to_ptr.vmem [resolvable:$true] %s341
          %347 = dma.hbm_to_vmem [thread:$0]  %s5, 256, %s342, [#allocation15], 64, 64, 4
        $region32: #{tpu_custom_call.1} parent=11 // pred_fallthru
          _
        // Predicated region
        $region33: #{tpu_custom_call.1} parent=11 // pred_check
          %p348 = pneg %p179
        $region34: #{tpu_custom_call.1} parent=11 // pred_check_branch
          %350 = sbr.rel (%p348) target = $region36
        $region35: #{tpu_custom_call.1} parent=11 // pred_region
          %s352 = ssub.s32 256, 256
          %353 = vsyncadd [#allocation15], %s352
          %s354 = sshll.u32 [#allocation16], 4
          %s355 = int_to_ptr.vmem [resolvable:$true] %s354
          %360 = dma.hbm_to_vmem [thread:$0]  %s6, 256, %s355, [#allocation15], 64, 64, 4
        $region36: #{tpu_custom_call.1} parent=11 // pred_fallthru
          _
        // Predicated region
        $region37: #{tpu_custom_call.1} parent=11 // pred_check
          %p361 = pneg %p200
        $region38: #{tpu_custom_call.1} parent=11 // pred_check_branch
          %363 = sbr.rel (%p361) target = $region40
        $region39: #{tpu_custom_call.1} parent=11 // pred_region
          %s365 = ssub.s32 1024, 1024
          %366 = vsyncadd [#allocation18], %s365
          %s367 = sshll.u32 [#allocation17], 4
          %s368 = int_to_ptr.vmem [resolvable:$true] %s367
          %373 = dma.hbm_to_vmem [thread:$0]  %s7, 1024, %s368, [#allocation18], 64, 64, 4
        $region40: #{tpu_custom_call.1} parent=11 // pred_fallthru
          _
        // Predicated region
        $region41: #{tpu_custom_call.1} parent=11 // pred_check
          %p374 = pneg %p221
        $region42: #{tpu_custom_call.1} parent=11 // pred_check_branch
          %376 = sbr.rel (%p374) target = $region44
        $region43: #{tpu_custom_call.1} parent=11 // pred_region
          %s378 = ssub.s32 128, 128
          %379 = vsyncadd [#allocation18], %s378
          %s381 = sshll.u32 [#allocation19], 4
          %s382 = int_to_ptr.vmem [resolvable:$true] %s381
          %384 = dma.hbm_to_vmem [thread:$0]  %s8, 128, %s382, [#allocation18]
        $region44: #{tpu_custom_call.1} parent=11 // pred_fallthru
          _
        // Predicated region
        $region45: #{tpu_custom_call.1} parent=11 // pred_check
          %p385 = pneg %p242
        $region46: #{tpu_custom_call.1} parent=11 // pred_check_branch
          %387 = sbr.rel (%p385) target = $region48
        $region47: #{tpu_custom_call.1} parent=11 // pred_region
          %s389 = ssub.s32 16, 16
          %390 = vsyncadd [#allocation21], %s389
          %s392 = sshll.u32 [#allocation20], 4
          %s393 = int_to_ptr.vmem [resolvable:$true] %s392
          %395 = dma.hbm_to_vmem [thread:$0]  %s9, 16, %s393, [#allocation21]
        $region48: #{tpu_custom_call.1} parent=11 // pred_fallthru
          _
      $region12: #{tpu_custom_call.1} parent=5 // pred_fallthru
        _
      %p396 = scmp.lt.s32.totalorder %s27, 2
      // Predicated region
      $region49: #{tpu_custom_call.1} parent=5 // pred_check
        %p397 = pneg %p396
      $region50: #{tpu_custom_call.1} parent=5 // pred_check_branch
        %399 = sbr.rel (%p397) target = $region52
      $region51: #{tpu_custom_call.1} parent=5 // pred_region
        // Predicated region
        $region53: #{tpu_custom_call.1} parent=51 // pred_check
          %p400 = pneg %p47
        $region54: #{tpu_custom_call.1} parent=51 // pred_check_branch
          %402 = sbr.rel (%p400) target = $region56
        $region55: #{tpu_custom_call.1} parent=51 // pred_region
          %s403 = sand.u32 %s37, 1
          %s404 = scalar_lea.sflag [#allocation6], %s403
          %s405 = sand.u32 %s37, 1
          %s406 = smul.addr %s405, 16
          %s407 = scalar_lea.vmem [#allocation5], %s406
          %s408 = smul.u32 4, %s27
          %s410 = ssub.s32 256, 256
          %411 = vsyncadd %s404, %s410
          %s412 = smul.addr %s408, 64
          %s413 = scalar_lea.hbm %s0, %s412
          %s414 = sshll.u32 %s407, 4
          %s415 = int_to_ptr.vmem [resolvable:$true] %s414
          %420 = dma.hbm_to_vmem [thread:$0]  %s413, 256, %s415, %s404, 64, 64, 4
        $region56: #{tpu_custom_call.1} parent=51 // pred_fallthru
          _
      $region52: #{tpu_custom_call.1} parent=5 // pred_fallthru
        _
      %p421 = scmp.le.s32.totalorder 1, %s27
      %p422 = scmp.lt.s32.totalorder %s27, 3
      %p423 = pnand %p421, %p422
      %p424 = pneg %p423
      // Predicated region
      $region57: #{tpu_custom_call.1} parent=5 // pred_check
        _
      $region58: #{tpu_custom_call.1} parent=5 // pred_check_branch
        %426 = sbr.rel (%p423) target = $region60
      $region59: #{tpu_custom_call.1} parent=5 // pred_region
        %s427 = ssub.s32 %s27, 1
        %s428 = sand.u32 %s40, 1
        %s429 = scalar_lea.sflag [#allocation6], %s428
        %s430 = sand.u32 %s40, 1
        %s431 = smul.addr %s430, 16
        %s432 = scalar_lea.vmem [#allocation5], %s431
        // Predicated region
        $region61: #{tpu_custom_call.1} parent=59 // pred_check
          %p433 = pneg %p53
        $region62: #{tpu_custom_call.1} parent=59 // pred_check_branch
          %435 = sbr.rel (%p433) target = $region64
        $region63: #{tpu_custom_call.1} parent=59 // pred_region
          %436 = dma.done %s429, 256
        $region64: #{tpu_custom_call.1} parent=59 // pred_fallthru
          _
        // Predicated region
        $region65: #{tpu_custom_call.1} parent=59 // pred_check
          %p437 = pneg %p74
        $region66: #{tpu_custom_call.1} parent=59 // pred_check_branch
          %439 = sbr.rel (%p437) target = $region68
        $region67: #{tpu_custom_call.1} parent=59 // pred_region
          %440 = dma.done [#allocation9], 256
        $region68: #{tpu_custom_call.1} parent=59 // pred_fallthru
          _
        // Predicated region
        $region69: #{tpu_custom_call.1} parent=59 // pred_check
          %p441 = pneg %p95
        $region70: #{tpu_custom_call.1} parent=59 // pred_check_branch
          %443 = sbr.rel (%p441) target = $region72
        $region71: #{tpu_custom_call.1} parent=59 // pred_region
          %444 = dma.done [#allocation9], 128
        $region72: #{tpu_custom_call.1} parent=59 // pred_fallthru
          _
        // Predicated region
        $region73: #{tpu_custom_call.1} parent=59 // pred_check
          %p445 = pneg %p116
        $region74: #{tpu_custom_call.1} parent=59 // pred_check_branch
          %447 = sbr.rel (%p445) target = $region76
        $region75: #{tpu_custom_call.1} parent=59 // pred_region
          %448 = dma.done [#allocation12], 256
        $region76: #{tpu_custom_call.1} parent=59 // pred_fallthru
          _
        // Predicated region
        $region77: #{tpu_custom_call.1} parent=59 // pred_check
          %p449 = pneg %p137
        $region78: #{tpu_custom_call.1} parent=59 // pred_check_branch
          %451 = sbr.rel (%p449) target = $region80
        $region79: #{tpu_custom_call.1} parent=59 // pred_region
          %452 = dma.done [#allocation12], 256
        $region80: #{tpu_custom_call.1} parent=59 // pred_fallthru
          _
        // Predicated region
        $region81: #{tpu_custom_call.1} parent=59 // pred_check
          %p453 = pneg %p158
        $region82: #{tpu_custom_call.1} parent=59 // pred_check_branch
          %455 = sbr.rel (%p453) target = $region84
        $region83: #{tpu_custom_call.1} parent=59 // pred_region
          %456 = dma.done [#allocation15], 256
        $region84: #{tpu_custom_call.1} parent=59 // pred_fallthru
          _
        // Predicated region
        $region85: #{tpu_custom_call.1} parent=59 // pred_check
          %p457 = pneg %p179
        $region86: #{tpu_custom_call.1} parent=59 // pred_check_branch
          %459 = sbr.rel (%p457) target = $region88
        $region87: #{tpu_custom_call.1} parent=59 // pred_region
          %460 = dma.done [#allocation15], 256
        $region88: #{tpu_custom_call.1} parent=59 // pred_fallthru
          _
        // Predicated region
        $region89: #{tpu_custom_call.1} parent=59 // pred_check
          %p461 = pneg %p200
        $region90: #{tpu_custom_call.1} parent=59 // pred_check_branch
          %463 = sbr.rel (%p461) target = $region92
        $region91: #{tpu_custom_call.1} parent=59 // pred_region
          %464 = dma.done [#allocation18], 1024
        $region92: #{tpu_custom_call.1} parent=59 // pred_fallthru
          _
        // Predicated region
        $region93: #{tpu_custom_call.1} parent=59 // pred_check
          %p465 = pneg %p221
        $region94: #{tpu_custom_call.1} parent=59 // pred_check_branch
          %467 = sbr.rel (%p465) target = $region96
        $region95: #{tpu_custom_call.1} parent=59 // pred_region
          %468 = dma.done [#allocation18], 128
        $region96: #{tpu_custom_call.1} parent=59 // pred_fallthru
          _
        // Predicated region
        $region97: #{tpu_custom_call.1} parent=59 // pred_check
          %p469 = pneg %p242
        $region98: #{tpu_custom_call.1} parent=59 // pred_check_branch
          %471 = sbr.rel (%p469) target = $region100
        $region99: #{tpu_custom_call.1} parent=59 // pred_region
          %472 = dma.done [#allocation21], 16
        $region100: #{tpu_custom_call.1} parent=59 // pred_fallthru
          _
        %s473 = sand.u32 %s40, 1
        %s474 = scalar_lea.sflag [#allocation6], %s473
        %s475 = sand.u32 %s40, 1
        %s476 = smul.addr %s475, 16
        %s477 = scalar_lea.vmem [#allocation5], %s476
        %p478 = pneg %p53
        %p479 = pneg %p50
        %p480 = pneg %p74
        %p481 = pneg %p71
        %p482 = pneg %p95
        %p483 = pneg %p92
        %p484 = pneg %p116
        %p485 = pneg %p113
        %p486 = pneg %p137
        %p487 = pneg %p134
        %p488 = pneg %p158
        %p489 = pneg %p155
        %p490 = pneg %p179
        %p491 = pneg %p176
        %p492 = pneg %p200
        %p493 = pneg %p197
        %p494 = pneg %p221
        %p495 = pneg %p218
        %p496 = pneg %p242
        %p497 = pneg %p239
        %p498 = pneg %p268
        %p499 = pneg %p265
        %s500 = sand.u32 %s255, 1
        %s501 = scalar_lea.sflag [#allocation7], %s500
        %s502 = sand.u32 %s255, 1
        %s503 = smul.addr %s502, 16
        %s504 = scalar_lea.vmem [#allocation22], %s503
        %s505 = smul.u32 4, %s32
        %s506 = smul.u32 2, %s32
        %v508 = vld [vmem:[#allocation19] sm:$0xff]
        %v509 = vld [vmem:[#allocation20] sm:$0x1]
        %v510 = vld [vmem:[%s432] sm:$0xf]
        %v511 = vld [vmem:[%s432 + $0x4] sm:$0xf]
        %v512 = vld [vmem:[%s432 + $0x8] sm:$0xf]
        %v513 = vld [vmem:[%s432 + $0xc] sm:$0xf]
        %v514 = vld [vmem:[#allocation10] sm:$0xf]
        %v515 = vld [vmem:[#allocation10 + $0x4] sm:$0xf]
        %v516 = vlaneseq
        %v517 = vshrl.u32 %v516, 7
        %v518 = vsub.s32 0, %v517
        %v519 = vrot.slane %v508, %v518
        %v524 = vunpack.c.l.b16 %v510
        %v525 = vunpack.c.l.b16 %v511
        %v526 = vunpack.c.l.b16 %v512
        %v527 = vunpack.c.l.b16 %v513
        %v528 = vpack.c.b16 %v525, %v524
        %v529 = vpack.c.b16 %v527, %v526
        %v532 = vunpack.c.l.b16 %v514
        %v533 = vunpack.c.l.b16 %v515
        %v534 = vpack.c.b16 %v533, %v532
        %vm536 = vcmask 130048
        %v538 = vsel %vm536, %v528, 0
        %v541 = vsel %vm536, %v529, 0
        %543 = vmatprep.subr.bf16.mxu0 0
        %544 = vmatpush1.bf16.msra.mxu0 %v534
        %545 = vmatprep.subr.bf16.mxu0 0
        %546 = vmatpush1.bf16.msra.mxu0 0
        %547 = vmatprep.subr.bf16.mxu0 0
        %548 = vmatpush1.bf16.msra.mxu0 0
        %549 = vmatprep.subr.bf16.mxu0 0
        %550 = vmatpush1.bf16.msra.mxu0 0
        %551 = vmatprep.subr.bf16.mxu0 0
        %552 = vmatpush1.bf16.msra.mxu0 0
        %553 = vmatprep.subr.bf16.mxu0 0
        %554 = vmatpush1.bf16.msra.mxu0 0
        %555 = vmatprep.subr.bf16.mxu0 0
        %556 = vmatpush1.bf16.msra.mxu0 0
        %557 = vmatprep.subr.bf16.mxu0 0
        %558 = vmatpush1.bf16.msra.mxu0 0
        %559 = vmatprep.subr.bf16.mxu0 0
        %560 = vmatpush1.bf16.msra.mxu0 0
        %561 = vmatprep.subr.bf16.mxu0 0
        %562 = vmatpush1.bf16.msra.mxu0 0
        %563 = vmatprep.subr.bf16.mxu0 0
        %564 = vmatpush1.bf16.msra.mxu0 0
        %565 = vmatprep.subr.bf16.mxu0 0
        %566 = vmatpush1.bf16.msra.mxu0 0
        %567 = vmatprep.subr.bf16.mxu0 0
        %568 = vmatpush1.bf16.msra.mxu0 0
        %569 = vmatprep.subr.bf16.mxu0 0
        %570 = vmatpush1.bf16.msra.mxu0 0
        %571 = vmatprep.subr.bf16.mxu0 0
        %572 = vmatpush1.bf16.msra.mxu0 0
        %573 = vmatprep.subr.bf16.mxu0 0
        %574 = vmatpush1.bf16.msra.mxu0 0
        %575 = vmatprep.mubr.bf16.mxu0 0
        %576 = vmatmul.mubr.bf16.gmra.mrb[0].mxu0 %v538
        %v577 = vpop.f32.mrb[0].mxu0
        %v578 = vadd.f32 %v519, %v577
        %v579 = vpop.f32.mrb[0].mxu0
        %v580 = vpop.f32.mrb[0].mxu0
        %v581 = vadd.f32 %v519, %v580
        %v582 = vpop.f32.mrb[0].mxu0
        %583 = vmatprep.mubr.bf16.mxu0 0
        %584 = vmatmul.mubr.bf16.gmra.mrb[0].mxu0 %v541
        %v585 = vpop.f32.mrb[0].mxu0
        %v586 = vadd.f32 %v519, %v585
        %v587 = vpop.f32.mrb[0].mxu0
        %v588 = vpop.f32.mrb[0].mxu0
        %v589 = vadd.f32 %v519, %v588
        %v590 = vpop.f32.mrb[0].mxu0
        %591 = vdwg.mxu0
        %v592 = vpack.c.bf16 %v581, %v578
        %v593 = vpack.c.bf16 %v589, %v586
        %v594 = vld [vmem:[#allocation11] sm:$0xf]
        %v595 = vld [vmem:[#allocation11 + $0x4] sm:$0xf]
        %v596 = vld [vmem:[#allocation11 + $0x8] sm:$0xf]
        %v597 = vld [vmem:[#allocation11 + $0xc] sm:$0xf]
        %v598 = vlaneseq
        %v599 = vshrl.u32 %v598, 7
        %v600 = vsub.s32 1, %v599
        %v601 = vrot.slane %v508, %v600
        %v606 = vunpack.c.l.b16 %v594
        %v607 = vunpack.c.l.b16 %v595
        %v608 = vunpack.c.l.b16 %v596
        %v609 = vunpack.c.l.b16 %v597
        %v610 = vpack.c.b16 %v607, %v606
        %v611 = vpack.c.b16 %v609, %v608
        %vm614 = vcmask 261120
        %v616 = vsel %vm614, %v592, 0
        %v619 = vsel %vm614, %v593, 0
        %621 = vmatprep.subr.bf16.mxu0 0
        %622 = vmatpush1.bf16.msra.mxu0 %v610
        %623 = vmatprep.subr.bf16.mxu0 0
        %624 = vmatpush1.bf16.msra.mxu0 %v611
        %625 = vmatprep.subr.bf16.mxu0 0
        %626 = vmatpush1.bf16.msra.mxu0 0
        %627 = vmatprep.subr.bf16.mxu0 0
        %628 = vmatpush1.bf16.msra.mxu0 0
        %629 = vmatprep.subr.bf16.mxu0 0
        %630 = vmatpush1.bf16.msra.mxu0 0
        %631 = vmatprep.subr.bf16.mxu0 0
        %632 = vmatpush1.bf16.msra.mxu0 0
        %633 = vmatprep.subr.bf16.mxu0 0
        %634 = vmatpush1.bf16.msra.mxu0 0
        %635 = vmatprep.subr.bf16.mxu0 0
        %636 = vmatpush1.bf16.msra.mxu0 0
        %637 = vmatprep.subr.bf16.mxu0 0
        %638 = vmatpush1.bf16.msra.mxu0 0
        %639 = vmatprep.subr.bf16.mxu0 0
        %640 = vmatpush1.bf16.msra.mxu0 0
        %641 = vmatprep.subr.bf16.mxu0 0
        %642 = vmatpush1.bf16.msra.mxu0 0
        %643 = vmatprep.subr.bf16.mxu0 0
        %644 = vmatpush1.bf16.msra.mxu0 0
        %645 = vmatprep.subr.bf16.mxu0 0
        %646 = vmatpush1.bf16.msra.mxu0 0
        %647 = vmatprep.subr.bf16.mxu0 0
        %648 = vmatpush1.bf16.msra.mxu0 0
        %649 = vmatprep.subr.bf16.mxu0 0
        %650 = vmatpush1.bf16.msra.mxu0 0
        %651 = vmatprep.subr.bf16.mxu0 0
        %652 = vmatpush1.bf16.msra.mxu0 0
        %653 = vmatprep.mubr.bf16.mxu0 0
        %654 = vmatmul.mubr.bf16.gmra.mrb[0].mxu0 %v616
        %v655 = vpop.f32.mrb[0].mxu0
        %v656 = vadd.f32 %v601, %v655
        %v657 = vpop.f32.mrb[0].mxu0
        %v658 = vpop.f32.mrb[0].mxu0
        %v659 = vadd.f32 %v601, %v658
        %v660 = vpop.f32.mrb[0].mxu0
        %661 = vmatprep.mubr.bf16.mxu0 0
        %662 = vmatmul.mubr.bf16.gmra.mrb[0].mxu0 %v619
        %v663 = vpop.f32.mrb[0].mxu0
        %v664 = vadd.f32 %v601, %v663
        %v665 = vpop.f32.mrb[0].mxu0
        %v666 = vpop.f32.mrb[0].mxu0
        %v667 = vadd.f32 %v601, %v666
        %v668 = vpop.f32.mrb[0].mxu0
        %669 = vdwg.mxu0
        %v670 = vpack.c.bf16 %v659, %v656
        %v671 = vpack.c.bf16 %v667, %v664
        %672 = vst.msk [vmem:[#allocation2] sm:$0xff] %vm614, %v670
        %673 = vst.msk [vmem:[#allocation2 + $0x8] sm:$0xff] %vm614, %v671
        %v674 = vld [vmem:[#allocation13] sm:$0xf]
        %v675 = vld [vmem:[#allocation13 + $0x4] sm:$0xf]
        %v676 = vld [vmem:[#allocation13 + $0x8] sm:$0xf]
        %v677 = vld [vmem:[#allocation13 + $0xc] sm:$0xf]
        %v678 = vlaneseq
        %v679 = vshrl.u32 %v678, 7
        %v680 = vsub.s32 2, %v679
        %v681 = vrot.slane %v508, %v680
        %v686 = vunpack.c.l.b16 %v674
        %v687 = vunpack.c.l.b16 %v675
        %v688 = vunpack.c.l.b16 %v676
        %v689 = vunpack.c.l.b16 %v677
        %v690 = vpack.c.b16 %v687, %v686
        %v691 = vpack.c.b16 %v689, %v688
        %694 = vmatprep.subr.bf16.mxu0 0
        %695 = vmatpush1.bf16.msra.mxu0 %v690
        %696 = vmatprep.subr.bf16.mxu0 0
        %697 = vmatpush1.bf16.msra.mxu0 %v691
        %698 = vmatprep.subr.bf16.mxu0 0
        %699 = vmatpush1.bf16.msra.mxu0 0
        %700 = vmatprep.subr.bf16.mxu0 0
        %701 = vmatpush1.bf16.msra.mxu0 0
        %702 = vmatprep.subr.bf16.mxu0 0
        %703 = vmatpush1.bf16.msra.mxu0 0
        %704 = vmatprep.subr.bf16.mxu0 0
        %705 = vmatpush1.bf16.msra.mxu0 0
        %706 = vmatprep.subr.bf16.mxu0 0
        %707 = vmatpush1.bf16.msra.mxu0 0
        %708 = vmatprep.subr.bf16.mxu0 0
        %709 = vmatpush1.bf16.msra.mxu0 0
        %710 = vmatprep.subr.bf16.mxu0 0
        %711 = vmatpush1.bf16.msra.mxu0 0
        %712 = vmatprep.subr.bf16.mxu0 0
        %713 = vmatpush1.bf16.msra.mxu0 0
        %714 = vmatprep.subr.bf16.mxu0 0
        %715 = vmatpush1.bf16.msra.mxu0 0
        %716 = vmatprep.subr.bf16.mxu0 0
        %717 = vmatpush1.bf16.msra.mxu0 0
        %718 = vmatprep.subr.bf16.mxu0 0
        %719 = vmatpush1.bf16.msra.mxu0 0
        %720 = vmatprep.subr.bf16.mxu0 0
        %721 = vmatpush1.bf16.msra.mxu0 0
        %722 = vmatprep.subr.bf16.mxu0 0
        %723 = vmatpush1.bf16.msra.mxu0 0
        %724 = vmatprep.subr.bf16.mxu0 0
        %725 = vmatpush1.bf16.msra.mxu0 0
        %726 = vmatprep.mubr.bf16.mxu0 0
        %727 = vmatmul.mubr.bf16.gmra.mrb[0].mxu0 %v616
        %v728 = vpop.f32.mrb[0].mxu0
        %v729 = vadd.f32 %v681, %v728
        %v730 = vpop.f32.mrb[0].mxu0
        %v731 = vpop.f32.mrb[0].mxu0
        %v732 = vadd.f32 %v681, %v731
        %v733 = vpop.f32.mrb[0].mxu0
        %734 = vmatprep.mubr.bf16.mxu0 0
        %735 = vmatmul.mubr.bf16.gmra.mrb[0].mxu0 %v619
        %v736 = vpop.f32.mrb[0].mxu0
        %v737 = vadd.f32 %v681, %v736
        %v738 = vpop.f32.mrb[0].mxu0
        %v739 = vpop.f32.mrb[0].mxu0
        %v740 = vadd.f32 %v681, %v739
        %v741 = vpop.f32.mrb[0].mxu0
        %742 = vdwg.mxu0
        %v743 = vpack.c.bf16 %v732, %v729
        %v744 = vpack.c.bf16 %v740, %v737
        %745 = vst.msk [vmem:[#allocation3] sm:$0xff] %vm614, %v743
        %746 = vst.msk [vmem:[#allocation3 + $0x8] sm:$0xff] %vm614, %v744
        %v747 = vld [vmem:[#allocation8] sm:$0xf]
        %v748 = vld [vmem:[#allocation8 + $0x4] sm:$0xf]
        %v749 = vld [vmem:[#allocation8 + $0x8] sm:$0xf]
        %v750 = vld [vmem:[#allocation8 + $0xc] sm:$0xf]
        %v751 = vlaneseq
        %v752 = vand.u32 %v751, 127
        %vm753 = vcmp.lt.s32.totalorder %v752, 8
        %v754 = vsel %vm753, 0.0, -1e+30
        %v755 = vld [vmem:[#allocation2] sm:$0xff]
        %v756 = vld [vmem:[#allocation3] sm:$0xff]
        %v761 = vunpack.c.l.b16 %v747
        %v762 = vunpack.c.l.b16 %v748
        %v763 = vunpack.c.l.b16 %v749
        %v764 = vunpack.c.l.b16 %v750
        %v765 = vpack.c.b16 %v762, %v761
        %v766 = vpack.c.b16 %v764, %v763
        %v768 = vsel %vm614, %v765, 0
        %v771 = vsel %vm614, %v766, 0
        %v774 = vsel %vm614, %v755, 0
        %776 = vmatprep.subr.bf16.mxu0 0
        %777 = vmatpush1.bf16.xpose.msra.mxu0 %v774
        %778 = vmatprep.subr.bf16.mxu0 0
        %779 = vmatpush1.bf16.xpose.msra.mxu0 0
        %780 = vmatprep.subr.bf16.mxu0 0
        %781 = vmatpush1.bf16.xpose.msra.mxu0 0
        %782 = vmatprep.subr.bf16.mxu0 0
        %783 = vmatpush1.bf16.xpose.msra.mxu0 0
        %784 = vmatprep.subr.bf16.mxu0 0
        %785 = vmatpush1.bf16.xpose.msra.mxu0 0
        %786 = vmatprep.subr.bf16.mxu0 0
        %787 = vmatpush1.bf16.xpose.msra.mxu0 0
        %788 = vmatprep.subr.bf16.mxu0 0
        %789 = vmatpush1.bf16.xpose.msra.mxu0 0
        %790 = vmatprep.subr.bf16.mxu0 0
        %791 = vmatpush1.bf16.xpose.msra.mxu0 0
        %792 = vmatprep.subr.bf16.mxu0 0
        %793 = vmatpush1.bf16.xpose.msra.mxu0 0
        %794 = vmatprep.subr.bf16.mxu0 0
        %795 = vmatpush1.bf16.xpose.msra.mxu0 0
        %796 = vmatprep.subr.bf16.mxu0 0
        %797 = vmatpush1.bf16.xpose.msra.mxu0 0
        %798 = vmatprep.subr.bf16.mxu0 0
        %799 = vmatpush1.bf16.xpose.msra.mxu0 0
        %800 = vmatprep.subr.bf16.mxu0 0
        %801 = vmatpush1.bf16.xpose.msra.mxu0 0
        %802 = vmatprep.subr.bf16.mxu0 0
        %803 = vmatpush1.bf16.xpose.msra.mxu0 0
        %804 = vmatprep.subr.bf16.mxu0 0
        %805 = vmatpush1.bf16.xpose.msra.mxu0 0
        %806 = vmatprep.subr.bf16.mxu0 0
        %807 = vmatpush1.bf16.xpose.msra.mxu0 0
        %808 = vmatprep.mubr.bf16.mxu0 0
        %809 = vmatmul.mubr.bf16.gmra.mrb[0].mxu0 %v768
        %v810 = vpop.f32.mrb[0].mxu0
        %v811 = vadd.f32 %v754, %v810
        %v812 = vpop.f32.mrb[0].mxu0
        %v813 = vpop.f32.mrb[0].mxu0
        %v814 = vadd.f32 %v754, %v813
        %v815 = vpop.f32.mrb[0].mxu0
        %816 = vmatprep.mubr.bf16.mxu0 0
        %817 = vmatmul.mubr.bf16.gmra.mrb[0].mxu0 %v771
        %v818 = vpop.f32.mrb[0].mxu0
        %v819 = vadd.f32 %v754, %v818
        %v820 = vpop.f32.mrb[0].mxu0
        %v821 = vpop.f32.mrb[0].mxu0
        %v822 = vadd.f32 %v754, %v821
        %v823 = vpop.f32.mrb[0].mxu0
        %824 = vdwg.mxu0
        %v825 = vsel %vm536, %v811, -inf
        %826 = vmax.xlane.f32.xlu0 %v825
        %v827 = vpop.xlane.xlu0 %826
        %v828 = vsel %vm536, %v814, -inf
        %829 = vmax.xlane.f32.xlu0 %v828
        %v830 = vpop.xlane.xlu0 %829
        %v831 = vsel %vm536, %v819, -inf
        %832 = vmax.xlane.f32.xlu0 %v831
        %v833 = vpop.xlane.xlu0 %832
        %v834 = vsel %vm536, %v822, -inf
        %835 = vmax.xlane.f32.xlu0 %v834
        %v836 = vpop.xlane.xlu0 %835
        %v837 = vsub.f32 %v811, %v827
        %v838 = vsub.f32 %v814, %v830
        %v839 = vsub.f32 %v819, %v833
        %v840 = vsub.f32 %v822, %v836
        %v841 = vmul.f32 %v837, 1.442695
        %v842 = vpow.pop %v841
        %v843 = vmul.f32 %v838, 1.442695
        %v844 = vpow.pop %v843
        %v845 = vmul.f32 %v839, 1.442695
        %v846 = vpow.pop %v845
        %v847 = vmul.f32 %v840, 1.442695
        %v848 = vpow.pop %v847
        %v849 = vsel %vm536, %v842, 0.0
        %850 = vadd.xlane.f32.xlu0 %v849
        %v851 = vpop.xlane.xlu0 %850
        %v852 = vsel %vm536, %v844, 0.0
        %853 = vadd.xlane.f32.xlu0 %v852
        %v854 = vpop.xlane.xlu0 %853
        %v855 = vsel %vm536, %v846, 0.0
        %856 = vadd.xlane.f32.xlu0 %v855
        %v857 = vpop.xlane.xlu0 %856
        %v858 = vsel %vm536, %v848, 0.0
        %859 = vadd.xlane.f32.xlu0 %v858
        %v860 = vpop.xlane.xlu0 %859
        %v861 = vrcp.pop %v851
        %v862 = vrcp.pop %v854
        %v863 = vrcp.pop %v857
        %v864 = vrcp.pop %v860
        %v865 = vmul.f32 %v842, %v861
        %v866 = vmul.f32 %v844, %v862
        %v867 = vmul.f32 %v846, %v863
        %v868 = vmul.f32 %v848, %v864
        %v869 = vpack.c.bf16 %v865, %v865
        %v871 = vsel %vm536, %v869, 0
        %873 = vmatprep.subr.bf16.mxu0 0
        %874 = vmatpush1.bf16.msra.mxu0 %v756
        %875 = vmatprep.subr.bf16.mxu0 0
        %876 = vmatpush1.bf16.msra.mxu0 0
        %877 = vmatprep.subr.bf16.mxu0 0
        %878 = vmatpush1.bf16.msra.mxu0 0
        %879 = vmatprep.subr.bf16.mxu0 0
        %880 = vmatpush1.bf16.msra.mxu0 0
        %881 = vmatprep.subr.bf16.mxu0 0
        %882 = vmatpush1.bf16.msra.mxu0 0
        %883 = vmatprep.subr.bf16.mxu0 0
        %884 = vmatpush1.bf16.msra.mxu0 0
        %885 = vmatprep.subr.bf16.mxu0 0
        %886 = vmatpush1.bf16.msra.mxu0 0
        %887 = vmatprep.subr.bf16.mxu0 0
        %888 = vmatpush1.bf16.msra.mxu0 0
        %889 = vmatprep.subr.bf16.mxu0 0
        %890 = vmatpush1.bf16.msra.mxu0 0
        %891 = vmatprep.subr.bf16.mxu0 0
        %892 = vmatpush1.bf16.msra.mxu0 0
        %893 = vmatprep.subr.bf16.mxu0 0
        %894 = vmatpush1.bf16.msra.mxu0 0
        %895 = vmatprep.subr.bf16.mxu0 0
        %896 = vmatpush1.bf16.msra.mxu0 0
        %897 = vmatprep.subr.bf16.mxu0 0
        %898 = vmatpush1.bf16.msra.mxu0 0
        %899 = vmatprep.subr.bf16.mxu0 0
        %900 = vmatpush1.bf16.msra.mxu0 0
        %901 = vmatprep.subr.bf16.mxu0 0
        %902 = vmatpush1.bf16.msra.mxu0 0
        %903 = vmatprep.subr.bf16.mxu0 0
        %904 = vmatpush1.bf16.msra.mxu0 0
        %905 = vmatprep.mubr.bf16.mxu0 0
        %906 = vmatmul.mubr.bf16.gmra.mrb[0].mxu0 %v871
        %v907 = vpop.f32.mrb[0].mxu0
        %v908 = vadd.f32 0.0, %v907
        %v909 = vpop.f32.mrb[0].mxu0
        %v910 = vpop.f32.mrb[0].mxu0
        %v911 = vpop.f32.mrb[0].mxu0
        %912 = vdwg.mxu0
        %v913 = vpack.c.bf16 %v866, %v866
        %915 = vrot.lane.b32.xlu0 %v756, 120
        %v916 = vpop.permute.xlu0 %915
        %v919 = vsel %vm536, %v913, 0
        %921 = vmatprep.subr.bf16.mxu0 0
        %922 = vmatpush1.bf16.msra.mxu0 %v916
        %923 = vmatprep.subr.bf16.mxu0 0
        %924 = vmatpush1.bf16.msra.mxu0 0
        %925 = vmatprep.subr.bf16.mxu0 0
        %926 = vmatpush1.bf16.msra.mxu0 0
        %927 = vmatprep.subr.bf16.mxu0 0
        %928 = vmatpush1.bf16.msra.mxu0 0
        %929 = vmatprep.subr.bf16.mxu0 0
        %930 = vmatpush1.bf16.msra.mxu0 0
        %931 = vmatprep.subr.bf16.mxu0 0
        %932 = vmatpush1.bf16.msra.mxu0 0
        %933 = vmatprep.subr.bf16.mxu0 0
        %934 = vmatpush1.bf16.msra.mxu0 0
        %935 = vmatprep.subr.bf16.mxu0 0
        %936 = vmatpush1.bf16.msra.mxu0 0
        %937 = vmatprep.subr.bf16.mxu0 0
        %938 = vmatpush1.bf16.msra.mxu0 0
        %939 = vmatprep.subr.bf16.mxu0 0
        %940 = vmatpush1.bf16.msra.mxu0 0
        %941 = vmatprep.subr.bf16.mxu0 0
        %942 = vmatpush1.bf16.msra.mxu0 0
        %943 = vmatprep.subr.bf16.mxu0 0
        %944 = vmatpush1.bf16.msra.mxu0 0
        %945 = vmatprep.subr.bf16.mxu0 0
        %946 = vmatpush1.bf16.msra.mxu0 0
        %947 = vmatprep.subr.bf16.mxu0 0
        %948 = vmatpush1.bf16.msra.mxu0 0
        %949 = vmatprep.subr.bf16.mxu0 0
        %950 = vmatpush1.bf16.msra.mxu0 0
        %951 = vmatprep.subr.bf16.mxu0 0
        %952 = vmatpush1.bf16.msra.mxu0 0
        %953 = vmatprep.mubr.bf16.mxu0 0
        %954 = vmatmul.mubr.bf16.gmra.mrb[0].mxu0 %v919
        %v955 = vpop.f32.mrb[0].mxu0
        %v956 = vadd.f32 0.0, %v955
        %v957 = vpop.f32.mrb[0].mxu0
        %v958 = vpop.f32.mrb[0].mxu0
        %v959 = vpop.f32.mrb[0].mxu0
        %960 = vdwg.mxu0
        %v961 = vpack.c.bf16 %v867, %v867
        %962 = vrot.lane.b32.xlu0 %v756, 112
        %v963 = vpop.permute.xlu0 %962
        %v966 = vsel %vm536, %v961, 0
        %968 = vmatprep.subr.bf16.mxu0 0
        %969 = vmatpush1.bf16.msra.mxu0 %v963
        %970 = vmatprep.subr.bf16.mxu0 0
        %971 = vmatpush1.bf16.msra.mxu0 0
        %972 = vmatprep.subr.bf16.mxu0 0
        %973 = vmatpush1.bf16.msra.mxu0 0
        %974 = vmatprep.subr.bf16.mxu0 0
        %975 = vmatpush1.bf16.msra.mxu0 0
        %976 = vmatprep.subr.bf16.mxu0 0
        %977 = vmatpush1.bf16.msra.mxu0 0
        %978 = vmatprep.subr.bf16.mxu0 0
        %979 = vmatpush1.bf16.msra.mxu0 0
        %980 = vmatprep.subr.bf16.mxu0 0
        %981 = vmatpush1.bf16.msra.mxu0 0
        %982 = vmatprep.subr.bf16.mxu0 0
        %983 = vmatpush1.bf16.msra.mxu0 0
        %984 = vmatprep.subr.bf16.mxu0 0
        %985 = vmatpush1.bf16.msra.mxu0 0
        %986 = vmatprep.subr.bf16.mxu0 0
        %987 = vmatpush1.bf16.msra.mxu0 0
        %988 = vmatprep.subr.bf16.mxu0 0
        %989 = vmatpush1.bf16.msra.mxu0 0
        %990 = vmatprep.subr.bf16.mxu0 0
        %991 = vmatpush1.bf16.msra.mxu0 0
        %992 = vmatprep.subr.bf16.mxu0 0
        %993 = vmatpush1.bf16.msra.mxu0 0
        %994 = vmatprep.subr.bf16.mxu0 0
        %995 = vmatpush1.bf16.msra.mxu0 0
        %996 = vmatprep.subr.bf16.mxu0 0
        %997 = vmatpush1.bf16.msra.mxu0 0
        %998 = vmatprep.subr.bf16.mxu0 0
        %999 = vmatpush1.bf16.msra.mxu0 0
        %1000 = vmatprep.mubr.bf16.mxu0 0
        %1001 = vmatmul.mubr.bf16.gmra.mrb[0].mxu0 %v966
        %v1002 = vpop.f32.mrb[0].mxu0
        %v1003 = vadd.f32 0.0, %v1002
        %v1004 = vpop.f32.mrb[0].mxu0
        %v1005 = vpop.f32.mrb[0].mxu0
        %v1006 = vpop.f32.mrb[0].mxu0
        %1007 = vdwg.mxu0
        %v1008 = vpack.c.bf16 %v868, %v868
        %1009 = vrot.lane.b32.xlu0 %v756, 104
        %v1010 = vpop.permute.xlu0 %1009
        %v1013 = vsel %vm536, %v1008, 0
        %1015 = vmatprep.subr.bf16.mxu0 0
        %1016 = vmatpush1.bf16.msra.mxu0 %v1010
        %1017 = vmatprep.subr.bf16.mxu0 0
        %1018 = vmatpush1.bf16.msra.mxu0 0
        %1019 = vmatprep.subr.bf16.mxu0 0
        %1020 = vmatpush1.bf16.msra.mxu0 0
        %1021 = vmatprep.subr.bf16.mxu0 0
        %1022 = vmatpush1.bf16.msra.mxu0 0
        %1023 = vmatprep.subr.bf16.mxu0 0
        %1024 = vmatpush1.bf16.msra.mxu0 0
        %1025 = vmatprep.subr.bf16.mxu0 0
        %1026 = vmatpush1.bf16.msra.mxu0 0
        %1027 = vmatprep.subr.bf16.mxu0 0
        %1028 = vmatpush1.bf16.msra.mxu0 0
        %1029 = vmatprep.subr.bf16.mxu0 0
        %1030 = vmatpush1.bf16.msra.mxu0 0
        %1031 = vmatprep.subr.bf16.mxu0 0
        %1032 = vmatpush1.bf16.msra.mxu0 0
        %1033 = vmatprep.subr.bf16.mxu0 0
        %1034 = vmatpush1.bf16.msra.mxu0 0
        %1035 = vmatprep.subr.bf16.mxu0 0
        %1036 = vmatpush1.bf16.msra.mxu0 0
        %1037 = vmatprep.subr.bf16.mxu0 0
        %1038 = vmatpush1.bf16.msra.mxu0 0
        %1039 = vmatprep.subr.bf16.mxu0 0
        %1040 = vmatpush1.bf16.msra.mxu0 0
        %1041 = vmatprep.subr.bf16.mxu0 0
        %1042 = vmatpush1.bf16.msra.mxu0 0
        %1043 = vmatprep.subr.bf16.mxu0 0
        %1044 = vmatpush1.bf16.msra.mxu0 0
        %1045 = vmatprep.subr.bf16.mxu0 0
        %1046 = vmatpush1.bf16.msra.mxu0 0
        %1047 = vmatprep.mubr.bf16.mxu0 0
        %1048 = vmatmul.mubr.bf16.gmra.mrb[0].mxu0 %v1013
        %v1049 = vpop.f32.mrb[0].mxu0
        %v1050 = vadd.f32 0.0, %v1049
        %v1051 = vpop.f32.mrb[0].mxu0
        %v1052 = vpop.f32.mrb[0].mxu0
        %v1053 = vpop.f32.mrb[0].mxu0
        %1054 = vdwg.mxu0
        %1056 = vrot.lane.b32.xlu0 %v956, 8
        %v1057 = vpop.permute.xlu0 %1056
        %1060 = vrot.lane.b32.xlu0 %v1003, 16
        %v1061 = vpop.permute.xlu0 %1060
        %1064 = vrot.lane.b32.xlu0 %v1050, 24
        %v1065 = vpop.permute.xlu0 %1064
        %vm1067 = vcmask 64512
        %v1068 = vsel %vm1067, %v908, %v1057
        %v1069 = vsel %vm536, %v1068, %v1061
        %vm1070 = vcmask 195584
        %v1071 = vsel %vm1070, %v1069, %v1065
        %1072 = vst.msk [vmem:[#allocation4] sm:$0xff] %vm614, %v1071
        %s1073 = scalar_lea.vmem [#allocation2], 8
        %v1074 = vld [vmem:[%s1073] sm:$0xff]
        %s1075 = scalar_lea.vmem [#allocation3], 8
        %v1076 = vld [vmem:[%s1075] sm:$0xff]
        %v1078 = vsel %vm614, %v1074, 0
        %1080 = vmatprep.subr.bf16.mxu0 0
        %1081 = vmatpush1.bf16.xpose.msra.mxu0 %v1078
        %1082 = vmatprep.subr.bf16.mxu0 0
        %1083 = vmatpush1.bf16.xpose.msra.mxu0 0
        %1084 = vmatprep.subr.bf16.mxu0 0
        %1085 = vmatpush1.bf16.xpose.msra.mxu0 0
        %1086 = vmatprep.subr.bf16.mxu0 0
        %1087 = vmatpush1.bf16.xpose.msra.mxu0 0
        %1088 = vmatprep.subr.bf16.mxu0 0
        %1089 = vmatpush1.bf16.xpose.msra.mxu0 0
        %1090 = vmatprep.subr.bf16.mxu0 0
        %1091 = vmatpush1.bf16.xpose.msra.mxu0 0
        %1092 = vmatprep.subr.bf16.mxu0 0
        %1093 = vmatpush1.bf16.xpose.msra.mxu0 0
        %1094 = vmatprep.subr.bf16.mxu0 0
        %1095 = vmatpush1.bf16.xpose.msra.mxu0 0
        %1096 = vmatprep.subr.bf16.mxu0 0
        %1097 = vmatpush1.bf16.xpose.msra.mxu0 0
        %1098 = vmatprep.subr.bf16.mxu0 0
        %1099 = vmatpush1.bf16.xpose.msra.mxu0 0
        %1100 = vmatprep.subr.bf16.mxu0 0
        %1101 = vmatpush1.bf16.xpose.msra.mxu0 0
        %1102 = vmatprep.subr.bf16.mxu0 0
        %1103 = vmatpush1.bf16.xpose.msra.mxu0 0
        %1104 = vmatprep.subr.bf16.mxu0 0
        %1105 = vmatpush1.bf16.xpose.msra.mxu0 0
        %1106 = vmatprep.subr.bf16.mxu0 0
        %1107 = vmatpush1.bf16.xpose.msra.mxu0 0
        %1108 = vmatprep.subr.bf16.mxu0 0
        %1109 = vmatpush1.bf16.xpose.msra.mxu0 0
        %1110 = vmatprep.subr.bf16.mxu0 0
        %1111 = vmatpush1.bf16.xpose.msra.mxu0 0
        %1112 = vmatprep.mubr.bf16.mxu0 0
        %1113 = vmatmul.mubr.bf16.gmra.mrb[0].mxu0 %v768
        %v1114 = vpop.f32.mrb[0].mxu0
        %v1115 = vadd.f32 %v754, %v1114
        %v1116 = vpop.f32.mrb[0].mxu0
        %v1117 = vpop.f32.mrb[0].mxu0
        %v1118 = vadd.f32 %v754, %v1117
        %v1119 = vpop.f32.mrb[0].mxu0
        %1120 = vmatprep.mubr.bf16.mxu0 0
        %1121 = vmatmul.mubr.bf16.gmra.mrb[0].mxu0 %v771
        %v1122 = vpop.f32.mrb[0].mxu0
        %v1123 = vadd.f32 %v754, %v1122
        %v1124 = vpop.f32.mrb[0].mxu0
        %v1125 = vpop.f32.mrb[0].mxu0
        %v1126 = vadd.f32 %v754, %v1125
        %v1127 = vpop.f32.mrb[0].mxu0
        %1128 = vdwg.mxu0
        %v1129 = vsel %vm536, %v1115, -inf
        %1130 = vmax.xlane.f32.xlu0 %v1129
        %v1131 = vpop.xlane.xlu0 %1130
        %v1132 = vsel %vm536, %v1118, -inf
        %1133 = vmax.xlane.f32.xlu0 %v1132
        %v1134 = vpop.xlane.xlu0 %1133
        %v1135 = vsel %vm536, %v1123, -inf
        %1136 = vmax.xlane.f32.xlu0 %v1135
        %v1137 = vpop.xlane.xlu0 %1136
        %v1138 = vsel %vm536, %v1126, -inf
        %1139 = vmax.xlane.f32.xlu0 %v1138
        %v1140 = vpop.xlane.xlu0 %1139
        %v1141 = vsub.f32 %v1115, %v1131
        %v1142 = vsub.f32 %v1118, %v1134
        %v1143 = vsub.f32 %v1123, %v1137
        %v1144 = vsub.f32 %v1126, %v1140
        %v1145 = vmul.f32 %v1141, 1.442695
        %v1146 = vpow.pop %v1145
        %v1147 = vmul.f32 %v1142, 1.442695
        %v1148 = vpow.pop %v1147
        %v1149 = vmul.f32 %v1143, 1.442695
        %v1150 = vpow.pop %v1149
        %v1151 = vmul.f32 %v1144, 1.442695
        %v1152 = vpow.pop %v1151
        %v1153 = vsel %vm536, %v1146, 0.0
        %1154 = vadd.xlane.f32.xlu0 %v1153
        %v1155 = vpop.xlane.xlu0 %1154
        %v1156 = vsel %vm536, %v1148, 0.0
        %1157 = vadd.xlane.f32.xlu0 %v1156
        %v1158 = vpop.xlane.xlu0 %1157
        %v1159 = vsel %vm536, %v1150, 0.0
        %1160 = vadd.xlane.f32.xlu0 %v1159
        %v1161 = vpop.xlane.xlu0 %1160
        %v1162 = vsel %vm536, %v1152, 0.0
        %1163 = vadd.xlane.f32.xlu0 %v1162
        %v1164 = vpop.xlane.xlu0 %1163
        %v1165 = vrcp.pop %v1155
        %v1166 = vrcp.pop %v1158
        %v1167 = vrcp.pop %v1161
        %v1168 = vrcp.pop %v1164
        %v1169 = vmul.f32 %v1146, %v1165
        %v1170 = vmul.f32 %v1148, %v1166
        %v1171 = vmul.f32 %v1150, %v1167
        %v1172 = vmul.f32 %v1152, %v1168
        %v1173 = vpack.c.bf16 %v1169, %v1169
        %v1175 = vsel %vm536, %v1173, 0
        %1177 = vmatprep.subr.bf16.mxu0 0
        %1178 = vmatpush1.bf16.msra.mxu0 %v1076
        %1179 = vmatprep.subr.bf16.mxu0 0
        %1180 = vmatpush1.bf16.msra.mxu0 0
        %1181 = vmatprep.subr.bf16.mxu0 0
        %1182 = vmatpush1.bf16.msra.mxu0 0
        %1183 = vmatprep.subr.bf16.mxu0 0
        %1184 = vmatpush1.bf16.msra.mxu0 0
        %1185 = vmatprep.subr.bf16.mxu0 0
        %1186 = vmatpush1.bf16.msra.mxu0 0
        %1187 = vmatprep.subr.bf16.mxu0 0
        %1188 = vmatpush1.bf16.msra.mxu0 0
        %1189 = vmatprep.subr.bf16.mxu0 0
        %1190 = vmatpush1.bf16.msra.mxu0 0
        %1191 = vmatprep.subr.bf16.mxu0 0
        %1192 = vmatpush1.bf16.msra.mxu0 0
        %1193 = vmatprep.subr.bf16.mxu0 0
        %1194 = vmatpush1.bf16.msra.mxu0 0
        %1195 = vmatprep.subr.bf16.mxu0 0
        %1196 = vmatpush1.bf16.msra.mxu0 0
        %1197 = vmatprep.subr.bf16.mxu0 0
        %1198 = vmatpush1.bf16.msra.mxu0 0
        %1199 = vmatprep.subr.bf16.mxu0 0
        %1200 = vmatpush1.bf16.msra.mxu0 0
        %1201 = vmatprep.subr.bf16.mxu0 0
        %1202 = vmatpush1.bf16.msra.mxu0 0
        %1203 = vmatprep.subr.bf16.mxu0 0
        %1204 = vmatpush1.bf16.msra.mxu0 0
        %1205 = vmatprep.subr.bf16.mxu0 0
        %1206 = vmatpush1.bf16.msra.mxu0 0
        %1207 = vmatprep.subr.bf16.mxu0 0
        %1208 = vmatpush1.bf16.msra.mxu0 0
        %1209 = vmatprep.mubr.bf16.mxu0 0
        %1210 = vmatmul.mubr.bf16.gmra.mrb[0].mxu0 %v1175
        %v1211 = vpop.f32.mrb[0].mxu0
        %v1212 = vadd.f32 0.0, %v1211
        %v1213 = vpop.f32.mrb[0].mxu0
        %v1214 = vpop.f32.mrb[0].mxu0
        %v1215 = vpop.f32.mrb[0].mxu0
        %1216 = vdwg.mxu0
        %v1217 = vpack.c.bf16 %v1170, %v1170
        %1219 = vrot.lane.b32.xlu0 %v1076, 120
        %v1220 = vpop.permute.xlu0 %1219
        %v1223 = vsel %vm536, %v1217, 0
        %1225 = vmatprep.subr.bf16.mxu0 0
        %1226 = vmatpush1.bf16.msra.mxu0 %v1220
        %1227 = vmatprep.subr.bf16.mxu0 0
        %1228 = vmatpush1.bf16.msra.mxu0 0
        %1229 = vmatprep.subr.bf16.mxu0 0
        %1230 = vmatpush1.bf16.msra.mxu0 0
        %1231 = vmatprep.subr.bf16.mxu0 0
        %1232 = vmatpush1.bf16.msra.mxu0 0
        %1233 = vmatprep.subr.bf16.mxu0 0
        %1234 = vmatpush1.bf16.msra.mxu0 0
        %1235 = vmatprep.subr.bf16.mxu0 0
        %1236 = vmatpush1.bf16.msra.mxu0 0
        %1237 = vmatprep.subr.bf16.mxu0 0
        %1238 = vmatpush1.bf16.msra.mxu0 0
        %1239 = vmatprep.subr.bf16.mxu0 0
        %1240 = vmatpush1.bf16.msra.mxu0 0
        %1241 = vmatprep.subr.bf16.mxu0 0
        %1242 = vmatpush1.bf16.msra.mxu0 0
        %1243 = vmatprep.subr.bf16.mxu0 0
        %1244 = vmatpush1.bf16.msra.mxu0 0
        %1245 = vmatprep.subr.bf16.mxu0 0
        %1246 = vmatpush1.bf16.msra.mxu0 0
        %1247 = vmatprep.subr.bf16.mxu0 0
        %1248 = vmatpush1.bf16.msra.mxu0 0
        %1249 = vmatprep.subr.bf16.mxu0 0
        %1250 = vmatpush1.bf16.msra.mxu0 0
        %1251 = vmatprep.subr.bf16.mxu0 0
        %1252 = vmatpush1.bf16.msra.mxu0 0
        %1253 = vmatprep.subr.bf16.mxu0 0
        %1254 = vmatpush1.bf16.msra.mxu0 0
        %1255 = vmatprep.subr.bf16.mxu0 0
        %1256 = vmatpush1.bf16.msra.mxu0 0
        %1257 = vmatprep.mubr.bf16.mxu0 0
        %1258 = vmatmul.mubr.bf16.gmra.mrb[0].mxu0 %v1223
        %v1259 = vpop.f32.mrb[0].mxu0
        %v1260 = vadd.f32 0.0, %v1259
        %v1261 = vpop.f32.mrb[0].mxu0
        %v1262 = vpop.f32.mrb[0].mxu0
        %v1263 = vpop.f32.mrb[0].mxu0
        %1264 = vdwg.mxu0
        %v1265 = vpack.c.bf16 %v1171, %v1171
        %1266 = vrot.lane.b32.xlu0 %v1076, 112
        %v1267 = vpop.permute.xlu0 %1266
        %v1270 = vsel %vm536, %v1265, 0
        %1272 = vmatprep.subr.bf16.mxu0 0
        %1273 = vmatpush1.bf16.msra.mxu0 %v1267
        %1274 = vmatprep.subr.bf16.mxu0 0
        %1275 = vmatpush1.bf16.msra.mxu0 0
        %1276 = vmatprep.subr.bf16.mxu0 0
        %1277 = vmatpush1.bf16.msra.mxu0 0
        %1278 = vmatprep.subr.bf16.mxu0 0
        %1279 = vmatpush1.bf16.msra.mxu0 0
        %1280 = vmatprep.subr.bf16.mxu0 0
        %1281 = vmatpush1.bf16.msra.mxu0 0
        %1282 = vmatprep.subr.bf16.mxu0 0
        %1283 = vmatpush1.bf16.msra.mxu0 0
        %1284 = vmatprep.subr.bf16.mxu0 0
        %1285 = vmatpush1.bf16.msra.mxu0 0
        %1286 = vmatprep.subr.bf16.mxu0 0
        %1287 = vmatpush1.bf16.msra.mxu0 0
        %1288 = vmatprep.subr.bf16.mxu0 0
        %1289 = vmatpush1.bf16.msra.mxu0 0
        %1290 = vmatprep.subr.bf16.mxu0 0
        %1291 = vmatpush1.bf16.msra.mxu0 0
        %1292 = vmatprep.subr.bf16.mxu0 0
        %1293 = vmatpush1.bf16.msra.mxu0 0
        %1294 = vmatprep.subr.bf16.mxu0 0
        %1295 = vmatpush1.bf16.msra.mxu0 0
        %1296 = vmatprep.subr.bf16.mxu0 0
        %1297 = vmatpush1.bf16.msra.mxu0 0
        %1298 = vmatprep.subr.bf16.mxu0 0
        %1299 = vmatpush1.bf16.msra.mxu0 0
        %1300 = vmatprep.subr.bf16.mxu0 0
        %1301 = vmatpush1.bf16.msra.mxu0 0
        %1302 = vmatprep.subr.bf16.mxu0 0
        %1303 = vmatpush1.bf16.msra.mxu0 0
        %1304 = vmatprep.mubr.bf16.mxu0 0
        %1305 = vmatmul.mubr.bf16.gmra.mrb[0].mxu0 %v1270
        %v1306 = vpop.f32.mrb[0].mxu0
        %v1307 = vadd.f32 0.0, %v1306
        %v1308 = vpop.f32.mrb[0].mxu0
        %v1309 = vpop.f32.mrb[0].mxu0
        %v1310 = vpop.f32.mrb[0].mxu0
        %1311 = vdwg.mxu0
        %v1312 = vpack.c.bf16 %v1172, %v1172
        %1313 = vrot.lane.b32.xlu0 %v1076, 104
        %v1314 = vpop.permute.xlu0 %1313
        %v1317 = vsel %vm536, %v1312, 0
        %1319 = vmatprep.subr.bf16.mxu0 0
        %1320 = vmatpush1.bf16.msra.mxu0 %v1314
        %1321 = vmatprep.subr.bf16.mxu0 0
        %1322 = vmatpush1.bf16.msra.mxu0 0
        %1323 = vmatprep.subr.bf16.mxu0 0
        %1324 = vmatpush1.bf16.msra.mxu0 0
        %1325 = vmatprep.subr.bf16.mxu0 0
        %1326 = vmatpush1.bf16.msra.mxu0 0
        %1327 = vmatprep.subr.bf16.mxu0 0
        %1328 = vmatpush1.bf16.msra.mxu0 0
        %1329 = vmatprep.subr.bf16.mxu0 0
        %1330 = vmatpush1.bf16.msra.mxu0 0
        %1331 = vmatprep.subr.bf16.mxu0 0
        %1332 = vmatpush1.bf16.msra.mxu0 0
        %1333 = vmatprep.subr.bf16.mxu0 0
        %1334 = vmatpush1.bf16.msra.mxu0 0
        %1335 = vmatprep.subr.bf16.mxu0 0
        %1336 = vmatpush1.bf16.msra.mxu0 0
        %1337 = vmatprep.subr.bf16.mxu0 0
        %1338 = vmatpush1.bf16.msra.mxu0 0
        %1339 = vmatprep.subr.bf16.mxu0 0
        %1340 = vmatpush1.bf16.msra.mxu0 0
        %1341 = vmatprep.subr.bf16.mxu0 0
        %1342 = vmatpush1.bf16.msra.mxu0 0
        %1343 = vmatprep.subr.bf16.mxu0 0
        %1344 = vmatpush1.bf16.msra.mxu0 0
        %1345 = vmatprep.subr.bf16.mxu0 0
        %1346 = vmatpush1.bf16.msra.mxu0 0
        %1347 = vmatprep.subr.bf16.mxu0 0
        %1348 = vmatpush1.bf16.msra.mxu0 0
        %1349 = vmatprep.subr.bf16.mxu0 0
        %1350 = vmatpush1.bf16.msra.mxu0 0
        %1351 = vmatprep.mubr.bf16.mxu0 0
        %1352 = vmatmul.mubr.bf16.gmra.mrb[0].mxu0 %v1317
        %v1353 = vpop.f32.mrb[0].mxu0
        %v1354 = vadd.f32 0.0, %v1353
        %v1355 = vpop.f32.mrb[0].mxu0
        %v1356 = vpop.f32.mrb[0].mxu0
        %v1357 = vpop.f32.mrb[0].mxu0
        %1358 = vdwg.mxu0
        %1360 = vrot.lane.b32.xlu0 %v1260, 8
        %v1361 = vpop.permute.xlu0 %1360
        %1364 = vrot.lane.b32.xlu0 %v1307, 16
        %v1365 = vpop.permute.xlu0 %1364
        %1368 = vrot.lane.b32.xlu0 %v1354, 24
        %v1369 = vpop.permute.xlu0 %1368
        %v1371 = vsel %vm1067, %v1212, %v1361
        %v1372 = vsel %vm536, %v1371, %v1365
        %v1373 = vsel %vm1070, %v1372, %v1369
        %s1374 = scalar_lea.vmem [#allocation4], 8
        %1375 = vst.msk [vmem:[%s1374] sm:$0xff] %vm614, %v1373
        %v1376 = vld [vmem:[#allocation4] sm:$0xff]
        %v1377 = vld [vmem:[#allocation4 + $0x8] sm:$0xff]
        %v1378 = vpack.c.bf16 %v1377, %v1376
        %v1379 = vld [vmem:[#allocation14] sm:$0xf]
        %v1380 = vld [vmem:[#allocation14 + $0x4] sm:$0xf]
        %v1381 = vld [vmem:[#allocation14 + $0x8] sm:$0xf]
        %v1382 = vld [vmem:[#allocation14 + $0xc] sm:$0xf]
        %v1383 = vlaneseq
        %v1384 = vshrl.u32 %v1383, 7
        %v1385 = vsub.s32 3, %v1384
        %v1386 = vrot.slane %v508, %v1385
        %v1391 = vunpack.c.l.b16 %v1379
        %v1392 = vunpack.c.l.b16 %v1380
        %v1393 = vunpack.c.l.b16 %v1381
        %v1394 = vunpack.c.l.b16 %v1382
        %v1395 = vpack.c.b16 %v1392, %v1391
        %v1396 = vpack.c.b16 %v1394, %v1393
        %v1400 = vsel %vm614, %v1378, 0
        %1402 = vmatprep.subr.bf16.mxu0 0
        %1403 = vmatpush1.bf16.msra.mxu0 %v1395
        %1404 = vmatprep.subr.bf16.mxu0 0
        %1405 = vmatpush1.bf16.msra.mxu0 %v1396
        %1406 = vmatprep.subr.bf16.mxu0 0
        %1407 = vmatpush1.bf16.msra.mxu0 0
        %1408 = vmatprep.subr.bf16.mxu0 0
        %1409 = vmatpush1.bf16.msra.mxu0 0
        %1410 = vmatprep.subr.bf16.mxu0 0
        %1411 = vmatpush1.bf16.msra.mxu0 0
        %1412 = vmatprep.subr.bf16.mxu0 0
        %1413 = vmatpush1.bf16.msra.mxu0 0
        %1414 = vmatprep.subr.bf16.mxu0 0
        %1415 = vmatpush1.bf16.msra.mxu0 0
        %1416 = vmatprep.subr.bf16.mxu0 0
        %1417 = vmatpush1.bf16.msra.mxu0 0
        %1418 = vmatprep.subr.bf16.mxu0 0
        %1419 = vmatpush1.bf16.msra.mxu0 0
        %1420 = vmatprep.subr.bf16.mxu0 0
        %1421 = vmatpush1.bf16.msra.mxu0 0
        %1422 = vmatprep.subr.bf16.mxu0 0
        %1423 = vmatpush1.bf16.msra.mxu0 0
        %1424 = vmatprep.subr.bf16.mxu0 0
        %1425 = vmatpush1.bf16.msra.mxu0 0
        %1426 = vmatprep.subr.bf16.mxu0 0
        %1427 = vmatpush1.bf16.msra.mxu0 0
        %1428 = vmatprep.subr.bf16.mxu0 0
        %1429 = vmatpush1.bf16.msra.mxu0 0
        %1430 = vmatprep.subr.bf16.mxu0 0
        %1431 = vmatpush1.bf16.msra.mxu0 0
        %1432 = vmatprep.subr.bf16.mxu0 0
        %1433 = vmatpush1.bf16.msra.mxu0 0
        %1434 = vmatprep.mubr.bf16.mxu0 0
        %1435 = vmatmul.mubr.bf16.gmra.mrb[0].mxu0 %v1400
        %v1436 = vpop.f32.mrb[0].mxu0
        %v1437 = vadd.f32 %v1386, %v1436
        %v1438 = vpop.f32.mrb[0].mxu0
        %v1439 = vpop.f32.mrb[0].mxu0
        %v1440 = vadd.f32 %v1386, %v1439
        %v1441 = vpop.f32.mrb[0].mxu0
        %1442 = vdwg.mxu0
        %v1443 = vpack.c.bf16 %v1440, %v1437
        %v1444 = vld [vmem:[#allocation16] sm:$0xf]
        %v1445 = vld [vmem:[#allocation16 + $0x4] sm:$0xf]
        %v1446 = vld [vmem:[#allocation16 + $0x8] sm:$0xf]
        %v1447 = vld [vmem:[#allocation16 + $0xc] sm:$0xf]
        %v1449 = vlaneseq
        %v1450 = vshrl.u32 %v1449, 7
        %v1451 = vsub.s32 0, %v1450
        %v1452 = vrot.slane %v509, %v1451
        %v1458 = vunpack.c.l.b16 %v1444
        %v1459 = vunpack.c.l.b16 %v1445
        %v1460 = vunpack.c.l.b16 %v1446
        %v1461 = vunpack.c.l.b16 %v1447
        %v1462 = vpack.c.b16 %v1459, %v1458
        %v1463 = vpack.c.b16 %v1461, %v1460
        %v1467 = vsel %vm614, %v1443, 0
        %1469 = vmatprep.subr.bf16.mxu0 0
        %1470 = vmatpush1.bf16.msra.mxu0 %v1462
        %1471 = vmatprep.subr.bf16.mxu0 0
        %1472 = vmatpush1.bf16.msra.mxu0 %v1463
        %1473 = vmatprep.subr.bf16.mxu0 0
        %1474 = vmatpush1.bf16.msra.mxu0 0
        %1475 = vmatprep.subr.bf16.mxu0 0
        %1476 = vmatpush1.bf16.msra.mxu0 0
        %1477 = vmatprep.subr.bf16.mxu0 0
        %1478 = vmatpush1.bf16.msra.mxu0 0
        %1479 = vmatprep.subr.bf16.mxu0 0
        %1480 = vmatpush1.bf16.msra.mxu0 0
        %1481 = vmatprep.subr.bf16.mxu0 0
        %1482 = vmatpush1.bf16.msra.mxu0 0
        %1483 = vmatprep.subr.bf16.mxu0 0
        %1484 = vmatpush1.bf16.msra.mxu0 0
        %1485 = vmatprep.subr.bf16.mxu0 0
        %1486 = vmatpush1.bf16.msra.mxu0 0
        %1487 = vmatprep.subr.bf16.mxu0 0
        %1488 = vmatpush1.bf16.msra.mxu0 0
        %1489 = vmatprep.subr.bf16.mxu0 0
        %1490 = vmatpush1.bf16.msra.mxu0 0
        %1491 = vmatprep.subr.bf16.mxu0 0
        %1492 = vmatpush1.bf16.msra.mxu0 0
        %1493 = vmatprep.subr.bf16.mxu0 0
        %1494 = vmatpush1.bf16.msra.mxu0 0
        %1495 = vmatprep.subr.bf16.mxu0 0
        %1496 = vmatpush1.bf16.msra.mxu0 0
        %1497 = vmatprep.subr.bf16.mxu0 0
        %1498 = vmatpush1.bf16.msra.mxu0 0
        %1499 = vmatprep.subr.bf16.mxu0 0
        %1500 = vmatpush1.bf16.msra.mxu0 0
        %1501 = vmatprep.mubr.bf16.mxu0 0
        %1502 = vmatmul.mubr.bf16.gmra.mrb[0].mxu0 %v1467
        %v1503 = vpop.f32.mrb[0].mxu0
        %v1504 = vadd.f32 %v1452, %v1503
        %v1505 = vpop.f32.mrb[0].mxu0
        %v1506 = vpop.f32.mrb[0].mxu0
        %v1507 = vadd.f32 %v1452, %v1506
        %v1508 = vpop.f32.mrb[0].mxu0
        %1509 = vdwg.mxu0
        %v1510 = vtanh.pop %v1504
        %v1511 = vtanh.pop %v1507
        %v1512 = vpack.c.bf16 %v1511, %v1510
        %v1513 = vld [vmem:[#allocation17] sm:$0xf]
        %v1514 = vld [vmem:[#allocation17 + $0x4] sm:$0xf]
        %v1515 = vld [vmem:[#allocation17 + $0x8] sm:$0xf]
        %v1516 = vld [vmem:[#allocation17 + $0xc] sm:$0xf]
        %v1517 = vld [vmem:[#allocation17 + $0x10] sm:$0xf]
        %v1518 = vld [vmem:[#allocation17 + $0x14] sm:$0xf]
        %v1519 = vld [vmem:[#allocation17 + $0x18] sm:$0xf]
        %v1520 = vld [vmem:[#allocation17 + $0x1c] sm:$0xf]
        %v1521 = vld [vmem:[#allocation17 + $0x20] sm:$0xf]
        %v1522 = vld [vmem:[#allocation17 + $0x24] sm:$0xf]
        %v1523 = vld [vmem:[#allocation17 + $0x28] sm:$0xf]
        %v1524 = vld [vmem:[#allocation17 + $0x2c] sm:$0xf]
        %v1525 = vld [vmem:[#allocation17 + $0x30] sm:$0xf]
        %v1526 = vld [vmem:[#allocation17 + $0x34] sm:$0xf]
        %v1527 = vld [vmem:[#allocation17 + $0x38] sm:$0xf]
        %v1528 = vld [vmem:[#allocation17 + $0x3c] sm:$0xf]
        %v1529 = vlaneseq
        %v1530 = vshrl.u32 %v1529, 7
        %v1531 = vsub.s32 4, %v1530
        %v1532 = vrot.slane %v508, %v1531
        %v1549 = vunpack.c.l.b16 %v1513
        %v1550 = vunpack.c.l.b16 %v1514
        %v1551 = vunpack.c.l.b16 %v1515
        %v1552 = vunpack.c.l.b16 %v1516
        %v1553 = vunpack.c.l.b16 %v1517
        %v1554 = vunpack.c.l.b16 %v1518
        %v1555 = vunpack.c.l.b16 %v1519
        %v1556 = vunpack.c.l.b16 %v1520
        %v1557 = vunpack.c.l.b16 %v1521
        %v1558 = vunpack.c.l.b16 %v1522
        %v1559 = vunpack.c.l.b16 %v1523
        %v1560 = vunpack.c.l.b16 %v1524
        %v1561 = vunpack.c.l.b16 %v1525
        %v1562 = vunpack.c.l.b16 %v1526
        %v1563 = vunpack.c.l.b16 %v1527
        %v1564 = vunpack.c.l.b16 %v1528
        %v1565 = vpack.c.b16 %v1550, %v1549
        %v1566 = vpack.c.b16 %v1552, %v1551
        %v1567 = vpack.c.b16 %v1554, %v1553
        %v1568 = vpack.c.b16 %v1556, %v1555
        %v1569 = vpack.c.b16 %v1558, %v1557
        %v1570 = vpack.c.b16 %v1560, %v1559
        %v1571 = vpack.c.b16 %v1562, %v1561
        %v1572 = vpack.c.b16 %v1564, %v1563
        %1581 = vmatprep.subr.bf16.mxu0 0
        %1582 = vmatpush1.bf16.msra.mxu0 %v1565
        %1583 = vmatprep.subr.bf16.mxu0 0
        %1584 = vmatpush1.bf16.msra.mxu0 %v1566
        %1585 = vmatprep.subr.bf16.mxu0 0
        %1586 = vmatpush1.bf16.msra.mxu0 %v1567
        %1587 = vmatprep.subr.bf16.mxu0 0
        %1588 = vmatpush1.bf16.msra.mxu0 %v1568
        %1589 = vmatprep.subr.bf16.mxu0 0
        %1590 = vmatpush1.bf16.msra.mxu0 %v1569
        %1591 = vmatprep.subr.bf16.mxu0 0
        %1592 = vmatpush1.bf16.msra.mxu0 %v1570
        %1593 = vmatprep.subr.bf16.mxu0 0
        %1594 = vmatpush1.bf16.msra.mxu0 %v1571
        %1595 = vmatprep.subr.bf16.mxu0 0
        %1596 = vmatpush1.bf16.msra.mxu0 %v1572
        %1597 = vmatprep.subr.bf16.mxu0 0
        %1598 = vmatpush1.bf16.msra.mxu0 0
        %1599 = vmatprep.subr.bf16.mxu0 0
        %1600 = vmatpush1.bf16.msra.mxu0 0
        %1601 = vmatprep.subr.bf16.mxu0 0
        %1602 = vmatpush1.bf16.msra.mxu0 0
        %1603 = vmatprep.subr.bf16.mxu0 0
        %1604 = vmatpush1.bf16.msra.mxu0 0
        %1605 = vmatprep.subr.bf16.mxu0 0
        %1606 = vmatpush1.bf16.msra.mxu0 0
        %1607 = vmatprep.subr.bf16.mxu0 0
        %1608 = vmatpush1.bf16.msra.mxu0 0
        %1609 = vmatprep.subr.bf16.mxu0 0
        %1610 = vmatpush1.bf16.msra.mxu0 0
        %1611 = vmatprep.subr.bf16.mxu0 0
        %1612 = vmatpush1.bf16.msra.mxu0 0
        %1613 = vmatprep.mubr.bf16.mxu0 0
        %1614 = vmatmul.mubr.bf16.gmra.mrb[0].mxu0 %v1512
        %v1615 = vpop.f32.mrb[0].mxu0
        %v1616 = vadd.f32 %v1532, %v1615
        %v1617 = vpop.f32.mrb[0].mxu0
        %v1618 = vpop.f32.mrb[0].mxu0
        %v1619 = vadd.f32 %v1532, %v1618
        %v1620 = vpop.f32.mrb[0].mxu0
        %1621 = vdwg.mxu0
        %1622 = vst.msk [vmem:[%s504] sm:$0xff] %vm614, %v1616
        %1623 = vst.msk [vmem:[%s504 + $0x8] sm:$0xff] %vm614, %v1619
        %s1624 = sand.u32 %s255, 1
        %s1625 = scalar_lea.sflag [#allocation7], %s1624
        %s1626 = sand.u32 %s255, 1
        %s1627 = smul.addr %s1626, 16
        %s1628 = scalar_lea.vmem [#allocation22], %s1627
        // Predicated region
        $region101: #{tpu_custom_call.1} parent=59 // pred_check
          %p1629 = pneg %p265
        $region102: #{tpu_custom_call.1} parent=59 // pred_check_branch
          %1631 = sbr.rel (%p1629) target = $region104
        $region103: #{tpu_custom_call.1} parent=59 // pred_region
          %s1632 = smul.u32 2, %s32
          %s1634 = ssub.s32 256, 256
          %1635 = vsyncadd %s1625, %s1634
          %s1636 = smul.addr %s1632, 128
          %s1637 = scalar_lea.hbm %s10, %s1636
          %s1638 = sshll.u32 %s1628, 4
          %s1639 = int_to_ptr.vmem [resolvable:$true] %s1638
          %1644 = dma.vmem_to_hbm [thread:$0]  %s1639, 256, %s1637, %s1625, 128, 128, 8
        $region104: #{tpu_custom_call.1} parent=59 // pred_fallthru
          _
      $region60: #{tpu_custom_call.1} parent=5 // pred_fallthru
        _
      %p1645 = scmp.le.s32.totalorder 2, %s27
      // Predicated region
      $region105: #{tpu_custom_call.1} parent=5 // pred_check
        %p1646 = pneg %p1645
      $region106: #{tpu_custom_call.1} parent=5 // pred_check_branch
        %1648 = sbr.rel (%p1646) target = $region108
      $region107: #{tpu_custom_call.1} parent=5 // pred_region
        %s1649 = ssub.s32 %s27, 2
        // Predicated region
        $region109: #{tpu_custom_call.1} parent=107 // pred_check
          %p1650 = pneg %p271
        $region110: #{tpu_custom_call.1} parent=107 // pred_check_branch
          %1652 = sbr.rel (%p1650) target = $region112
        $region111: #{tpu_custom_call.1} parent=107 // pred_region
          %s1653 = sand.u32 %s256, 1
          %s1654 = scalar_lea.sflag [#allocation7], %s1653
          %s1655 = sand.u32 %s256, 1
          %s1656 = smul.addr %s1655, 16
          %s1657 = scalar_lea.vmem [#allocation22], %s1656
          %1658 = dma.done %s1654, 256
        $region112: #{tpu_custom_call.1} parent=107 // pred_fallthru
          _
      $region108: #{tpu_custom_call.1} parent=5 // pred_fallthru
        _
    $region6: #{tpu_custom_call.1} parent=1 // loop_footer
      %s31 = sadd.s32 1, %s27
    $region7: #{tpu_custom_call.1} parent=1 // loop_footer_branch
      %26 = sbr.rel target = $region3
    $region8: #{tpu_custom_call.1} parent=1 // loop_exit
      _
    %1659 = vsyncpa [#allocation6], 1
    %s1660 = scalar_lea.sflag [#allocation6], 1
    %1661 = vsyncpa %s1660, 1
    %1662 = vsyncpa [#allocation9], 1
    %1663 = vsyncpa [#allocation12], 1
    %1664 = vsyncpa [#allocation15], 1
    %1665 = vsyncpa [#allocation18], 1
    %1666 = vsyncpa [#allocation21], 1
    %1667 = vsyncpa [#allocation7], 1
    %s1668 = scalar_lea.sflag [#allocation7], 1
    %1669 = vsyncpa %s1668, 1

// kernel: tpu_custom_call.1
$region0: #{tpu_custom_call.1}
  #allocation0 [shape = 'u32[]', space=smem, size = 0x4, offset = 0x4, fixed_abs, tag = 'smem constant byte address 0x4 - core index']
  #allocation1 [shape = 'u32[144,128]{1,0:T(1,128)}', space=vmem, size = 0x12000, scoped, tag = 'internal scratch']
  #allocation2 [shape = 'bf16[32,32]{1,0:T(16,128)(2,1)}', space=vmem, size = 0x2000, scoped, tag = 'scratch operand']
  #allocation3 [shape = 'bf16[32,32]{1,0:T(16,128)(2,1)}', space=vmem, size = 0x2000, scoped, tag = 'scratch operand']
  #allocation4 [shape = 'f32[16,32]{1,0:T(8,128)}', space=vmem, size = 0x2000, scoped, tag = 'scratch operand']
  %s0 = inlined_call_operand.hbm [shape: bf16[64,16], index: 0, kind: input, shape index: {}]
  %s1 = inlined_call_operand.hbm [shape: bf16[32,32], index: 1, kind: input, shape index: {}]
  %s2 = inlined_call_operand.hbm [shape: bf16[16,32], index: 2, kind: input, shape index: {}]
  %s3 = inlined_call_operand.hbm [shape: bf16[32,32], index: 3, kind: input, shape index: {}]
  %s4 = inlined_call_operand.hbm [shape: bf16[32,32], index: 4, kind: input, shape index: {}]
  %s5 = inlined_call_operand.hbm [shape: bf16[32,32], index: 5, kind: input, shape index: {}]
  %s6 = inlined_call_operand.hbm [shape: bf16[32,128], index: 6, kind: input, shape index: {}]
  %s7 = inlined_call_operand.hbm [shape: bf16[128,32], index: 7, kind: input, shape index: {}]
  %s8 = inlined_call_operand.hbm [shape: f32[8,32], index: 8, kind: input, shape index: {}]
  %s9 = inlined_call_operand.hbm [shape: f32[1,128], index: 9, kind: input, shape index: {}]
  %s10 = inlined_call_operand.hbm [shape: f32[32,32], index: 10, kind: output, shape index: {}]
  %s11 = sld [smem:[#allocation0]]
  $region113: #{tpu_custom_call.1} parent=0
    _
  %s13 = ssub.s32 1, %s11
  %s14 = scalar_select 0, %s13, %s11
  $region1: #{tpu_custom_call.1} parent=0
    #allocation5 [shape = 'u8[16384]{0}', space=vmem, size = 0x4000, scoped, tag = 'input window, operand 0']
    #allocation6 [shape = 's32[2]{0}', space=sflag, size = 0x8, scoped, tag = 'scoped memory for tpu_custom_call.1']
    #allocation7 [shape = 's32[2]{0}', space=sflag, size = 0x8, scoped, tag = 'scoped memory for tpu_custom_call.1']
    #allocation8 [shape = 'u8[8192]{0}', space=vmem, size = 0x2000, scoped, tag = 'input window, operand 1, single buffered']
    #allocation9 [shape = 's32[1]{0}', space=sflag, size = 0x4, scoped, tag = 'scoped memory for tpu_custom_call.1']
    #allocation10 [shape = 'u8[4096]{0}', space=vmem, size = 0x1000, scoped, tag = 'input window, operand 2, single buffered']
    #allocation11 [shape = 'u8[8192]{0}', space=vmem, size = 0x2000, scoped, tag = 'input window, operand 3, single buffered']
    #allocation12 [shape = 's32[1]{0}', space=sflag, size = 0x4, scoped, tag = 'scoped memory for tpu_custom_call.1']
    #allocation13 [shape = 'u8[8192]{0}', space=vmem, size = 0x2000, scoped, tag = 'input window, operand 4, single buffered']
    #allocation14 [shape = 'u8[8192]{0}', space=vmem, size = 0x2000, scoped, tag = 'input window, operand 5, single buffered']
    #allocation15 [shape = 's32[1]{0}', space=sflag, size = 0x4, scoped, tag = 'scoped memory for tpu_custom_call.1']
    #allocation16 [shape = 'u8[8192]{0}', space=vmem, size = 0x2000, scoped, tag = 'input window, operand 6, single buffered']
    #allocation17 [shape = 'u8[32768]{0}', space=vmem, size = 0x8000, scoped, tag = 'input window, operand 7, single buffered']
    #allocation18 [shape = 's32[1]{0}', space=sflag, size = 0x4, scoped, tag = 'scoped memory for tpu_custom_call.1']
    #allocation19 [shape = 'u8[4096]{0}', space=vmem, size = 0x1000, scoped, tag = 'input window, operand 8, single buffered']
    #allocation20 [shape = 'u8[512]{0}', space=vmem, size = 0x400, scoped, tag = 'input window, operand 9, single buffered']
    #allocation21 [shape = 's32[1]{0}', space=sflag, size = 0x4, scoped, tag = 'scoped memory for tpu_custom_call.1']
    #allocation22 [shape = 'u8[16384]{0}', space=vmem, size = 0x4000, scoped, tag = 'output window, operand 0']
    %15 = vsyncpa [#allocation6], 0
    %s16 = scalar_lea.sflag [#allocation6], 1
    %17 = vsyncpa %s16, 0
    %18 = vsyncpa [#allocation9], 0
    %19 = vsyncpa [#allocation12], 0
    %20 = vsyncpa [#allocation15], 0
    %21 = vsyncpa [#allocation18], 0
    %22 = vsyncpa [#allocation21], 0
    %23 = vsyncpa [#allocation7], 0
    %s24 = scalar_lea.sflag [#allocation7], 1
    %25 = vsyncpa %s24, 0
    loop: start=0, step=1, limit=4
    $region2: #{tpu_custom_call.1} parent=1 // loop_pre_header
      _
    $region3: #{tpu_custom_call.1} parent=1 // loop_header
      %s27 = sphi 0, %s31
      %p28 = scmp.ge.s32.totalorder %s27, 4
      %s37 = sphi 0, %s39
      %s40 = sphi 0, %s37
      %s41 = sphi 0, %s40
      %s57 = sphi 0, %s41
      %s61 = sphi 0, %s61
      %s63 = sphi 0, %s61
      %s64 = sphi 0, %s63
      %s78 = sphi 0, %s64
      %s82 = sphi 0, %s82
      %s84 = sphi 0, %s82
      %s85 = sphi 0, %s84
      %s99 = sphi 0, %s85
      %s103 = sphi 0, %s103
      %s105 = sphi 0, %s103
      %s106 = sphi 0, %s105
      %s120 = sphi 0, %s106
      %s124 = sphi 0, %s124
      %s126 = sphi 0, %s124
      %s127 = sphi 0, %s126
      %s141 = sphi 0, %s127
      %s145 = sphi 0, %s145
      %s147 = sphi 0, %s145
      %s148 = sphi 0, %s147
      %s162 = sphi 0, %s148
      %s166 = sphi 0, %s166
      %s168 = sphi 0, %s166
      %s169 = sphi 0, %s168
      %s183 = sphi 0, %s169
      %s187 = sphi 0, %s187
      %s189 = sphi 0, %s187
      %s190 = sphi 0, %s189
      %s204 = sphi 0, %s190
      %s208 = sphi 0, %s208
      %s210 = sphi 0, %s208
      %s211 = sphi 0, %s210
      %s225 = sphi 0, %s211
      %s229 = sphi 0, %s229
      %s231 = sphi 0, %s229
      %s232 = sphi 0, %s231
      %s246 = sphi 0, %s232
      %s252 = sphi 0, %s254
      %s255 = sphi 0, %s252
      %s256 = sphi 0, %s255
      %s272 = sphi 0, %s256
    $region4: #{tpu_custom_call.1} parent=1 // loop_header_branch
      %30 = sbr.rel (%p28) target = $region8
    $region5: #{tpu_custom_call.1} parent=1 // loop_body
      %s32 = ssub.s32 %s27, 1
      %s33 = ssub.s32 %s27, 2
      %s34 = sadd.s32 %s27, 1
      %s35 = ssub.s32 %s27, %s34
      %p36 = scmp.eq.s32.totalorder %s35, 0
      %s38 = sadd.s32 %s37, 1
      %s39 = scalar_select %p36, %s37, %s38
      %p42 = pneg %p36
      %p43 = scmp.eq.s32.totalorder %s27, 1
      %p44 = por %p42, %p43
      %p45 = scmp.ne.s32.totalorder %s37, %s40
      %p46 = scmp.eq.s32.totalorder %s27, 0
      %p47 = por %p45, %p46
      %p48 = scmp.ne.s32.totalorder %s37, %s40
      %p49 = scmp.eq.s32.totalorder %s32, 1
      %p50 = por %p48, %p49
      %p51 = scmp.ne.s32.totalorder %s40, %s41
      %p52 = scmp.eq.s32.totalorder %s32, 0
      %p53 = por %p51, %p52
      %p54 = scmp.ne.s32.totalorder %s40, %s41
      %p55 = scmp.eq.s32.totalorder %s33, 1
      %p56 = por %p54, %p55
      %p58 = scmp.ne.s32.totalorder %s41, %s57
      %p59 = scmp.eq.s32.totalorder %s33, 0
      %p60 = por %p58, %p59
      %s62 = sadd.s32 %s61, 1
      %p65 = scmp.eq.s32.totalorder %s27, 1
      %p66 = scmp.ne.s32.totalorder %s61, %s63
      %p67 = scmp.eq.s32.totalorder %s27, 0
      %p68 = por %p66, %p67
      %p69 = scmp.ne.s32.totalorder %s61, %s63
      %p70 = scmp.eq.s32.totalorder %s32, 1
      %p71 = por %p69, %p70
      %p72 = scmp.ne.s32.totalorder %s63, %s64
      %p73 = scmp.eq.s32.totalorder %s32, 0
      %p74 = por %p72, %p73
      %p75 = scmp.ne.s32.totalorder %s63, %s64
      %p76 = scmp.eq.s32.totalorder %s33, 1
      %p77 = por %p75, %p76
      %p79 = scmp.ne.s32.totalorder %s64, %s78
      %p80 = scmp.eq.s32.totalorder %s33, 0
      %p81 = por %p79, %p80
      %s83 = sadd.s32 %s82, 1
      %p86 = scmp.eq.s32.totalorder %s27, 1
      %p87 = scmp.ne.s32.totalorder %s82, %s84
      %p88 = scmp.eq.s32.totalorder %s27, 0
      %p89 = por %p87, %p88
      %p90 = scmp.ne.s32.totalorder %s82, %s84
      %p91 = scmp.eq.s32.totalorder %s32, 1
      %p92 = por %p90, %p91
      %p93 = scmp.ne.s32.totalorder %s84, %s85
      %p94 = scmp.eq.s32.totalorder %s32, 0
      %p95 = por %p93, %p94
      %p96 = scmp.ne.s32.totalorder %s84, %s85
      %p97 = scmp.eq.s32.totalorder %s33, 1
      %p98 = por %p96, %p97
      %p100 = scmp.ne.s32.totalorder %s85, %s99
      %p101 = scmp.eq.s32.totalorder %s33, 0
      %p102 = por %p100, %p101
      %s104 = sadd.s32 %s103, 1
      %p107 = scmp.eq.s32.totalorder %s27, 1
      %p108 = scmp.ne.s32.totalorder %s103, %s105
      %p109 = scmp.eq.s32.totalorder %s27, 0
      %p110 = por %p108, %p109
      %p111 = scmp.ne.s32.totalorder %s103, %s105
      %p112 = scmp.eq.s32.totalorder %s32, 1
      %p113 = por %p111, %p112
      %p114 = scmp.ne.s32.totalorder %s105, %s106
      %p115 = scmp.eq.s32.totalorder %s32, 0
      %p116 = por %p114, %p115
      %p117 = scmp.ne.s32.totalorder %s105, %s106
      %p118 = scmp.eq.s32.totalorder %s33, 1
      %p119 = por %p117, %p118
      %p121 = scmp.ne.s32.totalorder %s106, %s120
      %p122 = scmp.eq.s32.totalorder %s33, 0
      %p123 = por %p121, %p122
      %s125 = sadd.s32 %s124, 1
      %p128 = scmp.eq.s32.totalorder %s27, 1
      %p129 = scmp.ne.s32.totalorder %s124, %s126
      %p130 = scmp.eq.s32.totalorder %s27, 0
      %p131 = por %p129, %p130
      %p132 = scmp.ne.s32.totalorder %s124, %s126
      %p133 = scmp.eq.s32.totalorder %s32, 1
      %p134 = por %p132, %p133
      %p135 = scmp.ne.s32.totalorder %s126, %s127
      %p136 = scmp.eq.s32.totalorder %s32, 0
      %p137 = por %p135, %p136
      %p138 = scmp.ne.s32.totalorder %s126, %s127
      %p139 = scmp.eq.s32.totalorder %s33, 1
      %p140 = por %p138, %p139
      %p142 = scmp.ne.s32.totalorder %s127, %s141
      %p143 = scmp.eq.s32.totalorder %s33, 0
      %p144 = por %p142, %p143
      %s146 = sadd.s32 %s145, 1
      %p149 = scmp.eq.s32.totalorder %s27, 1
      %p150 = scmp.ne.s32.totalorder %s145, %s147
      %p151 = scmp.eq.s32.totalorder %s27, 0
      %p152 = por %p150, %p151
      %p153 = scmp.ne.s32.totalorder %s145, %s147
      %p154 = scmp.eq.s32.totalorder %s32, 1
      %p155 = por %p153, %p154
      %p156 = scmp.ne.s32.totalorder %s147, %s148
      %p157 = scmp.eq.s32.totalorder %s32, 0
      %p158 = por %p156, %p157
      %p159 = scmp.ne.s32.totalorder %s147, %s148
      %p160 = scmp.eq.s32.totalorder %s33, 1
      %p161 = por %p159, %p160
      %p163 = scmp.ne.s32.totalorder %s148, %s162
      %p164 = scmp.eq.s32.totalorder %s33, 0
      %p165 = por %p163, %p164
      %s167 = sadd.s32 %s166, 1
      %p170 = scmp.eq.s32.totalorder %s27, 1
      %p171 = scmp.ne.s32.totalorder %s166, %s168
      %p172 = scmp.eq.s32.totalorder %s27, 0
      %p173 = por %p171, %p172
      %p174 = scmp.ne.s32.totalorder %s166, %s168
      %p175 = scmp.eq.s32.totalorder %s32, 1
      %p176 = por %p174, %p175
      %p177 = scmp.ne.s32.totalorder %s168, %s169
      %p178 = scmp.eq.s32.totalorder %s32, 0
      %p179 = por %p177, %p178
      %p180 = scmp.ne.s32.totalorder %s168, %s169
      %p181 = scmp.eq.s32.totalorder %s33, 1
      %p182 = por %p180, %p181
      %p184 = scmp.ne.s32.totalorder %s169, %s183
      %p185 = scmp.eq.s32.totalorder %s33, 0
      %p186 = por %p184, %p185
      %s188 = sadd.s32 %s187, 1
      %p191 = scmp.eq.s32.totalorder %s27, 1
      %p192 = scmp.ne.s32.totalorder %s187, %s189
      %p193 = scmp.eq.s32.totalorder %s27, 0
      %p194 = por %p192, %p193
      %p195 = scmp.ne.s32.totalorder %s187, %s189
      %p196 = scmp.eq.s32.totalorder %s32, 1
      %p197 = por %p195, %p196
      %p198 = scmp.ne.s32.totalorder %s189, %s190
      %p199 = scmp.eq.s32.totalorder %s32, 0
      %p200 = por %p198, %p199
      %p201 = scmp.ne.s32.totalorder %s189, %s190
      %p202 = scmp.eq.s32.totalorder %s33, 1
      %p203 = por %p201, %p202
      %p205 = scmp.ne.s32.totalorder %s190, %s204
      %p206 = scmp.eq.s32.totalorder %s33, 0
      %p207 = por %p205, %p206
      %s209 = sadd.s32 %s208, 1
      %p212 = scmp.eq.s32.totalorder %s27, 1
      %p213 = scmp.ne.s32.totalorder %s208, %s210
      %p214 = scmp.eq.s32.totalorder %s27, 0
      %p215 = por %p213, %p214
      %p216 = scmp.ne.s32.totalorder %s208, %s210
      %p217 = scmp.eq.s32.totalorder %s32, 1
      %p218 = por %p216, %p217
      %p219 = scmp.ne.s32.totalorder %s210, %s211
      %p220 = scmp.eq.s32.totalorder %s32, 0
      %p221 = por %p219, %p220
      %p222 = scmp.ne.s32.totalorder %s210, %s211
      %p223 = scmp.eq.s32.totalorder %s33, 1
      %p224 = por %p222, %p223
      %p226 = scmp.ne.s32.totalorder %s211, %s225
      %p227 = scmp.eq.s32.totalorder %s33, 0
      %p228 = por %p226, %p227
      %s230 = sadd.s32 %s229, 1
      %p233 = scmp.eq.s32.totalorder %s27, 1
      %p234 = scmp.ne.s32.totalorder %s229, %s231
      %p235 = scmp.eq.s32.totalorder %s27, 0
      %p236 = por %p234, %p235
      %p237 = scmp.ne.s32.totalorder %s229, %s231
      %p238 = scmp.eq.s32.totalorder %s32, 1
      %p239 = por %p237, %p238
      %p240 = scmp.ne.s32.totalorder %s231, %s232
      %p241 = scmp.eq.s32.totalorder %s32, 0
      %p242 = por %p240, %p241
      %p243 = scmp.ne.s32.totalorder %s231, %s232
      %p244 = scmp.eq.s32.totalorder %s33, 1
      %p245 = por %p243, %p244
      %p247 = scmp.ne.s32.totalorder %s232, %s246
      %p248 = scmp.eq.s32.totalorder %s33, 0
      %p249 = por %p247, %p248
      %s250 = ssub.s32 %s27, %s34
      %p251 = scmp.eq.s32.totalorder %s250, 0
      %s253 = sadd.s32 %s252, 1
      %s254 = scalar_select %p251, %s252, %s253
      %p257 = pneg %p251
      %p258 = scmp.eq.s32.totalorder %s27, 1
      %p259 = por %p257, %p258
      %p260 = scmp.ne.s32.totalorder %s252, %s255
      %p261 = scmp.eq.s32.totalorder %s27, 0
      %p262 = por %p260, %p261
      %p263 = scmp.ne.s32.totalorder %s252, %s255
      %p264 = scmp.eq.s32.totalorder %s32, 1
      %p265 = por %p263, %p264
      %p266 = scmp.ne.s32.totalorder %s255, %s256
      %p267 = scmp.eq.s32.totalorder %s32, 0
      %p268 = por %p266, %p267
      %p269 = scmp.ne.s32.totalorder %s255, %s256
      %p270 = scmp.eq.s32.totalorder %s33, 1
      %p271 = por %p269, %p270
      %p273 = scmp.ne.s32.totalorder %s256, %s272
      %p274 = scmp.eq.s32.totalorder %s33, 0
      %p275 = por %p273, %p274
      %p276 = scmp.le.s32.totalorder 1, %s27
      %p277 = scmp.lt.s32.totalorder %s27, 3
      %p278 = pnand %p276, %p277
      %p279 = pneg %p278
      // Predicated region
      $region9: #{tpu_custom_call.1} parent=5 // pred_check
        _
      $region10: #{tpu_custom_call.1} parent=5 // pred_check_branch
        %281 = sbr.rel (%p278) target = $region12
      $region11: #{tpu_custom_call.1} parent=5 // pred_region
        %s282 = ssub.s32 %s27, 1
        // Predicated region
        $region13: #{tpu_custom_call.1} parent=11 // pred_check
          %p283 = pneg %p74
        $region14: #{tpu_custom_call.1} parent=11 // pred_check_branch
          %285 = sbr.rel (%p283) target = $region16
        $region15: #{tpu_custom_call.1} parent=11 // pred_region
          %s287 = ssub.s32 256, 256
          %288 = vsyncadd [#allocation9], %s287
          %s289 = sshll.u32 [#allocation8], 4
          %s290 = int_to_ptr.vmem [resolvable:$true] %s289
          %295 = dma.hbm_to_vmem [thread:$0]  %s1, 256, %s290, [#allocation9], 64, 64, 4
        $region16: #{tpu_custom_call.1} parent=11 // pred_fallthru
          _
        // Predicated region
        $region17: #{tpu_custom_call.1} parent=11 // pred_check
          %p296 = pneg %p95
        $region18: #{tpu_custom_call.1} parent=11 // pred_check_branch
          %298 = sbr.rel (%p296) target = $region20
        $region19: #{tpu_custom_call.1} parent=11 // pred_region
          %s300 = ssub.s32 128, 128
          %301 = vsyncadd [#allocation9], %s300
          %s302 = sshll.u32 [#allocation10], 4
          %s303 = int_to_ptr.vmem [resolvable:$true] %s302
          %308 = dma.hbm_to_vmem [thread:$0]  %s2, 128, %s303, [#allocation9], 64, 64, 4
        $region20: #{tpu_custom_call.1} parent=11 // pred_fallthru
          _
        // Predicated region
        $region21: #{tpu_custom_call.1} parent=11 // pred_check
          %p309 = pneg %p116
        $region22: #{tpu_custom_call.1} parent=11 // pred_check_branch
          %311 = sbr.rel (%p309) target = $region24
        $region23: #{tpu_custom_call.1} parent=11 // pred_region
          %s313 = ssub.s32 256, 256
          %314 = vsyncadd [#allocation12], %s313
          %s315 = sshll.u32 [#allocation11], 4
          %s316 = int_to_ptr.vmem [resolvable:$true] %s315
          %321 = dma.hbm_to_vmem [thread:$0]  %s3, 256, %s316, [#allocation12], 64, 64, 4
        $region24: #{tpu_custom_call.1} parent=11 // pred_fallthru
          _
        // Predicated region
        $region25: #{tpu_custom_call.1} parent=11 // pred_check
          %p322 = pneg %p137
        $region26: #{tpu_custom_call.1} parent=11 // pred_check_branch
          %324 = sbr.rel (%p322) target = $region28
        $region27: #{tpu_custom_call.1} parent=11 // pred_region
          %s326 = ssub.s32 256, 256
          %327 = vsyncadd [#allocation12], %s326
          %s328 = sshll.u32 [#allocation13], 4
          %s329 = int_to_ptr.vmem [resolvable:$true] %s328
          %334 = dma.hbm_to_vmem [thread:$0]  %s4, 256, %s329, [#allocation12], 64, 64, 4
        $region28: #{tpu_custom_call.1} parent=11 // pred_fallthru
          _
        // Predicated region
        $region29: #{tpu_custom_call.1} parent=11 // pred_check
          %p335 = pneg %p158
        $region30: #{tpu_custom_call.1} parent=11 // pred_check_branch
          %337 = sbr.rel (%p335) target = $region32
        $region31: #{tpu_custom_call.1} parent=11 // pred_region
          %s339 = ssub.s32 256, 256
          %340 = vsyncadd [#allocation15], %s339
          %s341 = sshll.u32 [#allocation14], 4
          %s342 = int_to_ptr.vmem [resolvable:$true] %s341
          %347 = dma.hbm_to_vmem [thread:$0]  %s5, 256, %s342, [#allocation15], 64, 64, 4
        $region32: #{tpu_custom_call.1} parent=11 // pred_fallthru
          _
        // Predicated region
        $region33: #{tpu_custom_call.1} parent=11 // pred_check
          %p348 = pneg %p179
        $region34: #{tpu_custom_call.1} parent=11 // pred_check_branch
          %350 = sbr.rel (%p348) target = $region36
        $region35: #{tpu_custom_call.1} parent=11 // pred_region
          %s352 = ssub.s32 256, 256
          %353 = vsyncadd [#allocation15], %s352
          %s354 = sshll.u32 [#allocation16], 4
          %s355 = int_to_ptr.vmem [resolvable:$true] %s354
          %360 = dma.hbm_to_vmem [thread:$0]  %s6, 256, %s355, [#allocation15], 64, 64, 4
        $region36: #{tpu_custom_call.1} parent=11 // pred_fallthru
          _
        // Predicated region
        $region37: #{tpu_custom_call.1} parent=11 // pred_check
          %p361 = pneg %p200
        $region38: #{tpu_custom_call.1} parent=11 // pred_check_branch
          %363 = sbr.rel (%p361) target = $region40
        $region39: #{tpu_custom_call.1} parent=11 // pred_region
          %s365 = ssub.s32 1024, 1024
          %366 = vsyncadd [#allocation18], %s365
          %s367 = sshll.u32 [#allocation17], 4
          %s368 = int_to_ptr.vmem [resolvable:$true] %s367
          %373 = dma.hbm_to_vmem [thread:$0]  %s7, 1024, %s368, [#allocation18], 64, 64, 4
        $region40: #{tpu_custom_call.1} parent=11 // pred_fallthru
          _
        // Predicated region
        $region41: #{tpu_custom_call.1} parent=11 // pred_check
          %p374 = pneg %p221
        $region42: #{tpu_custom_call.1} parent=11 // pred_check_branch
          %376 = sbr.rel (%p374) target = $region44
        $region43: #{tpu_custom_call.1} parent=11 // pred_region
          %s378 = ssub.s32 128, 128
          %379 = vsyncadd [#allocation18], %s378
          %s381 = sshll.u32 [#allocation19], 4
          %s382 = int_to_ptr.vmem [resolvable:$true] %s381
          %384 = dma.hbm_to_vmem [thread:$0]  %s8, 128, %s382, [#allocation18]
        $region44: #{tpu_custom_call.1} parent=11 // pred_fallthru
          _
        // Predicated region
        $region45: #{tpu_custom_call.1} parent=11 // pred_check
          %p385 = pneg %p242
        $region46: #{tpu_custom_call.1} parent=11 // pred_check_branch
          %387 = sbr.rel (%p385) target = $region48
        $region47: #{tpu_custom_call.1} parent=11 // pred_region
          %s389 = ssub.s32 16, 16
          %390 = vsyncadd [#allocation21], %s389
          %s392 = sshll.u32 [#allocation20], 4
          %s393 = int_to_ptr.vmem [resolvable:$true] %s392
          %395 = dma.hbm_to_vmem [thread:$0]  %s9, 16, %s393, [#allocation21]
        $region48: #{tpu_custom_call.1} parent=11 // pred_fallthru
          _
      $region12: #{tpu_custom_call.1} parent=5 // pred_fallthru
        _
      %p396 = scmp.lt.s32.totalorder %s27, 2
      // Predicated region
      $region49: #{tpu_custom_call.1} parent=5 // pred_check
        %p397 = pneg %p396
      $region50: #{tpu_custom_call.1} parent=5 // pred_check_branch
        %399 = sbr.rel (%p397) target = $region52
      $region51: #{tpu_custom_call.1} parent=5 // pred_region
        // Predicated region
        $region53: #{tpu_custom_call.1} parent=51 // pred_check
          %p400 = pneg %p47
        $region54: #{tpu_custom_call.1} parent=51 // pred_check_branch
          %402 = sbr.rel (%p400) target = $region56
        $region55: #{tpu_custom_call.1} parent=51 // pred_region
          %s403 = sand.u32 %s37, 1
          %s404 = scalar_lea.sflag [#allocation6], %s403
          %s405 = sand.u32 %s37, 1
          %s406 = smul.addr %s405, 16
          %s407 = scalar_lea.vmem [#allocation5], %s406
          %s408 = smul.u32 4, %s27
          %s410 = ssub.s32 256, 256
          %411 = vsyncadd %s404, %s410
          %s412 = smul.addr %s408, 64
          %s413 = scalar_lea.hbm %s0, %s412
          %s414 = sshll.u32 %s407, 4
          %s415 = int_to_ptr.vmem [resolvable:$true] %s414
          %420 = dma.hbm_to_vmem [thread:$0]  %s413, 256, %s415, %s404, 64, 64, 4
        $region56: #{tpu_custom_call.1} parent=51 // pred_fallthru
          _
      $region52: #{tpu_custom_call.1} parent=5 // pred_fallthru
        _
      %p421 = scmp.le.s32.totalorder 1, %s27
      %p422 = scmp.lt.s32.totalorder %s27, 3
      %p423 = pnand %p421, %p422
      %p424 = pneg %p423
      // Predicated region
      $region57: #{tpu_custom_call.1} parent=5 // pred_check
        _
      $region58: #{tpu_custom_call.1} parent=5 // pred_check_branch
        %426 = sbr.rel (%p423) target = $region60
      $region59: #{tpu_custom_call.1} parent=5 // pred_region
        %s427 = ssub.s32 %s27, 1
        %s428 = sand.u32 %s40, 1
        %s429 = scalar_lea.sflag [#allocation6], %s428
        %s430 = sand.u32 %s40, 1
        %s431 = smul.addr %s430, 16
        %s432 = scalar_lea.vmem [#allocation5], %s431
        // Predicated region
        $region61: #{tpu_custom_call.1} parent=59 // pred_check
          %p433 = pneg %p53
        $region62: #{tpu_custom_call.1} parent=59 // pred_check_branch
          %435 = sbr.rel (%p433) target = $region64
        $region63: #{tpu_custom_call.1} parent=59 // pred_region
          %436 = dma.done %s429, 256
        $region64: #{tpu_custom_call.1} parent=59 // pred_fallthru
          _
        // Predicated region
        $region65: #{tpu_custom_call.1} parent=59 // pred_check
          %p437 = pneg %p74
        $region66: #{tpu_custom_call.1} parent=59 // pred_check_branch
          %439 = sbr.rel (%p437) target = $region68
        $region67: #{tpu_custom_call.1} parent=59 // pred_region
          %440 = dma.done [#allocation9], 256
        $region68: #{tpu_custom_call.1} parent=59 // pred_fallthru
          _
        // Predicated region
        $region69: #{tpu_custom_call.1} parent=59 // pred_check
          %p441 = pneg %p95
        $region70: #{tpu_custom_call.1} parent=59 // pred_check_branch
          %443 = sbr.rel (%p441) target = $region72
        $region71: #{tpu_custom_call.1} parent=59 // pred_region
          %444 = dma.done [#allocation9], 128
        $region72: #{tpu_custom_call.1} parent=59 // pred_fallthru
          _
        // Predicated region
        $region73: #{tpu_custom_call.1} parent=59 // pred_check
          %p445 = pneg %p116
        $region74: #{tpu_custom_call.1} parent=59 // pred_check_branch
          %447 = sbr.rel (%p445) target = $region76
        $region75: #{tpu_custom_call.1} parent=59 // pred_region
          %448 = dma.done [#allocation12], 256
        $region76: #{tpu_custom_call.1} parent=59 // pred_fallthru
          _
        // Predicated region
        $region77: #{tpu_custom_call.1} parent=59 // pred_check
          %p449 = pneg %p137
        $region78: #{tpu_custom_call.1} parent=59 // pred_check_branch
          %451 = sbr.rel (%p449) target = $region80
        $region79: #{tpu_custom_call.1} parent=59 // pred_region
          %452 = dma.done [#allocation12], 256
        $region80: #{tpu_custom_call.1} parent=59 // pred_fallthru
          _
        // Predicated region
        $region81: #{tpu_custom_call.1} parent=59 // pred_check
          %p453 = pneg %p158
        $region82: #{tpu_custom_call.1} parent=59 // pred_check_branch
          %455 = sbr.rel (%p453) target = $region84
        $region83: #{tpu_custom_call.1} parent=59 // pred_region
          %456 = dma.done [#allocation15], 256
        $region84: #{tpu_custom_call.1} parent=59 // pred_fallthru
          _
        // Predicated region
        $region85: #{tpu_custom_call.1} parent=59 // pred_check
          %p457 = pneg %p179
        $region86: #{tpu_custom_call.1} parent=59 // pred_check_branch
          %459 = sbr.rel (%p457) target = $region88
        $region87: #{tpu_custom_call.1} parent=59 // pred_region
          %460 = dma.done [#allocation15], 256
        $region88: #{tpu_custom_call.1} parent=59 // pred_fallthru
          _
        // Predicated region
        $region89: #{tpu_custom_call.1} parent=59 // pred_check
          %p461 = pneg %p200
        $region90: #{tpu_custom_call.1} parent=59 // pred_check_branch
          %463 = sbr.rel (%p461) target = $region92
        $region91: #{tpu_custom_call.1} parent=59 // pred_region
          %464 = dma.done [#allocation18], 1024
        $region92: #{tpu_custom_call.1} parent=59 // pred_fallthru
          _
        // Predicated region
        $region93: #{tpu_custom_call.1} parent=59 // pred_check
          %p465 = pneg %p221
        $region94: #{tpu_custom_call.1} parent=59 // pred_check_branch
          %467 = sbr.rel (%p465) target = $region96
        $region95: #{tpu_custom_call.1} parent=59 // pred_region
          %468 = dma.done [#allocation18], 128
        $region96: #{tpu_custom_call.1} parent=59 // pred_fallthru
          _
        // Predicated region
        $region97: #{tpu_custom_call.1} parent=59 // pred_check
          %p469 = pneg %p242
        $region98: #{tpu_custom_call.1} parent=59 // pred_check_branch
          %471 = sbr.rel (%p469) target = $region100
        $region99: #{tpu_custom_call.1} parent=59 // pred_region
          %472 = dma.done [#allocation21], 16
        $region100: #{tpu_custom_call.1} parent=59 // pred_fallthru
          _
        %s473 = sand.u32 %s40, 1
        %s474 = scalar_lea.sflag [#allocation6], %s473
        %s475 = sand.u32 %s40, 1
        %s476 = smul.addr %s475, 16
        %s477 = scalar_lea.vmem [#allocation5], %s476
        %p478 = pneg %p53
        %p479 = pneg %p50
        %p480 = pneg %p74
        %p481 = pneg %p71
        %p482 = pneg %p95
        %p483 = pneg %p92
        %p484 = pneg %p116
        %p485 = pneg %p113
        %p486 = pneg %p137
        %p487 = pneg %p134
        %p488 = pneg %p158
        %p489 = pneg %p155
        %p490 = pneg %p179
        %p491 = pneg %p176
        %p492 = pneg %p200
        %p493 = pneg %p197
        %p494 = pneg %p221
        %p495 = pneg %p218
        %p496 = pneg %p242
        %p497 = pneg %p239
        %p498 = pneg %p268
        %p499 = pneg %p265
        %s500 = sand.u32 %s255, 1
        %s501 = scalar_lea.sflag [#allocation7], %s500
        %s502 = sand.u32 %s255, 1
        %s503 = smul.addr %s502, 16
        %s504 = scalar_lea.vmem [#allocation22], %s503
        %s505 = smul.u32 4, %s32
        %s506 = smul.u32 2, %s32
        %v508 = vld [vmem:[#allocation19] sm:$0xff]
        %v509 = vld [vmem:[#allocation20] sm:$0x1]
        %v510 = vld [vmem:[%s432] sm:$0xf]
        %v511 = vld [vmem:[%s432 + $0x4] sm:$0xf]
        %v512 = vld [vmem:[%s432 + $0x8] sm:$0xf]
        %v513 = vld [vmem:[%s432 + $0xc] sm:$0xf]
        %v514 = vld [vmem:[#allocation10] sm:$0xf]
        %v515 = vld [vmem:[#allocation10 + $0x4] sm:$0xf]
        %v516 = vlaneseq
        %v517 = vshrl.u32 %v516, 7
        %v518 = vsub.s32 0, %v517
        %v519 = vrot.slane %v508, %v518
        %v524 = vunpack.c.l.b16 %v510
        %v525 = vunpack.c.l.b16 %v511
        %v526 = vunpack.c.l.b16 %v512
        %v527 = vunpack.c.l.b16 %v513
        %v528 = vpack.c.b16 %v525, %v524
        %v529 = vpack.c.b16 %v527, %v526
        %v532 = vunpack.c.l.b16 %v514
        %v533 = vunpack.c.l.b16 %v515
        %v534 = vpack.c.b16 %v533, %v532
        %vm536 = vcmask 130048
        %v538 = vsel %vm536, %v528, 0
        %v541 = vsel %vm536, %v529, 0
        %543 = vmatprep.subr.bf16.mxu0 0
        %544 = vmatpush1.bf16.msra.mxu0 %v534
        %545 = vmatprep.subr.bf16.mxu0 0
        %546 = vmatpush1.bf16.msra.mxu0 0
        %547 = vmatprep.subr.bf16.mxu0 0
        %548 = vmatpush1.bf16.msra.mxu0 0
        %549 = vmatprep.subr.bf16.mxu0 0
        %550 = vmatpush1.bf16.msra.mxu0 0
        %551 = vmatprep.subr.bf16.mxu0 0
        %552 = vmatpush1.bf16.msra.mxu0 0
        %553 = vmatprep.subr.bf16.mxu0 0
        %554 = vmatpush1.bf16.msra.mxu0 0
        %555 = vmatprep.subr.bf16.mxu0 0
        %556 = vmatpush1.bf16.msra.mxu0 0
        %557 = vmatprep.subr.bf16.mxu0 0
        %558 = vmatpush1.bf16.msra.mxu0 0
        %559 = vmatprep.subr.bf16.mxu0 0
        %560 = vmatpush1.bf16.msra.mxu0 0
        %561 = vmatprep.subr.bf16.mxu0 0
        %562 = vmatpush1.bf16.msra.mxu0 0
        %563 = vmatprep.subr.bf16.mxu0 0
        %564 = vmatpush1.bf16.msra.mxu0 0
        %565 = vmatprep.subr.bf16.mxu0 0
        %566 = vmatpush1.bf16.msra.mxu0 0
        %567 = vmatprep.subr.bf16.mxu0 0
        %568 = vmatpush1.bf16.msra.mxu0 0
        %569 = vmatprep.subr.bf16.mxu0 0
        %570 = vmatpush1.bf16.msra.mxu0 0
        %571 = vmatprep.subr.bf16.mxu0 0
        %572 = vmatpush1.bf16.msra.mxu0 0
        %573 = vmatprep.subr.bf16.mxu0 0
        %574 = vmatpush1.bf16.msra.mxu0 0
        %575 = vmatprep.mubr.bf16.mxu0 0
        %576 = vmatmul.mubr.bf16.gmra.mrb[0].mxu0 %v538
        %v577 = vpop.f32.mrb[0].mxu0
        %v578 = vadd.f32 %v519, %v577
        %v579 = vpop.f32.mrb[0].mxu0
        %v580 = vpop.f32.mrb[0].mxu0
        %v581 = vadd.f32 %v519, %v580
        %v582 = vpop.f32.mrb[0].mxu0
        %583 = vmatprep.mubr.bf16.mxu0 0
        %584 = vmatmul.mubr.bf16.gmra.mrb[0].mxu0 %v541
        %v585 = vpop.f32.mrb[0].mxu0
        %v586 = vadd.f32 %v519, %v585
        %v587 = vpop.f32.mrb[0].mxu0
        %v588 = vpop.f32.mrb[0].mxu0
        %v589 = vadd.f32 %v519, %v588
        %v590 = vpop.f32.mrb[0].mxu0
        %591 = vdwg.mxu0
        %v592 = vpack.c.bf16 %v581, %v578
        %v593 = vpack.c.bf16 %v589, %v586
        %v594 = vld [vmem:[#allocation11] sm:$0xf]
        %v595 = vld [vmem:[#allocation11 + $0x4] sm:$0xf]
        %v596 = vld [vmem:[#allocation11 + $0x8] sm:$0xf]
        %v597 = vld [vmem:[#allocation11 + $0xc] sm:$0xf]
        %v598 = vlaneseq
        %v599 = vshrl.u32 %v598, 7
        %v600 = vsub.s32 1, %v599
        %v601 = vrot.slane %v508, %v600
        %v606 = vunpack.c.l.b16 %v594
        %v607 = vunpack.c.l.b16 %v595
        %v608 = vunpack.c.l.b16 %v596
        %v609 = vunpack.c.l.b16 %v597
        %v610 = vpack.c.b16 %v607, %v606
        %v611 = vpack.c.b16 %v609, %v608
        %vm614 = vcmask 261120
        %v616 = vsel %vm614, %v592, 0
        %v619 = vsel %vm614, %v593, 0
        %621 = vmatprep.subr.bf16.mxu0 0
        %622 = vmatpush1.bf16.msra.mxu0 %v610
        %623 = vmatprep.subr.bf16.mxu0 0
        %624 = vmatpush1.bf16.msra.mxu0 %v611
        %625 = vmatprep.subr.bf16.mxu0 0
        %626 = vmatpush1.bf16.msra.mxu0 0
        %627 = vmatprep.subr.bf16.mxu0 0
        %628 = vmatpush1.bf16.msra.mxu0 0
        %629 = vmatprep.subr.bf16.mxu0 0
        %630 = vmatpush1.bf16.msra.mxu0 0
        %631 = vmatprep.subr.bf16.mxu0 0
        %632 = vmatpush1.bf16.msra.mxu0 0
        %633 = vmatprep.subr.bf16.mxu0 0
        %634 = vmatpush1.bf16.msra.mxu0 0
        %635 = vmatprep.subr.bf16.mxu0 0
        %636 = vmatpush1.bf16.msra.mxu0 0
        %637 = vmatprep.subr.bf16.mxu0 0
        %638 = vmatpush1.bf16.msra.mxu0 0
        %639 = vmatprep.subr.bf16.mxu0 0
        %640 = vmatpush1.bf16.msra.mxu0 0
        %641 = vmatprep.subr.bf16.mxu0 0
        %642 = vmatpush1.bf16.msra.mxu0 0
        %643 = vmatprep.subr.bf16.mxu0 0
        %644 = vmatpush1.bf16.msra.mxu0 0
        %645 = vmatprep.subr.bf16.mxu0 0
        %646 = vmatpush1.bf16.msra.mxu0 0
        %647 = vmatprep.subr.bf16.mxu0 0
        %648 = vmatpush1.bf16.msra.mxu0 0
        %649 = vmatprep.subr.bf16.mxu0 0
        %650 = vmatpush1.bf16.msra.mxu0 0
        %651 = vmatprep.subr.bf16.mxu0 0
        %652 = vmatpush1.bf16.msra.mxu0 0
        %653 = vmatprep.mubr.bf16.mxu0 0
        %654 = vmatmul.mubr.bf16.gmra.mrb[0].mxu0 %v616
        %v655 = vpop.f32.mrb[0].mxu0
        %v656 = vadd.f32 %v601, %v655
        %v657 = vpop.f32.mrb[0].mxu0
        %v658 = vpop.f32.mrb[0].mxu0
        %v659 = vadd.f32 %v601, %v658
        %v660 = vpop.f32.mrb[0].mxu0
        %661 = vmatprep.mubr.bf16.mxu0 0
        %662 = vmatmul.mubr.bf16.gmra.mrb[0].mxu0 %v619
        %v663 = vpop.f32.mrb[0].mxu0
        %v664 = vadd.f32 %v601, %v663
        %v665 = vpop.f32.mrb[0].mxu0
        %v666 = vpop.f32.mrb[0].mxu0
        %v667 = vadd.f32 %v601, %v666
        %v668 = vpop.f32.mrb[0].mxu0
        %669 = vdwg.mxu0
        %v670 = vpack.c.bf16 %v659, %v656
        %v671 = vpack.c.bf16 %v667, %v664
        %672 = vst.msk [vmem:[#allocation2] sm:$0xff] %vm614, %v670
        %673 = vst.msk [vmem:[#allocation2 + $0x8] sm:$0xff] %vm614, %v671
        %v674 = vld [vmem:[#allocation13] sm:$0xf]
        %v675 = vld [vmem:[#allocation13 + $0x4] sm:$0xf]
        %v676 = vld [vmem:[#allocation13 + $0x8] sm:$0xf]
        %v677 = vld [vmem:[#allocation13 + $0xc] sm:$0xf]
        %v678 = vlaneseq
        %v679 = vshrl.u32 %v678, 7
        %v680 = vsub.s32 2, %v679
        %v681 = vrot.slane %v508, %v680
        %v686 = vunpack.c.l.b16 %v674
        %v687 = vunpack.c.l.b16 %v675
        %v688 = vunpack.c.l.b16 %v676
        %v689 = vunpack.c.l.b16 %v677
        %v690 = vpack.c.b16 %v687, %v686
        %v691 = vpack.c.b16 %v689, %v688
        %694 = vmatprep.subr.bf16.mxu0 0
        %695 = vmatpush1.bf16.msra.mxu0 %v690
        %696 = vmatprep.subr.bf16.mxu0 0
        %697 = vmatpush1.bf16.msra.mxu0 %v691
        %698 = vmatprep.subr.bf16.mxu0 0
        %699 = vmatpush1.bf16.msra.mxu0 0
        %700 = vmatprep.subr.bf16.mxu0 0
        %701 = vmatpush1.bf16.msra.mxu0 0
        %702 = vmatprep.subr.bf16.mxu0 0
        %703 = vmatpush1.bf16.msra.mxu0 0
        %704 = vmatprep.subr.bf16.mxu0 0
        %705 = vmatpush1.bf16.msra.mxu0 0
        %706 = vmatprep.subr.bf16.mxu0 0
        %707 = vmatpush1.bf16.msra.mxu0 0
        %708 = vmatprep.subr.bf16.mxu0 0
        %709 = vmatpush1.bf16.msra.mxu0 0
        %710 = vmatprep.subr.bf16.mxu0 0
        %711 = vmatpush1.bf16.msra.mxu0 0
        %712 = vmatprep.subr.bf16.mxu0 0
        %713 = vmatpush1.bf16.msra.mxu0 0
        %714 = vmatprep.subr.bf16.mxu0 0
        %715 = vmatpush1.bf16.msra.mxu0 0
        %716 = vmatprep.subr.bf16.mxu0 0
        %717 = vmatpush1.bf16.msra.mxu0 0
        %718 = vmatprep.subr.bf16.mxu0 0
        %719 = vmatpush1.bf16.msra.mxu0 0
        %720 = vmatprep.subr.bf16.mxu0 0
        %721 = vmatpush1.bf16.msra.mxu0 0
        %722 = vmatprep.subr.bf16.mxu0 0
        %723 = vmatpush1.bf16.msra.mxu0 0
        %724 = vmatprep.subr.bf16.mxu0 0
        %725 = vmatpush1.bf16.msra.mxu0 0
        %726 = vmatprep.mubr.bf16.mxu0 0
        %727 = vmatmul.mubr.bf16.gmra.mrb[0].mxu0 %v616
        %v728 = vpop.f32.mrb[0].mxu0
        %v729 = vadd.f32 %v681, %v728
        %v730 = vpop.f32.mrb[0].mxu0
        %v731 = vpop.f32.mrb[0].mxu0
        %v732 = vadd.f32 %v681, %v731
        %v733 = vpop.f32.mrb[0].mxu0
        %734 = vmatprep.mubr.bf16.mxu0 0
        %735 = vmatmul.mubr.bf16.gmra.mrb[0].mxu0 %v619
        %v736 = vpop.f32.mrb[0].mxu0
        %v737 = vadd.f32 %v681, %v736
        %v738 = vpop.f32.mrb[0].mxu0
        %v739 = vpop.f32.mrb[0].mxu0
        %v740 = vadd.f32 %v681, %v739
        %v741 = vpop.f32.mrb[0].mxu0
        %742 = vdwg.mxu0
        %v743 = vpack.c.bf16 %v732, %v729
        %v744 = vpack.c.bf16 %v740, %v737
        %745 = vst.msk [vmem:[#allocation3] sm:$0xff] %vm614, %v743
        %746 = vst.msk [vmem:[#allocation3 + $0x8] sm:$0xff] %vm614, %v744
        %v747 = vld [vmem:[#allocation8] sm:$0xf]
        %v748 = vld [vmem:[#allocation8 + $0x4] sm:$0xf]
        %v749 = vld [vmem:[#allocation8 + $0x8] sm:$0xf]
        %v750 = vld [vmem:[#allocation8 + $0xc] sm:$0xf]
        %v751 = vlaneseq
        %v752 = vand.u32 %v751, 127
        %vm753 = vcmp.lt.s32.totalorder %v752, 8
        %v754 = vsel %vm753, 0.0, -1e+30
        %v755 = vld [vmem:[#allocation2] sm:$0xff]
        %v756 = vld [vmem:[#allocation3] sm:$0xff]
        %v761 = vunpack.c.l.b16 %v747
        %v762 = vunpack.c.l.b16 %v748
        %v763 = vunpack.c.l.b16 %v749
        %v764 = vunpack.c.l.b16 %v750
        %v765 = vpack.c.b16 %v762, %v761
        %v766 = vpack.c.b16 %v764, %v763
        %v768 = vsel %vm614, %v765, 0
        %v771 = vsel %vm614, %v766, 0
        %v774 = vsel %vm614, %v755, 0
        %776 = vmatprep.subr.bf16.mxu0 0
        %777 = vmatpush1.bf16.xpose.msra.mxu0 %v774
        %778 = vmatprep.subr.bf16.mxu0 0
        %779 = vmatpush1.bf16.xpose.msra.mxu0 0
        %780 = vmatprep.subr.bf16.mxu0 0
        %781 = vmatpush1.bf16.xpose.msra.mxu0 0
        %782 = vmatprep.subr.bf16.mxu0 0
        %783 = vmatpush1.bf16.xpose.msra.mxu0 0
        %784 = vmatprep.subr.bf16.mxu0 0
        %785 = vmatpush1.bf16.xpose.msra.mxu0 0
        %786 = vmatprep.subr.bf16.mxu0 0
        %787 = vmatpush1.bf16.xpose.msra.mxu0 0
        %788 = vmatprep.subr.bf16.mxu0 0
        %789 = vmatpush1.bf16.xpose.msra.mxu0 0
        %790 = vmatprep.subr.bf16.mxu0 0
        %791 = vmatpush1.bf16.xpose.msra.mxu0 0
        %792 = vmatprep.subr.bf16.mxu0 0
        %793 = vmatpush1.bf16.xpose.msra.mxu0 0
        %794 = vmatprep.subr.bf16.mxu0 0
        %795 = vmatpush1.bf16.xpose.msra.mxu0 0
        %796 = vmatprep.subr.bf16.mxu0 0
        %797 = vmatpush1.bf16.xpose.msra.mxu0 0
        %798 = vmatprep.subr.bf16.mxu0 0
        %799 = vmatpush1.bf16.xpose.msra.mxu0 0
        %800 = vmatprep.subr.bf16.mxu0 0
        %801 = vmatpush1.bf16.xpose.msra.mxu0 0
        %802 = vmatprep.subr.bf16.mxu0 0
        %803 = vmatpush1.bf16.xpose.msra.mxu0 0
        %804 = vmatprep.subr.bf16.mxu0 0
        %805 = vmatpush1.bf16.xpose.msra.mxu0 0
        %806 = vmatprep.subr.bf16.mxu0 0
        %807 = vmatpush1.bf16.xpose.msra.mxu0 0
        %808 = vmatprep.mubr.bf16.mxu0 0
        %809 = vmatmul.mubr.bf16.gmra.mrb[0].mxu0 %v768
        %v810 = vpop.f32.mrb[0].mxu0
        %v811 = vadd.f32 %v754, %v810
        %v812 = vpop.f32.mrb[0].mxu0
        %v813 = vpop.f32.mrb[0].mxu0
        %v814 = vadd.f32 %v754, %v813
        %v815 = vpop.f32.mrb[0].mxu0
        %816 = vmatprep.mubr.bf16.mxu0 0
        %817 = vmatmul.mubr.bf16.gmra.mrb[0].mxu0 %v771
        %v818 = vpop.f32.mrb[0].mxu0
        %v819 = vadd.f32 %v754, %v818
        %v820 = vpop.f32.mrb[0].mxu0
        %v821 = vpop.f32.mrb[0].mxu0
        %v822 = vadd.f32 %v754, %v821
        %v823 = vpop.f32.mrb[0].mxu0
        %824 = vdwg.mxu0
        %v825 = vsel %vm536, %v811, -inf
        %826 = vmax.xlane.f32.xlu0 %v825
        %v827 = vpop.xlane.xlu0 %826
        %v828 = vsel %vm536, %v814, -inf
        %829 = vmax.xlane.f32.xlu0 %v828
        %v830 = vpop.xlane.xlu0 %829
        %v831 = vsel %vm536, %v819, -inf
        %832 = vmax.xlane.f32.xlu0 %v831
        %v833 = vpop.xlane.xlu0 %832
        %v834 = vsel %vm536, %v822, -inf
        %835 = vmax.xlane.f32.xlu0 %v834
        %v836 = vpop.xlane.xlu0 %835
        %v837 = vsub.f32 %v811, %v827
        %v838 = vsub.f32 %v814, %v830
        %v839 = vsub.f32 %v819, %v833
        %v840 = vsub.f32 %v822, %v836
        %v841 = vmul.f32 %v837, 1.442695
        %v842 = vpow.pop %v841
        %v843 = vmul.f32 %v838, 1.442695
        %v844 = vpow.pop %v843
        %v845 = vmul.f32 %v839, 1.442695
        %v846 = vpow.pop %v845
        %v847 = vmul.f32 %v840, 1.442695
        %v848 = vpow.pop %v847
        %v849 = vsel %vm536, %v842, 0.0
        %850 = vadd.xlane.f32.xlu0 %v849
        %v851 = vpop.xlane.xlu0 %850
        %v852 = vsel %vm536, %v844, 0.0
        %853 = vadd.xlane.f32.xlu0 %v852
        %v854 = vpop.xlane.xlu0 %853
        %v855 = vsel %vm536, %v846, 0.0
        %856 = vadd.xlane.f32.xlu0 %v855
        %v857 = vpop.xlane.xlu0 %856
        %v858 = vsel %vm536, %v848, 0.0
        %859 = vadd.xlane.f32.xlu0 %v858
        %v860 = vpop.xlane.xlu0 %859
        %v861 = vrcp.pop %v851
        %v862 = vrcp.pop %v854
        %v863 = vrcp.pop %v857
        %v864 = vrcp.pop %v860
        %v865 = vmul.f32 %v842, %v861
        %v866 = vmul.f32 %v844, %v862
        %v867 = vmul.f32 %v846, %v863
        %v868 = vmul.f32 %v848, %v864
        %v869 = vpack.c.bf16 %v865, %v865
        %v871 = vsel %vm536, %v869, 0
        %873 = vmatprep.subr.bf16.mxu0 0
        %874 = vmatpush1.bf16.msra.mxu0 %v756
        %875 = vmatprep.subr.bf16.mxu0 0
        %876 = vmatpush1.bf16.msra.mxu0 0
        %877 = vmatprep.subr.bf16.mxu0 0
        %878 = vmatpush1.bf16.msra.mxu0 0
        %879 = vmatprep.subr.bf16.mxu0 0
        %880 = vmatpush1.bf16.msra.mxu0 0
        %881 = vmatprep.subr.bf16.mxu0 0
        %882 = vmatpush1.bf16.msra.mxu0 0
        %883 = vmatprep.subr.bf16.mxu0 0
        %884 = vmatpush1.bf16.msra.mxu0 0
        %885 = vmatprep.subr.bf16.mxu0 0
        %886 = vmatpush1.bf16.msra.mxu0 0
        %887 = vmatprep.subr.bf16.mxu0 0
        %888 = vmatpush1.bf16.msra.mxu0 0
        %889 = vmatprep.subr.bf16.mxu0 0
        %890 = vmatpush1.bf16.msra.mxu0 0
        %891 = vmatprep.subr.bf16.mxu0 0
        %892 = vmatpush1.bf16.msra.mxu0 0
        %893 = vmatprep.subr.bf16.mxu0 0
        %894 = vmatpush1.bf16.msra.mxu0 0
        %895 = vmatprep.subr.bf16.mxu0 0
        %896 = vmatpush1.bf16.msra.mxu0 0
        %897 = vmatprep.subr.bf16.mxu0 0
        %898 = vmatpush1.bf16.msra.mxu0 0
        %899 = vmatprep.subr.bf16.mxu0 0
        %900 = vmatpush1.bf16.msra.mxu0 0
        %901 = vmatprep.subr.bf16.mxu0 0
        %902 = vmatpush1.bf16.msra.mxu0 0
        %903 = vmatprep.subr.bf16.mxu0 0
        %904 = vmatpush1.bf16.msra.mxu0 0
        %905 = vmatprep.mubr.bf16.mxu0 0
        %906 = vmatmul.mubr.bf16.gmra.mrb[0].mxu0 %v871
        %v907 = vpop.f32.mrb[0].mxu0
        %v908 = vadd.f32 0.0, %v907
        %v909 = vpop.f32.mrb[0].mxu0
        %v910 = vpop.f32.mrb[0].mxu0
        %v911 = vpop.f32.mrb[0].mxu0
        %912 = vdwg.mxu0
        %v913 = vpack.c.bf16 %v866, %v866
        %915 = vrot.lane.b32.xlu0 %v756, 120
        %v916 = vpop.permute.xlu0 %915
        %v919 = vsel %vm536, %v913, 0
        %921 = vmatprep.subr.bf16.mxu0 0
        %922 = vmatpush1.bf16.msra.mxu0 %v916
        %923 = vmatprep.subr.bf16.mxu0 0
        %924 = vmatpush1.bf16.msra.mxu0 0
        %925 = vmatprep.subr.bf16.mxu0 0
        %926 = vmatpush1.bf16.msra.mxu0 0
        %927 = vmatprep.subr.bf16.mxu0 0
        %928 = vmatpush1.bf16.msra.mxu0 0
        %929 = vmatprep.subr.bf16.mxu0 0
        %930 = vmatpush1.bf16.msra.mxu0 0
        %931 = vmatprep.subr.bf16.mxu0 0
        %932 = vmatpush1.bf16.msra.mxu0 0
        %933 = vmatprep.subr.bf16.mxu0 0
        %934 = vmatpush1.bf16.msra.mxu0 0
        %935 = vmatprep.subr.bf16.mxu0 0
        %936 = vmatpush1.bf16.msra.mxu0 0
        %937 = vmatprep.subr.bf16.mxu0 0
        %938 = vmatpush1.bf16.msra.mxu0 0
        %939 = vmatprep.subr.bf16.mxu0 0
        %940 = vmatpush1.bf16.msra.mxu0 0
        %941 = vmatprep.subr.bf16.mxu0 0
        %942 = vmatpush1.bf16.msra.mxu0 0
        %943 = vmatprep.subr.bf16.mxu0 0
        %944 = vmatpush1.bf16.msra.mxu0 0
        %945 = vmatprep.subr.bf16.mxu0 0
        %946 = vmatpush1.bf16.msra.mxu0 0
        %947 = vmatprep.subr.bf16.mxu0 0
        %948 = vmatpush1.bf16.msra.mxu0 0
        %949 = vmatprep.subr.bf16.mxu0 0
        %950 = vmatpush1.bf16.msra.mxu0 0
        %951 = vmatprep.subr.bf16.mxu0 0
        %952 = vmatpush1.bf16.msra.mxu0 0
        %953 = vmatprep.mubr.bf16.mxu0 0
        %954 = vmatmul.mubr.bf16.gmra.mrb[0].mxu0 %v919
        %v955 = vpop.f32.mrb[0].mxu0
        %v956 = vadd.f32 0.0, %v955
        %v957 = vpop.f32.mrb[0].mxu0
        %v958 = vpop.f32.mrb[0].mxu0
        %v959 = vpop.f32.mrb[0].mxu0
        %960 = vdwg.mxu0
        %v961 = vpack.c.bf16 %v867, %v867
        %962 = vrot.lane.b32.xlu0 %v756, 112
        %v963 = vpop.permute.xlu0 %962
        %v966 = vsel %vm536, %v961, 0
        %968 = vmatprep.subr.bf16.mxu0 0
        %969 = vmatpush1.bf16.msra.mxu0 %v963
        %970 = vmatprep.subr.bf16.mxu0 0
        %971 = vmatpush1.bf16.msra.mxu0 0
        %972 = vmatprep.subr.bf16.mxu0 0
        %973 = vmatpush1.bf16.msra.mxu0 0
        %974 = vmatprep.subr.bf16.mxu0 0
        %975 = vmatpush1.bf16.msra.mxu0 0
        %976 = vmatprep.subr.bf16.mxu0 0
        %977 = vmatpush1.bf16.msra.mxu0 0
        %978 = vmatprep.subr.bf16.mxu0 0
        %979 = vmatpush1.bf16.msra.mxu0 0
        %980 = vmatprep.subr.bf16.mxu0 0
        %981 = vmatpush1.bf16.msra.mxu0 0
        %982 = vmatprep.subr.bf16.mxu0 0
        %983 = vmatpush1.bf16.msra.mxu0 0
        %984 = vmatprep.subr.bf16.mxu0 0
        %985 = vmatpush1.bf16.msra.mxu0 0
        %986 = vmatprep.subr.bf16.mxu0 0
        %987 = vmatpush1.bf16.msra.mxu0 0
        %988 = vmatprep.subr.bf16.mxu0 0
        %989 = vmatpush1.bf16.msra.mxu0 0
        %990 = vmatprep.subr.bf16.mxu0 0
        %991 = vmatpush1.bf16.msra.mxu0 0
        %992 = vmatprep.subr.bf16.mxu0 0
        %993 = vmatpush1.bf16.msra.mxu0 0
        %994 = vmatprep.subr.bf16.mxu0 0
        %995 = vmatpush1.bf16.msra.mxu0 0
        %996 = vmatprep.subr.bf16.mxu0 0
        %997 = vmatpush1.bf16.msra.mxu0 0
        %998 = vmatprep.subr.bf16.mxu0 0
        %999 = vmatpush1.bf16.msra.mxu0 0
        %1000 = vmatprep.mubr.bf16.mxu0 0
        %1001 = vmatmul.mubr.bf16.gmra.mrb[0].mxu0 %v966
        %v1002 = vpop.f32.mrb[0].mxu0
        %v1003 = vadd.f32 0.0, %v1002
        %v1004 = vpop.f32.mrb[0].mxu0
        %v1005 = vpop.f32.mrb[0].mxu0
        %v1006 = vpop.f32.mrb[0].mxu0
        %1007 = vdwg.mxu0
        %v1008 = vpack.c.bf16 %v868, %v868
        %1009 = vrot.lane.b32.xlu0 %v756, 104
        %v1010 = vpop.permute.xlu0 %1009
        %v1013 = vsel %vm536, %v1008, 0
        %1015 = vmatprep.subr.bf16.mxu0 0
        %1016 = vmatpush1.bf16.msra.mxu0 %v1010
        %1017 = vmatprep.subr.bf16.mxu0 0
        %1018 = vmatpush1.bf16.msra.mxu0 0
        %1019 = vmatprep.subr.bf16.mxu0 0
        %1020 = vmatpush1.bf16.msra.mxu0 0
        %1021 = vmatprep.subr.bf16.mxu0 0
        %1022 = vmatpush1.bf16.msra.mxu0 0
        %1023 = vmatprep.subr.bf16.mxu0 0
        %1024 = vmatpush1.bf16.msra.mxu0 0
        %1025 = vmatprep.subr.bf16.mxu0 0
        %1026 = vmatpush1.bf16.msra.mxu0 0
        %1027 = vmatprep.subr.bf16.mxu0 0
        %1028 = vmatpush1.bf16.msra.mxu0 0
        %1029 = vmatprep.subr.bf16.mxu0 0
        %1030 = vmatpush1.bf16.msra.mxu0 0
        %1031 = vmatprep.subr.bf16.mxu0 0
        %1032 = vmatpush1.bf16.msra.mxu0 0
        %1033 = vmatprep.subr.bf16.mxu0 0
        %1034 = vmatpush1.bf16.msra.mxu0 0
        %1035 = vmatprep.subr.bf16.mxu0 0
        %1036 = vmatpush1.bf16.msra.mxu0 0
        %1037 = vmatprep.subr.bf16.mxu0 0
        %1038 = vmatpush1.bf16.msra.mxu0 0
        %1039 = vmatprep.subr.bf16.mxu0 0
        %1040 = vmatpush1.bf16.msra.mxu0 0
        %1041 = vmatprep.subr.bf16.mxu0 0
        %1042 = vmatpush1.bf16.msra.mxu0 0
        %1043 = vmatprep.subr.bf16.mxu0 0
        %1044 = vmatpush1.bf16.msra.mxu0 0
        %1045 = vmatprep.subr.bf16.mxu0 0
        %1046 = vmatpush1.bf16.msra.mxu0 0
        %1047 = vmatprep.mubr.bf16.mxu0 0
        %1048 = vmatmul.mubr.bf16.gmra.mrb[0].mxu0 %v1013
        %v1049 = vpop.f32.mrb[0].mxu0
        %v1050 = vadd.f32 0.0, %v1049
        %v1051 = vpop.f32.mrb[0].mxu0
        %v1052 = vpop.f32.mrb[0].mxu0
        %v1053 = vpop.f32.mrb[0].mxu0
        %1054 = vdwg.mxu0
        %1056 = vrot.lane.b32.xlu0 %v956, 8
        %v1057 = vpop.permute.xlu0 %1056
        %1060 = vrot.lane.b32.xlu0 %v1003, 16
        %v1061 = vpop.permute.xlu0 %1060
        %1064 = vrot.lane.b32.xlu0 %v1050, 24
        %v1065 = vpop.permute.xlu0 %1064
        %vm1067 = vcmask 64512
        %v1068 = vsel %vm1067, %v908, %v1057
        %v1069 = vsel %vm536, %v1068, %v1061
        %vm1070 = vcmask 195584
        %v1071 = vsel %vm1070, %v1069, %v1065
        %1072 = vst.msk [vmem:[#allocation4] sm:$0xff] %vm614, %v1071
        %s1073 = scalar_lea.vmem [#allocation2], 8
        %v1074 = vld [vmem:[%s1073] sm:$0xff]
        %s1075 = scalar_lea.vmem [#allocation3], 8
        %v1076 = vld [vmem:[%s1075] sm:$0xff]
        %v1078 = vsel %vm614, %v1074, 0
        %1080 = vmatprep.subr.bf16.mxu0 0
        %1081 = vmatpush1.bf16.xpose.msra.mxu0 %v1078
        %1082 = vmatprep.subr.bf16.mxu0 0
        %1083 = vmatpush1.bf16.xpose.msra.mxu0 0
        %1084 = vmatprep.subr.bf16.mxu0 0
        %1085 = vmatpush1.bf16.xpose.msra.mxu0 0
        %1086 = vmatprep.subr.bf16.mxu0 0
        %1087 = vmatpush1.bf16.xpose.msra.mxu0 0
        %1088 = vmatprep.subr.bf16.mxu0 0
        %1089 = vmatpush1.bf16.xpose.msra.mxu0 0
        %1090 = vmatprep.subr.bf16.mxu0 0
        %1091 = vmatpush1.bf16.xpose.msra.mxu0 0
        %1092 = vmatprep.subr.bf16.mxu0 0
        %1093 = vmatpush1.bf16.xpose.msra.mxu0 0
        %1094 = vmatprep.subr.bf16.mxu0 0
        %1095 = vmatpush1.bf16.xpose.msra.mxu0 0
        %1096 = vmatprep.subr.bf16.mxu0 0
        %1097 = vmatpush1.bf16.xpose.msra.mxu0 0
        %1098 = vmatprep.subr.bf16.mxu0 0
        %1099 = vmatpush1.bf16.xpose.msra.mxu0 0
        %1100 = vmatprep.subr.bf16.mxu0 0
        %1101 = vmatpush1.bf16.xpose.msra.mxu0 0
        %1102 = vmatprep.subr.bf16.mxu0 0
        %1103 = vmatpush1.bf16.xpose.msra.mxu0 0
        %1104 = vmatprep.subr.bf16.mxu0 0
        %1105 = vmatpush1.bf16.xpose.msra.mxu0 0
        %1106 = vmatprep.subr.bf16.mxu0 0
        %1107 = vmatpush1.bf16.xpose.msra.mxu0 0
        %1108 = vmatprep.subr.bf16.mxu0 0
        %1109 = vmatpush1.bf16.xpose.msra.mxu0 0
        %1110 = vmatprep.subr.bf16.mxu0 0
        %1111 = vmatpush1.bf16.xpose.msra.mxu0 0
        %1112 = vmatprep.mubr.bf16.mxu0 0
        %1113 = vmatmul.mubr.bf16.gmra.mrb[0].mxu0 %v768
        %v1114 = vpop.f32.mrb[0].mxu0
        %v1115 = vadd.f32 %v754, %v1114
        %v1116 = vpop.f32.mrb[0].mxu0
        %v1117 = vpop.f32.mrb[0].mxu0
        %v1118 = vadd.f32 %v754, %v1117
        %v1119 = vpop.f32.mrb[0].mxu0
        %1120 = vmatprep.mubr.bf16.mxu0 0
        %1121 = vmatmul.mubr.bf16.gmra.mrb[0].mxu0 %v771
        %v1122 = vpop.f32.mrb[0].mxu0
        %v1123 = vadd.f32 %v754, %v1122
        %v1124 = vpop.f32.mrb[0].mxu0
        %v1125 = vpop.f32.mrb[0].mxu0
        %v1126 = vadd.f32 %v754, %v1125
        %v1127 = vpop.f32.mrb[0].mxu0
        %1128 = vdwg.mxu0
        %v1129 = vsel %vm536, %v1115, -inf
        %1130 = vmax.xlane.f32.xlu0 %v1129
        %v1131 = vpop.xlane.xlu0 %1130
        %v1132 = vsel %vm536, %v1118, -inf
        %1133 = vmax.xlane.f32.xlu0 %v1132
        %v1134 = vpop.xlane.xlu0 %1133
        %v1135 = vsel %vm536, %v1123, -inf
        %1136 = vmax.xlane.f32.xlu0 %v1135
        %v1137 = vpop.xlane.xlu0 %1136
        %v1138 = vsel %vm536, %v1126, -inf
        %1139 = vmax.xlane.f32.xlu0 %v1138
        %v1140 = vpop.xlane.xlu0 %1139
        %v1141 = vsub.f32 %v1115, %v1131
        %v1142 = vsub.f32 %v1118, %v1134
        %v1143 = vsub.f32 %v1123, %v1137
        %v1144 = vsub.f32 %v1126, %v1140
        %v1145 = vmul.f32 %v1141, 1.442695
        %v1146 = vpow.pop %v1145
        %v1147 = vmul.f32 %v1142, 1.442695
        %v1148 = vpow.pop %v1147
        %v1149 = vmul.f32 %v1143, 1.442695
        %v1150 = vpow.pop %v1149
        %v1151 = vmul.f32 %v1144, 1.442695
        %v1152 = vpow.pop %v1151
        %v1153 = vsel %vm536, %v1146, 0.0
        %1154 = vadd.xlane.f32.xlu0 %v1153
        %v1155 = vpop.xlane.xlu0 %1154
        %v1156 = vsel %vm536, %v1148, 0.0
        %1157 = vadd.xlane.f32.xlu0 %v1156
        %v1158 = vpop.xlane.xlu0 %1157
        %v1159 = vsel %vm536, %v1150, 0.0
        %1160 = vadd.xlane.f32.xlu0 %v1159
        %v1161 = vpop.xlane.xlu0 %1160
        %v1162 = vsel %vm536, %v1152, 0.0
        %1163 = vadd.xlane.f32.xlu0 %v1162
        %v1164 = vpop.xlane.xlu0 %1163
        %v1165 = vrcp.pop %v1155
        %v1166 = vrcp.pop %v1158
        %v1167 = vrcp.pop %v1161
        %v1168 = vrcp.pop %v1164
        %v1169 = vmul.f32 %v1146, %v1165
        %v1170 = vmul.f32 %v1148, %v1166
        %v1171 = vmul.f32 %v1150, %v1167
        %v1172 = vmul.f32 %v1152, %v1168
        %v1173 = vpack.c.bf16 %v1169, %v1169
        %v1175 = vsel %vm536, %v1173, 0
        %1177 = vmatprep.subr.bf16.mxu0 0
        %1178 = vmatpush1.bf16.msra.mxu0 %v1076
        %1179 = vmatprep.subr.bf16.mxu0 0
        %1180 = vmatpush1.bf16.msra.mxu0 0
        %1181 = vmatprep.subr.bf16.mxu0 0
        %1182 = vmatpush1.bf16.msra.mxu0 0
        %1183 = vmatprep.subr.bf16.mxu0 0
        %1184 = vmatpush1.bf16.msra.mxu0 0
        %1185 = vmatprep.subr.bf16.mxu0 0
        %1186 = vmatpush1.bf16.msra.mxu0 0
        %1187 = vmatprep.subr.bf16.mxu0 0
        %1188 = vmatpush1.bf16.msra.mxu0 0
        %1189 = vmatprep.subr.bf16.mxu0 0
        %1190 = vmatpush1.bf16.msra.mxu0 0
        %1191 = vmatprep.subr.bf16.mxu0 0
        %1192 = vmatpush1.bf16.msra.mxu0 0
        %1193 = vmatprep.subr.bf16.mxu0 0
        %1194 = vmatpush1.bf16.msra.mxu0 0
        %1195 = vmatprep.subr.bf16.mxu0 0
        %1196 = vmatpush1.bf16.msra.mxu0 0
        %1197 = vmatprep.subr.bf16.mxu0 0
        %1198 = vmatpush1.bf16.msra.mxu0 0
        %1199 = vmatprep.subr.bf16.mxu0 0
        %1200 = vmatpush1.bf16.msra.mxu0 0
        %1201 = vmatprep.subr.bf16.mxu0 0
        %1202 = vmatpush1.bf16.msra.mxu0 0
        %1203 = vmatprep.subr.bf16.mxu0 0
        %1204 = vmatpush1.bf16.msra.mxu0 0
        %1205 = vmatprep.subr.bf16.mxu0 0
        %1206 = vmatpush1.bf16.msra.mxu0 0
        %1207 = vmatprep.subr.bf16.mxu0 0
        %1208 = vmatpush1.bf16.msra.mxu0 0
        %1209 = vmatprep.mubr.bf16.mxu0 0
        %1210 = vmatmul.mubr.bf16.gmra.mrb[0].mxu0 %v1175
        %v1211 = vpop.f32.mrb[0].mxu0
        %v1212 = vadd.f32 0.0, %v1211
        %v1213 = vpop.f32.mrb[0].mxu0
        %v1214 = vpop.f32.mrb[0].mxu0
        %v1215 = vpop.f32.mrb[0].mxu0
        %1216 = vdwg.mxu0
        %v1217 = vpack.c.bf16 %v1170, %v1170
        %1219 = vrot.lane.b32.xlu0 %v1076, 120
        %v1220 = vpop.permute.xlu0 %1219
        %v1223 = vsel %vm536, %v1217, 0
        %1225 = vmatprep.subr.bf16.mxu0 0
        %1226 = vmatpush1.bf16.msra.mxu0 %v1220
        %1227 = vmatprep.subr.bf16.mxu0 0
        %1228 = vmatpush1.bf16.msra.mxu0 0
        %1229 = vmatprep.subr.bf16.mxu0 0
        %1230 = vmatpush1.bf16.msra.mxu0 0
        %1231 = vmatprep.subr.bf16.mxu0 0
        %1232 = vmatpush1.bf16.msra.mxu0 0
        %1233 = vmatprep.subr.bf16.mxu0 0
        %1234 = vmatpush1.bf16.msra.mxu0 0
        %1235 = vmatprep.subr.bf16.mxu0 0
        %1236 = vmatpush1.bf16.msra.mxu0 0
        %1237 = vmatprep.subr.bf16.mxu0 0
        %1238 = vmatpush1.bf16.msra.mxu0 0
        %1239 = vmatprep.subr.bf16.mxu0 0
        %1240 = vmatpush1.bf16.msra.mxu0 0
        %1241 = vmatprep.subr.bf16.mxu0 0
        %1242 = vmatpush1.bf16.msra.mxu0 0
        %1243 = vmatprep.subr.bf16.mxu0 0
        %1244 = vmatpush1.bf16.msra.mxu0 0
        %1245 = vmatprep.subr.bf16.mxu0 0
        %1246 = vmatpush1.bf16.msra.mxu0 0
        %1247 = vmatprep.subr.bf16.mxu0 0
        %1248 = vmatpush1.bf16.msra.mxu0 0
        %1249 = vmatprep.subr.bf16.mxu0 0
        %1250 = vmatpush1.bf16.msra.mxu0 0
        %1251 = vmatprep.subr.bf16.mxu0 0
        %1252 = vmatpush1.bf16.msra.mxu0 0
        %1253 = vmatprep.subr.bf16.mxu0 0
        %1254 = vmatpush1.bf16.msra.mxu0 0
        %1255 = vmatprep.subr.bf16.mxu0 0
        %1256 = vmatpush1.bf16.msra.mxu0 0
        %1257 = vmatprep.mubr.bf16.mxu0 0
        %1258 = vmatmul.mubr.bf16.gmra.mrb[0].mxu0 %v1223
        %v1259 = vpop.f32.mrb[0].mxu0
        %v1260 = vadd.f32 0.0, %v1259
        %v1261 = vpop.f32.mrb[0].mxu0
        %v1262 = vpop.f32.mrb[0].mxu0
        %v1263 = vpop.f32.mrb[0].mxu0
        %1264 = vdwg.mxu0
        %v1265 = vpack.c.bf16 %v1171, %v1171
        %1266 = vrot.lane.b32.xlu0 %v1076, 112
        %v1267 = vpop.permute.xlu0 %1266
        %v1270 = vsel %vm536, %v1265, 0
        %1272 = vmatprep.subr.bf16.mxu0 0
        %1273 = vmatpush1.bf16.msra.mxu0 %v1267
        %1274 = vmatprep.subr.bf16.mxu0 0
        %1275 = vmatpush1.bf16.msra.mxu0 0
        %1276 = vmatprep.subr.bf16.mxu0 0
        %1277 = vmatpush1.bf16.msra.mxu0 0
        %1278 = vmatprep.subr.bf16.mxu0 0
        %1279 = vmatpush1.bf16.msra.mxu0 0
        %1280 = vmatprep.subr.bf16.mxu0 0
        %1281 = vmatpush1.bf16.msra.mxu0 0
        %1282 = vmatprep.subr.bf16.mxu0 0
        %1283 = vmatpush1.bf16.msra.mxu0 0
        %1284 = vmatprep.subr.bf16.mxu0 0
        %1285 = vmatpush1.bf16.msra.mxu0 0
        %1286 = vmatprep.subr.bf16.mxu0 0
        %1287 = vmatpush1.bf16.msra.mxu0 0
        %1288 = vmatprep.subr.bf16.mxu0 0
        %1289 = vmatpush1.bf16.msra.mxu0 0
        %1290 = vmatprep.subr.bf16.mxu0 0
        %1291 = vmatpush1.bf16.msra.mxu0 0
        %1292 = vmatprep.subr.bf16.mxu0 0
        %1293 = vmatpush1.bf16.msra.mxu0 0
        %1294 = vmatprep.subr.bf16.mxu0 0
        %1295 = vmatpush1.bf16.msra.mxu0 0
        %1296 = vmatprep.subr.bf16.mxu0 0
        %1297 = vmatpush1.bf16.msra.mxu0 0
        %1298 = vmatprep.subr.bf16.mxu0 0
        %1299 = vmatpush1.bf16.msra.mxu0 0
        %1300 = vmatprep.subr.bf16.mxu0 0
        %1301 = vmatpush1.bf16.msra.mxu0 0
        %1302 = vmatprep.subr.bf16.mxu0 0
        %1303 = vmatpush1.bf16.msra.mxu0 0
        %1304 = vmatprep.mubr.bf16.mxu0 0
        %1305 = vmatmul.mubr.bf16.gmra.mrb[0].mxu0 %v1270
        %v1306 = vpop.f32.mrb[0].mxu0
        %v1307 = vadd.f32 0.0, %v1306
        %v1308 = vpop.f32.mrb[0].mxu0
        %v1309 = vpop.f32.mrb[0].mxu0
        %v1310 = vpop.f32.mrb[0].mxu0
        %1311 = vdwg.mxu0
        %v1312 = vpack.c.bf16 %v1172, %v1172
        %1313 = vrot.lane.b32.xlu0 %v1076, 104
        %v1314 = vpop.permute.xlu0 %1313
        %v1317 = vsel %vm536, %v1312, 0
        %1319 = vmatprep.subr.bf16.mxu0 0
        %1320 = vmatpush1.bf16.msra.mxu0 %v1314
        %1321 = vmatprep.subr.bf16.mxu0 0
        %1322 = vmatpush1.bf16.msra.mxu0 0
        %1323 = vmatprep.subr.bf16.mxu0 0
        %1324 = vmatpush1.bf16.msra.mxu0 0
        %1325 = vmatprep.subr.bf16.mxu0 0
        %1326 = vmatpush1.bf16.msra.mxu0 0
        %1327 = vmatprep.subr.bf16.mxu0 0
        %1328 = vmatpush1.bf16.msra.mxu0 0
        %1329 = vmatprep.subr.bf16.mxu0 0
        %1330 = vmatpush1.bf16.msra.mxu0 0
        %1331 = vmatprep.subr.bf16.mxu0 0
        %1332 = vmatpush1.bf16.msra.mxu0 0
        %1333 = vmatprep.subr.bf16.mxu0 0
        %1334 = vmatpush1.bf16.msra.mxu0 0
        %1335 = vmatprep.subr.bf16.mxu0 0
        %1336 = vmatpush1.bf16.msra.mxu0 0
        %1337 = vmatprep.subr.bf16.mxu0 0
        %1338 = vmatpush1.bf16.msra.mxu0 0
        %1339 = vmatprep.subr.bf16.mxu0 0
        %1340 = vmatpush1.bf16.msra.mxu0 0
        %1341 = vmatprep.subr.bf16.mxu0 0
        %1342 = vmatpush1.bf16.msra.mxu0 0
        %1343 = vmatprep.subr.bf16.mxu0 0
        %1344 = vmatpush1.bf16.msra.mxu0 0
        %1345 = vmatprep.subr.bf16.mxu0 0
        %1346 = vmatpush1.bf16.msra.mxu0 0
        %1347 = vmatprep.subr.bf16.mxu0 0
        %1348 = vmatpush1.bf16.msra.mxu0 0
        %1349 = vmatprep.subr.bf16.mxu0 0
        %1350 = vmatpush1.bf16.msra.mxu0 0
        %1351 = vmatprep.mubr.bf16.mxu0 0
        %1352 = vmatmul.mubr.bf16.gmra.mrb[0].mxu0 %v1317
        %v1353 = vpop.f32.mrb[0].mxu0
        %v1354 = vadd.f32 0.0, %v1353
        %v1355 = vpop.f32.mrb[0].mxu0
        %v1356 = vpop.f32.mrb[0].mxu0
        %v1357 = vpop.f32.mrb[0].mxu0
        %1358 = vdwg.mxu0
        %1360 = vrot.lane.b32.xlu0 %v1260, 8
        %v1361 = vpop.permute.xlu0 %1360
        %1364 = vrot.lane.b32.xlu0 %v1307, 16
        %v1365 = vpop.permute.xlu0 %1364
        %1368 = vrot.lane.b32.xlu0 %v1354, 24
        %v1369 = vpop.permute.xlu0 %1368
        %v1371 = vsel %vm1067, %v1212, %v1361
        %v1372 = vsel %vm536, %v1371, %v1365
        %v1373 = vsel %vm1070, %v1372, %v1369
        %s1374 = scalar_lea.vmem [#allocation4], 8
        %1375 = vst.msk [vmem:[%s1374] sm:$0xff] %vm614, %v1373
        %v1376 = vld [vmem:[#allocation4] sm:$0xff]
        %v1377 = vld [vmem:[#allocation4 + $0x8] sm:$0xff]
        %v1378 = vpack.c.bf16 %v1377, %v1376
        %v1379 = vld [vmem:[#allocation14] sm:$0xf]
        %v1380 = vld [vmem:[#allocation14 + $0x4] sm:$0xf]
        %v1381 = vld [vmem:[#allocation14 + $0x8] sm:$0xf]
        %v1382 = vld [vmem:[#allocation14 + $0xc] sm:$0xf]
        %v1383 = vlaneseq
        %v1384 = vshrl.u32 %v1383, 7
        %v1385 = vsub.s32 3, %v1384
        %v1386 = vrot.slane %v508, %v1385
        %v1391 = vunpack.c.l.b16 %v1379
        %v1392 = vunpack.c.l.b16 %v1380
        %v1393 = vunpack.c.l.b16 %v1381
        %v1394 = vunpack.c.l.b16 %v1382
        %v1395 = vpack.c.b16 %v1392, %v1391
        %v1396 = vpack.c.b16 %v1394, %v1393
        %v1400 = vsel %vm614, %v1378, 0
        %1402 = vmatprep.subr.bf16.mxu0 0
        %1403 = vmatpush1.bf16.msra.mxu0 %v1395
        %1404 = vmatprep.subr.bf16.mxu0 0
        %1405 = vmatpush1.bf16.msra.mxu0 %v1396
        %1406 = vmatprep.subr.bf16.mxu0 0
        %1407 = vmatpush1.bf16.msra.mxu0 0
        %1408 = vmatprep.subr.bf16.mxu0 0
        %1409 = vmatpush1.bf16.msra.mxu0 0
        %1410 = vmatprep.subr.bf16.mxu0 0
        %1411 = vmatpush1.bf16.msra.mxu0 0
        %1412 = vmatprep.subr.bf16.mxu0 0
        %1413 = vmatpush1.bf16.msra.mxu0 0
        %1414 = vmatprep.subr.bf16.mxu0 0
        %1415 = vmatpush1.bf16.msra.mxu0 0
        %1416 = vmatprep.subr.bf16.mxu0 0
        %1417 = vmatpush1.bf16.msra.mxu0 0
        %1418 = vmatprep.subr.bf16.mxu0 0
        %1419 = vmatpush1.bf16.msra.mxu0 0
        %1420 = vmatprep.subr.bf16.mxu0 0
        %1421 = vmatpush1.bf16.msra.mxu0 0
        %1422 = vmatprep.subr.bf16.mxu0 0
        %1423 = vmatpush1.bf16.msra.mxu0 0
        %1424 = vmatprep.subr.bf16.mxu0 0
        %1425 = vmatpush1.bf16.msra.mxu0 0
        %1426 = vmatprep.subr.bf16.mxu0 0
        %1427 = vmatpush1.bf16.msra.mxu0 0
        %1428 = vmatprep.subr.bf16.mxu0 0
        %1429 = vmatpush1.bf16.msra.mxu0 0
        %1430 = vmatprep.subr.bf16.mxu0 0
        %1431 = vmatpush1.bf16.msra.mxu0 0
        %1432 = vmatprep.subr.bf16.mxu0 0
        %1433 = vmatpush1.bf16.msra.mxu0 0
        %1434 = vmatprep.mubr.bf16.mxu0 0
        %1435 = vmatmul.mubr.bf16.gmra.mrb[0].mxu0 %v1400
        %v1436 = vpop.f32.mrb[0].mxu0
        %v1437 = vadd.f32 %v1386, %v1436
        %v1438 = vpop.f32.mrb[0].mxu0
        %v1439 = vpop.f32.mrb[0].mxu0
        %v1440 = vadd.f32 %v1386, %v1439
        %v1441 = vpop.f32.mrb[0].mxu0
        %1442 = vdwg.mxu0
        %v1443 = vpack.c.bf16 %v1440, %v1437
        %v1444 = vld [vmem:[#allocation16] sm:$0xf]
        %v1445 = vld [vmem:[#allocation16 + $0x4] sm:$0xf]
        %v1446 = vld [vmem:[#allocation16 + $0x8] sm:$0xf]
        %v1447 = vld [vmem:[#allocation16 + $0xc] sm:$0xf]
        %v1449 = vlaneseq
        %v1450 = vshrl.u32 %v1449, 7
        %v1451 = vsub.s32 0, %v1450
        %v1452 = vrot.slane %v509, %v1451
        %v1458 = vunpack.c.l.b16 %v1444
        %v1459 = vunpack.c.l.b16 %v1445
        %v1460 = vunpack.c.l.b16 %v1446
        %v1461 = vunpack.c.l.b16 %v1447
        %v1462 = vpack.c.b16 %v1459, %v1458
        %v1463 = vpack.c.b16 %v1461, %v1460
        %v1467 = vsel %vm614, %v1443, 0
        %1469 = vmatprep.subr.bf16.mxu0 0
        %1470 = vmatpush1.bf16.msra.mxu0 %v1462
        %1471 = vmatprep.subr.bf16.mxu0 0
        %1472 = vmatpush1.bf16.msra.mxu0 %v1463
        %1473 = vmatprep.subr.bf16.mxu0 0
        %1474 = vmatpush1.bf16.msra.mxu0 0
        %1475 = vmatprep.subr.bf16.mxu0 0
        %1476 = vmatpush1.bf16.msra.mxu0 0
        %1477 = vmatprep.subr.bf16.mxu0 0
        %1478 = vmatpush1.bf16.msra.mxu0 0
        %1479 = vmatprep.subr.bf16.mxu0 0
        %1480 = vmatpush1.bf16.msra.mxu0 0
        %1481 = vmatprep.subr.bf16.mxu0 0
        %1482 = vmatpush1.bf16.msra.mxu0 0
        %1483 = vmatprep.subr.bf16.mxu0 0
        %1484 = vmatpush1.bf16.msra.mxu0 0
        %1485 = vmatprep.subr.bf16.mxu0 0
        %1486 = vmatpush1.bf16.msra.mxu0 0
        %1487 = vmatprep.subr.bf16.mxu0 0
        %1488 = vmatpush1.bf16.msra.mxu0 0
        %1489 = vmatprep.subr.bf16.mxu0 0
        %1490 = vmatpush1.bf16.msra.mxu0 0
        %1491 = vmatprep.subr.bf16.mxu0 0
        %1492 = vmatpush1.bf16.msra.mxu0 0
        %1493 = vmatprep.subr.bf16.mxu0 0
        %1494 = vmatpush1.bf16.msra.mxu0 0
        %1495 = vmatprep.subr.bf16.mxu0 0
        %1496 = vmatpush1.bf16.msra.mxu0 0
        %1497 = vmatprep.subr.bf16.mxu0 0
        %1498 = vmatpush1.bf16.msra.mxu0 0
        %1499 = vmatprep.subr.bf16.mxu0 0
        %1500 = vmatpush1.bf16.msra.mxu0 0
        %1501 = vmatprep.mubr.bf16.mxu0 0
        %1502 = vmatmul.mubr.bf16.gmra.mrb[0].mxu0 %v1467
        %v1503 = vpop.f32.mrb[0].mxu0
        %v1504 = vadd.f32 %v1452, %v1503
        %v1505 = vpop.f32.mrb[0].mxu0
        %v1506 = vpop.f32.mrb[0].mxu0
        %v1507 = vadd.f32 %v1452, %v1506
        %v1508 = vpop.f32.mrb[0].mxu0
        %1509 = vdwg.mxu0
        %v1510 = vtanh.pop %v1504
        %v1511 = vtanh.pop %v1507
        %v1512 = vpack.c.bf16 %v1511, %v1510
        %v1513 = vld [vmem:[#allocation17] sm:$0xf]
        %v1514 = vld [vmem:[#allocation17 + $0x4] sm:$0xf]
        %v1515 = vld [vmem:[#allocation17 + $0x8] sm:$0xf]
        %v1516 = vld [vmem:[#allocation17 + $0xc] sm:$0xf]
        %v1517 = vld [vmem:[#allocation17 + $0x10] sm:$0xf]
        %v1518 = vld [vmem:[#allocation17 + $0x14] sm:$0xf]
        %v1519 = vld [vmem:[#allocation17 + $0x18] sm:$0xf]
        %v1520 = vld [vmem:[#allocation17 + $0x1c] sm:$0xf]
        %v1521 = vld [vmem:[#allocation17 + $0x20] sm:$0xf]
        %v1522 = vld [vmem:[#allocation17 + $0x24] sm:$0xf]
        %v1523 = vld [vmem:[#allocation17 + $0x28] sm:$0xf]
        %v1524 = vld [vmem:[#allocation17 + $0x2c] sm:$0xf]
        %v1525 = vld [vmem:[#allocation17 + $0x30] sm:$0xf]
        %v1526 = vld [vmem:[#allocation17 + $0x34] sm:$0xf]
        %v1527 = vld [vmem:[#allocation17 + $0x38] sm:$0xf]
        %v1528 = vld [vmem:[#allocation17 + $0x3c] sm:$0xf]
        %v1529 = vlaneseq
        %v1530 = vshrl.u32 %v1529, 7
        %v1531 = vsub.s32 4, %v1530
        %v1532 = vrot.slane %v508, %v1531
        %v1549 = vunpack.c.l.b16 %v1513
        %v1550 = vunpack.c.l.b16 %v1514
        %v1551 = vunpack.c.l.b16 %v1515
        %v1552 = vunpack.c.l.b16 %v1516
        %v1553 = vunpack.c.l.b16 %v1517
        %v1554 = vunpack.c.l.b16 %v1518
        %v1555 = vunpack.c.l.b16 %v1519
        %v1556 = vunpack.c.l.b16 %v1520
        %v1557 = vunpack.c.l.b16 %v1521
        %v1558 = vunpack.c.l.b16 %v1522
        %v1559 = vunpack.c.l.b16 %v1523
        %v1560 = vunpack.c.l.b16 %v1524
        %v1561 = vunpack.c.l.b16 %v1525
        %v1562 = vunpack.c.l.b16 %v1526
        %v1563 = vunpack.c.l.b16 %v1527
        %v1564 = vunpack.c.l.b16 %v1528
        %v1565 = vpack.c.b16 %v1550, %v1549
        %v1566 = vpack.c.b16 %v1552, %v1551
        %v1567 = vpack.c.b16 %v1554, %v1553
        %v1568 = vpack.c.b16 %v1556, %v1555
        %v1569 = vpack.c.b16 %v1558, %v1557
        %v1570 = vpack.c.b16 %v1560, %v1559
        %v1571 = vpack.c.b16 %v1562, %v1561
        %v1572 = vpack.c.b16 %v1564, %v1563
        %1581 = vmatprep.subr.bf16.mxu0 0
        %1582 = vmatpush1.bf16.msra.mxu0 %v1565
        %1583 = vmatprep.subr.bf16.mxu0 0
        %1584 = vmatpush1.bf16.msra.mxu0 %v1566
        %1585 = vmatprep.subr.bf16.mxu0 0
        %1586 = vmatpush1.bf16.msra.mxu0 %v1567
        %1587 = vmatprep.subr.bf16.mxu0 0
        %1588 = vmatpush1.bf16.msra.mxu0 %v1568
        %1589 = vmatprep.subr.bf16.mxu0 0
        %1590 = vmatpush1.bf16.msra.mxu0 %v1569
        %1591 = vmatprep.subr.bf16.mxu0 0
        %1592 = vmatpush1.bf16.msra.mxu0 %v1570
        %1593 = vmatprep.subr.bf16.mxu0 0
        %1594 = vmatpush1.bf16.msra.mxu0 %v1571
        %1595 = vmatprep.subr.bf16.mxu0 0
        %1596 = vmatpush1.bf16.msra.mxu0 %v1572
        %1597 = vmatprep.subr.bf16.mxu0 0
        %1598 = vmatpush1.bf16.msra.mxu0 0
        %1599 = vmatprep.subr.bf16.mxu0 0
        %1600 = vmatpush1.bf16.msra.mxu0 0
        %1601 = vmatprep.subr.bf16.mxu0 0
        %1602 = vmatpush1.bf16.msra.mxu0 0
        %1603 = vmatprep.subr.bf16.mxu0 0
        %1604 = vmatpush1.bf16.msra.mxu0 0
        %1605 = vmatprep.subr.bf16.mxu0 0
        %1606 = vmatpush1.bf16.msra.mxu0 0
        %1607 = vmatprep.subr.bf16.mxu0 0
        %1608 = vmatpush1.bf16.msra.mxu0 0
        %1609 = vmatprep.subr.bf16.mxu0 0
        %1610 = vmatpush1.bf16.msra.mxu0 0
        %1611 = vmatprep.subr.bf16.mxu0 0
        %1612 = vmatpush1.bf16.msra.mxu0 0
        %1613 = vmatprep.mubr.bf16.mxu0 0
        %1614 = vmatmul.mubr.bf16.gmra.mrb[0].mxu0 %v1512
        %v1615 = vpop.f32.mrb[0].mxu0
        %v1616 = vadd.f32 %v1532, %v1615
        %v1617 = vpop.f32.mrb[0].mxu0
        %v1618 = vpop.f32.mrb[0].mxu0
        %v1619 = vadd.f32 %v1532, %v1618
        %v1620 = vpop.f32.mrb[0].mxu0
        %1621 = vdwg.mxu0
        %1622 = vst.msk [vmem:[%s504] sm:$0xff] %vm614, %v1616
        %1623 = vst.msk [vmem:[%s504 + $0x8] sm:$0xff] %vm614, %v1619
        %s1624 = sand.u32 %s255, 1
        %s1625 = scalar_lea.sflag [#allocation7], %s1624
        %s1626 = sand.u32 %s255, 1
        %s1627 = smul.addr %s1626, 16
        %s1628 = scalar_lea.vmem [#allocation22], %s1627
        // Predicated region
        $region101: #{tpu_custom_call.1} parent=59 // pred_check
          %p1629 = pneg %p265
        $region102: #{tpu_custom_call.1} parent=59 // pred_check_branch
          %1631 = sbr.rel (%p1629) target = $region104
        $region103: #{tpu_custom_call.1} parent=59 // pred_region
          %s1632 = smul.u32 2, %s32
          %s1634 = ssub.s32 256, 256
          %1635 = vsyncadd %s1625, %s1634
          %s1636 = smul.addr %s1632, 128
          %s1637 = scalar_lea.hbm %s10, %s1636
          %s1638 = sshll.u32 %s1628, 4
          %s1639 = int_to_ptr.vmem [resolvable:$true] %s1638
          %1644 = dma.vmem_to_hbm [thread:$0]  %s1639, 256, %s1637, %s1625, 128, 128, 8
        $region104: #{tpu_custom_call.1} parent=59 // pred_fallthru
          _
      $region60: #{tpu_custom_call.1} parent=5 // pred_fallthru
        _
      %p1645 = scmp.le.s32.totalorder 2, %s27
      // Predicated region
      $region105: #{tpu_custom_call.1} parent=5 // pred_check
        %p1646 = pneg %p1645
      $region106: #{tpu_custom_call.1} parent=5 // pred_check_branch
        %1648 = sbr.rel (%p1646) target = $region108
      $region107: #{tpu_custom_call.1} parent=5 // pred_region
        %s1649 = ssub.s32 %s27, 2
        // Predicated region
        $region109: #{tpu_custom_call.1} parent=107 // pred_check
          %p1650 = pneg %p271
        $region110: #{tpu_custom_call.1} parent=107 // pred_check_branch
          %1652 = sbr.rel (%p1650) target = $region112
        $region111: #{tpu_custom_call.1} parent=107 // pred_region
          %s1653 = sand.u32 %s256, 1
          %s1654 = scalar_lea.sflag [#allocation7], %s1653
          %s1655 = sand.u32 %s256, 1
          %s1656 = smul.addr %s1655, 16
          %s1657 = scalar_lea.vmem [#allocation22], %s1656
          %1658 = dma.done %s1654, 256
        $region112: #{tpu_custom_call.1} parent=107 // pred_fallthru
          _
      $region108: #{tpu_custom_call.1} parent=5 // pred_fallthru
        _
    $region6: #{tpu_custom_call.1} parent=1 // loop_footer
      %s31 = sadd.s32 1, %s27
    $region7: #{tpu_custom_call.1} parent=1 // loop_footer_branch
      %26 = sbr.rel target = $region3
    $region8: #{tpu_custom_call.1} parent=1 // loop_exit
      _
    %1659 = vsyncpa [#allocation6], 1
    %s1660 = scalar_lea.sflag [#allocation6], 1
    %1661 = vsyncpa %s1660, 1
    %1662 = vsyncpa [#allocation9], 1
    %1663 = vsyncpa [#allocation12], 1
    %1664 = vsyncpa [#allocation15], 1
    %1665 = vsyncpa [#allocation18], 1
    %1666 = vsyncpa [#allocation21], 1
    %1667 = vsyncpa [#allocation7], 1
    %s1668 = scalar_lea.sflag [#allocation7], 1
    %1669 = vsyncpa %s1668, 1

</llo_original>
